<compile_context>
chip_gen: v7x
topology: tpu7x:2x2x1
jax: 0.10.0
libtpu: 0.0.40
codegen_flags: <defaults>
</compile_context>

<pallas_src>
import math
import numpy as np
import jax
import jax.numpy as jnp
from jax import lax
from jax.experimental import pallas as pl
from jax.experimental.pallas import tpu as pltpu


# --------------------- bilinear interpolation matrices ----------------------

def _interp_matrix_np(n_in, n_out):
    """1-D bilinear interpolation matrix, align_corners=True (float64)."""
    if n_in == 1:
        return np.ones((n_out, 1), np.float64)
    i = np.arange(n_out, dtype=np.float64)
    src = i * (n_in - 1) / (n_out - 1)
    j0 = np.clip(np.floor(src).astype(np.int64), 0, n_in - 2)
    frac = src - j0
    A = np.zeros((n_out, n_in), np.float64)
    A[np.arange(n_out), j0] = 1.0 - frac
    A[np.arange(n_out), j0 + 1] = frac
    return A


def _up2_np(n):          # n -> 2n (one 2x align_corners step)
    return _interp_matrix_np(n, 2 * n)


def _up2x2_np(n):        # n -> 4n as two chained 2x steps (exact composition)
    return _up2_np(2 * n) @ _up2_np(n)


# ----------------------------- fused Pallas kernel ---------------------------

def _make_edge_aware_kernel(Hc, Wc, S_mid):
    KPAD = 16                                   # 9 conv taps padded to 16 lanes
    pad_rows = ((Wc + 1 + 7) // 8) * 8          # zero rows absorbing the H halo

    def kernel(x1_ref, x2_ref, w1_ref, b1_ref, w2_ref, b2_ref,
               a1_ref, a2_ref, w3v_ref, m_ref, rp_ref, qc_ref, c_ref, o_ref):
        # ---- FFM_1 branch: 1x1 conv (BN folded) + 2x bilinear upsample ------
        y1 = jnp.dot(x1_ref[0], w1_ref[...], preferred_element_type=jnp.float32)
        f1 = (jnp.dot(a1_ref[...], y1.astype(jnp.bfloat16),
                      preferred_element_type=jnp.float32)
              + b1_ref[...]).astype(jnp.bfloat16)          # (S_mid, 256)
        # Tap maps from the first 256 channels of the (virtual) concat.
        g = jnp.dot(f1, w3v_ref[0:256, :],
                    preferred_element_type=jnp.float32)    # (S_mid, 16) f32

        # ---- FFM_2 branch: 1x1 conv + (2x then 2x) upsample (composed) ------
        y2 = jnp.dot(x2_ref[0], w2_ref[...], preferred_element_type=jnp.float32)
        f2 = (jnp.dot(a2_ref[...], y2.astype(jnp.bfloat16),
                      preferred_element_type=jnp.float32)
              + b2_ref[...]).astype(jnp.bfloat16)          # (S_mid, 256)
        g = g + jnp.dot(f2, w3v_ref[256:512, :],
                        preferred_element_type=jnp.float32)

        # ---- FFM1 3x3 conv (padding=1) with FFM2's 1x1 folded in ------------
        # g[:, k] = <fcat(p), w3v[:, k]>.  The conv is the sum of the 9 tap
        # maps, each shifted by (dy, dx).  Zero rows absorb the H boundary;
        # the precomputed W-wrap masks absorb the W boundary.
        zer = jnp.zeros((pad_rows, KPAD), jnp.float32)
        gp = jnp.concatenate([zer, g, zer], axis=0)
        m_left = m_ref[:, 0:1]                             # valid for dx = -1
        m_right = m_ref[:, 1:2]                            # valid for dx = +1
        z = None
        k = 0
        for dy in (-1, 0, 1):
            for dx in (-1, 0, 1):
                start = pad_rows + dy * Wc + dx
                col = gp[start:start + S_mid, k:k + 1]     # (S_mid, 1)
                if dx == -1:
                    col = col * m_left
                elif dx == 1:
                    col = col * m_right
                z = col if z is None else z + col
                k += 1

        # ---- FFM1 + FFM2 upsamples (composed 4x, commuted past the 1x1) -----
        # up2d = R @ z2d @ C  ==  RP @ (z * QC), with the flat->2D reshape
        # absorbed into the constant matrices RP / QC.
        zq = (z * qc_ref[...].astype(jnp.float32)).astype(jnp.bfloat16)
        up = jnp.dot(rp_ref[...], zq, preferred_element_type=jnp.float32)
        o_ref[0] = (up + c_ref[...]).astype(o_ref.dtype)   # (4Hc, 4Wc)

    return kernel


# ----------------------------- Edge_Aware module ----------------------------

def init_basic_conv2d(key, cin, cout, k):
    k1, k2, k3, k4, k5 = jax.random.split(key, 5)
    fan_in = cin * k * k
    w = jax.random.normal(k1, (k, k, cin, cout), jnp.float32) / math.sqrt(fan_in)
    gamma = 1.0 + 0.1 * jax.random.normal(k2, (cout,), jnp.float32)
    beta = 0.1 * jax.random.normal(k3, (cout,), jnp.float32)
    mean = 0.1 * jax.random.normal(k4, (cout,), jnp.float32)
    var = jnp.abs(jax.random.normal(k5, (cout,), jnp.float32)) + 1.0
    eps = 1e-5
    scale = gamma / jnp.sqrt(var + eps)      # BN folded (inference mode)
    bias = beta - mean * scale
    return {"w": w, "scale": scale, "bias": bias}


def init_params(key):
    k1, k2, k3, k4 = jax.random.split(key, 4)
    return {
        "FFM_1": init_basic_conv2d(k1, 256, 256, 1),
        "FFM_2": init_basic_conv2d(k2, 256, 256, 1),
        "FFM1":  init_basic_conv2d(k3, 512, 256, 3),
        "FFM2":  init_basic_conv2d(k4, 256, 1, 1),
    }


def edge_aware_forward(params, F1, F2):
    # F1: (N, 256, H, W) NCHW;  F2: (N, 256, H/2, W/2) NCHW
    N, C1, H, W = F1.shape
    _, C2, H2, W2 = F2.shape
    assert C1 == 256 and C2 == 256
    assert (H2, W2) == (H // 2, W // 2)
    Hc, Wc = 2 * H, 2 * W                    # spatial size at the (virtual) concat
    S_mid = Hc * Wc
    Hf, Wf = 4 * Hc, 4 * Wc                  # final spatial size

    # NCHW -> flattened NHWC rows, bf16 MXU operands.
    x1 = jnp.transpose(F1, (0, 2, 3, 1)).reshape(N, H * W, 256).astype(jnp.bfloat16)
    x2 = jnp.transpose(F2, (0, 2, 3, 1)).reshape(N, H2 * W2, 256).astype(jnp.bfloat16)

    # Fold BN scale into the conv weights at trace time; keep biases separate.
    p1, p2, p3, p4 = params["FFM_1"], params["FFM_2"], params["FFM1"], params["FFM2"]
    w1 = (p1["w"].reshape(256, 256) * p1["scale"][None, :]).astype(jnp.bfloat16)
    b1 = p1["bias"].reshape(1, 256).astype(jnp.float32)
    w2 = (p2["w"].reshape(256, 256) * p2["scale"][None, :]).astype(jnp.bfloat16)
    b2 = p2["bias"].reshape(1, 256).astype(jnp.float32)

    # Fold FFM2's 1x1 conv vector v into FFM1's 3x3 weights (no activation in
    # between), and both biases into a single scalar c (interp rows sum to 1).
    w3f = p3["w"] * p3["scale"][None, None, None, :]              # (3,3,512,256)
    v = p4["w"].reshape(256) * p4["scale"][0]                     # (256,)
    w3v = jnp.einsum("yxio,o->yxi", w3f, v).reshape(9, 512).T     # (512, 9)
    w3v = jnp.pad(w3v, ((0, 0), (0, 7))).astype(jnp.bfloat16)     # (512, 16)
    c = (jnp.dot(p3["bias"], v) + p4["bias"][0]).reshape(1, 1).astype(jnp.float32)

    # Branch bilinear-upsample matrices (exact align_corners=True), bf16.
    # NOTE: kept in dense Kronecker form; they are tiny at these spatial sizes
    # (separable form recommended if H/W ever grow).
    a1 = jnp.asarray(np.kron(_up2_np(H), _up2_np(W)), jnp.bfloat16)         # (S_mid, H*W)
    a2 = jnp.asarray(np.kron(_up2x2_np(H2), _up2x2_np(W2)), jnp.bfloat16)   # (S_mid, H2*W2)

    # Head 4x upsample, factored: up = RP @ (z * QC).
    R = _up2x2_np(Hc)                                    # (Hf, Hc)
    Cm = _up2x2_np(Wc).T                                 # (Wc, Wf)
    rp = jnp.asarray(np.kron(R, np.ones((1, Wc))), jnp.bfloat16)   # (Hf, S_mid)
    qc = jnp.asarray(np.kron(np.ones((Hc, 1)), Cm), jnp.bfloat16)  # (S_mid, Wf)

    # W-boundary validity masks for the 3x3 conv taps with dx = -1 / +1.
    wcol = np.arange(S_mid) % Wc
    m = jnp.asarray(np.stack([(wcol >= 1), (wcol <= Wc - 2)],
                             axis=1).astype(np.float32))           # (S_mid, 2)

    kernel = _make_edge_aware_kernel(Hc, Wc, S_mid)
    out = pl.pallas_call(
        kernel,
        out_shape=jax.ShapeDtypeStruct((N, Hf, Wf), jnp.float32),
        grid=(N,),
        in_specs=[
            pl.BlockSpec((1, H * W, 256), lambda b: (b, 0, 0)),      # x1
            pl.BlockSpec((1, H2 * W2, 256), lambda b: (b, 0, 0)),    # x2
            pl.BlockSpec((256, 256), lambda b: (0, 0)),              # w1
            pl.BlockSpec((1, 256), lambda b: (0, 0)),                # b1
            pl.BlockSpec((256, 256), lambda b: (0, 0)),              # w2
            pl.BlockSpec((1, 256), lambda b: (0, 0)),                # b2
            pl.BlockSpec((S_mid, H * W), lambda b: (0, 0)),          # a1
            pl.BlockSpec((S_mid, H2 * W2), lambda b: (0, 0)),        # a2
            pl.BlockSpec((512, 16), lambda b: (0, 0)),               # w3v
            pl.BlockSpec((S_mid, 2), lambda b: (0, 0)),              # masks
            pl.BlockSpec((Hf, S_mid), lambda b: (0, 0)),             # RP
            pl.BlockSpec((S_mid, Wf), lambda b: (0, 0)),             # QC
            pl.BlockSpec((1, 1), lambda b: (0, 0)),                  # c
        ],
        out_specs=pl.BlockSpec((1, Hf, Wf), lambda b: (b, 0, 0)),
        compiler_params=pltpu.CompilerParams(dimension_semantics=("parallel",)),
    )(x1, x2, w1, b1, w2, b2, a1, a2, w3v, m, rp, qc, c)
    return out.reshape(N, 1, Hf, Wf)                    # NCHW (N, 1, 8H, 8W)


# ------------------------ pure-JAX f32 reference -----------------------------

def _upsample2_ref(x):       # x: (N, C, H, W), bilinear 2x, align_corners=True
    N, C, H, W = x.shape
    Rh = jnp.asarray(_up2_np(H), jnp.float32)
    Rw = jnp.asarray(_up2_np(W), jnp.float32)
    return jnp.einsum("ph,nchw,qw->ncpq", Rh, x, Rw)


def _basic_conv_ref(x, p):   # Conv2d(bias=False) + folded BN, NCHW in/out
    xh = jnp.transpose(x, (0, 2, 3, 1))
    y = lax.conv_general_dilated(xh, p["w"], window_strides=(1, 1),
                                 padding="SAME",
                                 dimension_numbers=("NHWC", "HWIO", "NHWC"))
    y = y * p["scale"] + p["bias"]
    return jnp.transpose(y, (0, 3, 1, 2))


def edge_aware_reference(params, F1, F2):
    F1_ = _upsample2_ref(_basic_conv_ref(F1, params["FFM_1"]))
    F2_ = _upsample2_ref(_upsample2_ref(_basic_conv_ref(F2, params["FFM_2"])))
    Fc = jnp.concatenate([F1_, F2_], axis=1)
    Fh = _upsample2_ref(_basic_conv_ref(Fc, params["FFM1"]))
    return _upsample2_ref(_basic_conv_ref(Fh, params["FFM2"]))


if __name__ == "__main__":
    key = jax.random.PRNGKey(0)
    kp, ka, kb = jax.random.split(key, 3)
    params = init_params(kp)

    # Small shapes consistent with the module (channels fixed at 256 by design).
    F1 = jax.random.normal(ka, (2, 256, 8, 8), jnp.float32)
    F2 = jax.random.normal(kb, (2, 256, 4, 4), jnp.float32)

    fwd = jax.jit(edge_aware_forward)
    out = jax.block_until_ready(fwd(params, F1, F2))

    assert out.shape == (2, 1, 64, 64), out.shape
    assert bool(jnp.all(jnp.isfinite(out)))

    # Loose tolerance vs. an f32 reference (kernel runs with bf16 MXU operands).
    ref = edge_aware_reference(params, F1, F2)
    err = float(jnp.max(jnp.abs(out - ref)))
    scale = float(jnp.max(jnp.abs(ref)))
    assert err <= 0.05 * scale + 0.05, (err, scale)
    print("KERNEL_OK")
</pallas_src>

<mosaic_0001>
module attributes {stable_mosaic.version = 11 : i64} {
  func.func @kernel(%arg0: i32, %arg1: memref<1x64x256xbf16, #tpu.memory_space<vmem>>, %arg2: memref<1x16x256xbf16, #tpu.memory_space<vmem>>, %arg3: memref<256x256xbf16, #tpu.memory_space<vmem>>, %arg4: memref<1x256xf32, #tpu.memory_space<vmem>>, %arg5: memref<256x256xbf16, #tpu.memory_space<vmem>>, %arg6: memref<1x256xf32, #tpu.memory_space<vmem>>, %arg7: memref<256x64xbf16, #tpu.memory_space<vmem>>, %arg8: memref<256x16xbf16, #tpu.memory_space<vmem>>, %arg9: memref<512x16xbf16, #tpu.memory_space<vmem>>, %arg10: memref<256x2xf32, #tpu.memory_space<vmem>>, %arg11: memref<64x256xbf16, #tpu.memory_space<vmem>>, %arg12: memref<256x64xbf16, #tpu.memory_space<vmem>>, %arg13: memref<1x1xf32, #tpu.memory_space<vmem>>, %arg14: memref<1x64x64xf32, #tpu.memory_space<vmem>>) attributes {dimension_semantics = [#tpu.dimension_semantics<parallel>], iteration_bounds = array<i64: 2>, scalar_prefetch = 0 : i64, scratch_operands = 0 : i64, tpu.core_type = #tpu.core_type<tc>, window_params = [{transform_indices = @transform_0, window_bounds = array<i64: 1, 64, 256>}, {transform_indices = @transform_1, window_bounds = array<i64: 1, 16, 256>}, {pipeline_mode = #tpu.pipeline_mode<synchronous>, transform_indices = @transform_2, window_bounds = array<i64: 256, 256>}, {pipeline_mode = #tpu.pipeline_mode<synchronous>, transform_indices = @transform_3, window_bounds = array<i64: 1, 256>}, {pipeline_mode = #tpu.pipeline_mode<synchronous>, transform_indices = @transform_4, window_bounds = array<i64: 256, 256>}, {pipeline_mode = #tpu.pipeline_mode<synchronous>, transform_indices = @transform_5, window_bounds = array<i64: 1, 256>}, {pipeline_mode = #tpu.pipeline_mode<synchronous>, transform_indices = @transform_6, window_bounds = array<i64: 256, 64>}, {pipeline_mode = #tpu.pipeline_mode<synchronous>, transform_indices = @transform_7, window_bounds = array<i64: 256, 16>}, {pipeline_mode = #tpu.pipeline_mode<synchronous>, transform_indices = @transform_8, window_bounds = array<i64: 512, 16>}, {pipeline_mode = #tpu.pipeline_mode<synchronous>, transform_indices = @transform_9, window_bounds = array<i64: 256, 2>}, {pipeline_mode = #tpu.pipeline_mode<synchronous>, transform_indices = @transform_10, window_bounds = array<i64: 64, 256>}, {pipeline_mode = #tpu.pipeline_mode<synchronous>, transform_indices = @transform_11, window_bounds = array<i64: 256, 64>}, {pipeline_mode = #tpu.pipeline_mode<synchronous>, transform_indices = @transform_12, window_bounds = array<i64: 1, 1>}, {transform_indices = @transform_13, window_bounds = array<i64: 1, 64, 64>}]} {
    %c0 = arith.constant 0 : index
    %c0_0 = arith.constant 0 : index
    %c0_1 = arith.constant 0 : index
    %0 = vector.load %arg1[%c0, %c0_0, %c0_1] : memref<1x64x256xbf16, #tpu.memory_space<vmem>>, vector<1x64x256xbf16>
    %1 = vector.shape_cast %0 : vector<1x64x256xbf16> to vector<64x256xbf16>
    %c0_2 = arith.constant 0 : index
    %c0_3 = arith.constant 0 : index
    %2 = vector.load %arg3[%c0_2, %c0_3] : memref<256x256xbf16, #tpu.memory_space<vmem>>, vector<256x256xbf16>
    %cst = arith.constant dense<0.000000e+00> : vector<64x256xf32>
    %3 = tpu.matmul %1, %2, %cst {dimension_numbers = #tpu.dot_dimension_numbers<[1], [0], [0], [1], [0, 0, 1, 1], [], []>} : vector<64x256xbf16>, vector<256x256xbf16>, vector<64x256xf32> -> vector<64x256xf32>
    %c0_4 = arith.constant 0 : index
    %c0_5 = arith.constant 0 : index
    %4 = vector.load %arg7[%c0_4, %c0_5] : memref<256x64xbf16, #tpu.memory_space<vmem>>, vector<256x64xbf16>
    %5 = arith.truncf %3 : vector<64x256xf32> to vector<64x256xbf16>
    %cst_6 = arith.constant dense<0.000000e+00> : vector<256x256xf32>
    %6 = tpu.matmul %4, %5, %cst_6 {dimension_numbers = #tpu.dot_dimension_numbers<[1], [0], [0], [1], [0, 0, 1, 1], [], []>} : vector<256x64xbf16>, vector<64x256xbf16>, vector<256x256xf32> -> vector<256x256xf32>
    %c0_7 = arith.constant 0 : index
    %c0_8 = arith.constant 0 : index
    %7 = vector.load %arg4[%c0_7, %c0_8] : memref<1x256xf32, #tpu.memory_space<vmem>>, vector<1x256xf32>
    %8 = vector.broadcast %7 : vector<1x256xf32> to vector<256x256xf32>
    %9 = arith.addf %6, %8 : vector<256x256xf32>
    %10 = arith.truncf %9 : vector<256x256xf32> to vector<256x256xbf16>
    %c0_9 = arith.constant 0 : index
    %c0_10 = arith.constant 0 : index
    %11 = vector.load %arg9[%c0_9, %c0_10] : memref<512x16xbf16, #tpu.memory_space<vmem>>, vector<256x16xbf16>
    %cst_11 = arith.constant dense<0.000000e+00> : vector<256x16xf32>
    %12 = tpu.matmul %10, %11, %cst_11 {dimension_numbers = #tpu.dot_dimension_numbers<[1], [0], [0], [1], [0, 0, 1, 1], [], []>} : vector<256x256xbf16>, vector<256x16xbf16>, vector<256x16xf32> -> vector<256x16xf32>
    %c0_12 = arith.constant 0 : index
    %c0_13 = arith.constant 0 : index
    %c0_14 = arith.constant 0 : index
    %13 = vector.load %arg2[%c0_12, %c0_13, %c0_14] : memref<1x16x256xbf16, #tpu.memory_space<vmem>>, vector<1x16x256xbf16>
    %14 = vector.shape_cast %13 : vector<1x16x256xbf16> to vector<16x256xbf16>
    %c0_15 = arith.constant 0 : index
    %c0_16 = arith.constant 0 : index
    %15 = vector.load %arg5[%c0_15, %c0_16] : memref<256x256xbf16, #tpu.memory_space<vmem>>, vector<256x256xbf16>
    %cst_17 = arith.constant dense<0.000000e+00> : vector<16x256xf32>
    %16 = tpu.matmul %14, %15, %cst_17 {dimension_numbers = #tpu.dot_dimension_numbers<[1], [0], [0], [1], [0, 0, 1, 1], [], []>} : vector<16x256xbf16>, vector<256x256xbf16>, vector<16x256xf32> -> vector<16x256xf32>
    %c0_18 = arith.constant 0 : index
    %c0_19 = arith.constant 0 : index
    %17 = vector.load %arg8[%c0_18, %c0_19] : memref<256x16xbf16, #tpu.memory_space<vmem>>, vector<256x16xbf16>
    %18 = arith.truncf %16 : vector<16x256xf32> to vector<16x256xbf16>
    %cst_20 = arith.constant dense<0.000000e+00> : vector<256x256xf32>
    %19 = tpu.matmul %17, %18, %cst_20 {dimension_numbers = #tpu.dot_dimension_numbers<[1], [0], [0], [1], [0, 0, 1, 1], [], []>} : vector<256x16xbf16>, vector<16x256xbf16>, vector<256x256xf32> -> vector<256x256xf32>
    %c0_21 = arith.constant 0 : index
    %c0_22 = arith.constant 0 : index
    %20 = vector.load %arg6[%c0_21, %c0_22] : memref<1x256xf32, #tpu.memory_space<vmem>>, vector<1x256xf32>
    %21 = vector.broadcast %20 : vector<1x256xf32> to vector<256x256xf32>
    %22 = arith.addf %19, %21 : vector<256x256xf32>
    %23 = arith.truncf %22 : vector<256x256xf32> to vector<256x256xbf16>
    %c256 = arith.constant 256 : index
    %c0_23 = arith.constant 0 : index
    %24 = vector.load %arg9[%c256, %c0_23] : memref<512x16xbf16, #tpu.memory_space<vmem>>, vector<256x16xbf16>
    %cst_24 = arith.constant dense<0.000000e+00> : vector<256x16xf32>
    %25 = tpu.matmul %23, %24, %cst_24 {dimension_numbers = #tpu.dot_dimension_numbers<[1], [0], [0], [1], [0, 0, 1, 1], [], []>} : vector<256x256xbf16>, vector<256x16xbf16>, vector<256x16xf32> -> vector<256x16xf32>
    %26 = arith.addf %12, %25 : vector<256x16xf32>
    %cst_25 = arith.constant 0.000000e+00 : f32
    %27 = vector.broadcast %cst_25 : f32 to vector<24x16xf32>
    %28 = tpu.concatenate %27, %26, %27 in 0 : vector<24x16xf32>, vector<256x16xf32>, vector<24x16xf32> -> vector<304x16xf32>
    %c0_26 = arith.constant 0 : index
    %c0_27 = arith.constant 0 : index
    %29 = vector.load %arg10[%c0_26, %c0_27] : memref<256x2xf32, #tpu.memory_space<vmem>>, vector<256x1xf32>
    %c0_28 = arith.constant 0 : index
    %c1 = arith.constant 1 : index
    %30 = vector.load %arg10[%c0_28, %c1] : memref<256x2xf32, #tpu.memory_space<vmem>>, vector<256x1xf32>
    %31 = vector.extract_strided_slice %28 {offsets = [7, 0], sizes = [256, 1], strides = [1, 1]} : vector<304x16xf32> to vector<256x1xf32>
    %32 = arith.mulf %31, %29 : vector<256x1xf32>
    %33 = vector.extract_strided_slice %28 {offsets = [8, 1], sizes = [256, 1], strides = [1, 1]} : vector<304x16xf32> to vector<256x1xf32>
    %34 = arith.addf %32, %33 : vector<256x1xf32>
    %35 = vector.extract_strided_slice %28 {offsets = [9, 2], sizes = [256, 1], strides = [1, 1]} : vector<304x16xf32> to vector<256x1xf32>
    %36 = arith.mulf %35, %30 : vector<256x1xf32>
    %37 = arith.addf %34, %36 : vector<256x1xf32>
    %38 = vector.extract_strided_slice %28 {offsets = [23, 3], sizes = [256, 1], strides = [1, 1]} : vector<304x16xf32> to vector<256x1xf32>
    %39 = arith.mulf %38, %29 : vector<256x1xf32>
    %40 = arith.addf %37, %39 : vector<256x1xf32>
    %41 = vector.extract_strided_slice %28 {offsets = [24, 4], sizes = [256, 1], strides = [1, 1]} : vector<304x16xf32> to vector<256x1xf32>
    %42 = arith.addf %40, %41 : vector<256x1xf32>
    %43 = vector.extract_strided_slice %28 {offsets = [25, 5], sizes = [256, 1], strides = [1, 1]} : vector<304x16xf32> to vector<256x1xf32>
    %44 = arith.mulf %43, %30 : vector<256x1xf32>
    %45 = arith.addf %42, %44 : vector<256x1xf32>
    %46 = vector.extract_strided_slice %28 {offsets = [39, 6], sizes = [256, 1], strides = [1, 1]} : vector<304x16xf32> to vector<256x1xf32>
    %47 = arith.mulf %46, %29 : vector<256x1xf32>
    %48 = arith.addf %45, %47 : vector<256x1xf32>
    %49 = vector.extract_strided_slice %28 {offsets = [40, 7], sizes = [256, 1], strides = [1, 1]} : vector<304x16xf32> to vector<256x1xf32>
    %50 = arith.addf %48, %49 : vector<256x1xf32>
    %51 = vector.extract_strided_slice %28 {offsets = [41, 8], sizes = [256, 1], strides = [1, 1]} : vector<304x16xf32> to vector<256x1xf32>
    %52 = arith.mulf %51, %30 : vector<256x1xf32>
    %53 = arith.addf %50, %52 : vector<256x1xf32>
    %c0_29 = arith.constant 0 : index
    %c0_30 = arith.constant 0 : index
    %54 = vector.load %arg12[%c0_29, %c0_30] : memref<256x64xbf16, #tpu.memory_space<vmem>>, vector<256x64xbf16>
    %55 = arith.extf %54 : vector<256x64xbf16> to vector<256x64xf32>
    %56 = vector.broadcast %53 : vector<256x1xf32> to vector<256x64xf32>
    %57 = arith.mulf %56, %55 : vector<256x64xf32>
    %58 = arith.truncf %57 : vector<256x64xf32> to vector<256x64xbf16>
    %c0_31 = arith.constant 0 : index
    %c0_32 = arith.constant 0 : index
    %59 = vector.load %arg11[%c0_31, %c0_32] : memref<64x256xbf16, #tpu.memory_space<vmem>>, vector<64x256xbf16>
    %cst_33 = arith.constant dense<0.000000e+00> : vector<64x64xf32>
    %60 = tpu.matmul %59, %58, %cst_33 {dimension_numbers = #tpu.dot_dimension_numbers<[1], [0], [0], [1], [0, 0, 1, 1], [], []>} : vector<64x256xbf16>, vector<256x64xbf16>, vector<64x64xf32> -> vector<64x64xf32>
    %c0_34 = arith.constant 0 : index
    %c0_35 = arith.constant 0 : index
    %61 = vector.load %arg13[%c0_34, %c0_35] : memref<1x1xf32, #tpu.memory_space<vmem>>, vector<1x1xf32>
    %62 = vector.broadcast %61 : vector<1x1xf32> to vector<64x64xf32>
    %63 = arith.addf %60, %62 : vector<64x64xf32>
    %c0_36 = arith.constant 0 : index
    %c0_37 = arith.constant 0 : index
    %c0_38 = arith.constant 0 : index
    %64 = vector.load %arg14[%c0_36, %c0_37, %c0_38] : memref<1x64x64xf32, #tpu.memory_space<vmem>>, vector<1x64x64xf32>
    %65 = vector.shape_cast %64 : vector<1x64x64xf32> to vector<64x64xf32>
    %66 = vector.shape_cast %63 : vector<64x64xf32> to vector<1x64x64xf32>
    tpu.vector_store %arg14[%c0_36, %c0_37, %c0_38], %66 {strides = array<i32>} : memref<1x64x64xf32, #tpu.memory_space<vmem>>, vector<1x64x64xf32>,
    return
  }
  func.func @transform_0(%arg0: i32) -> (i32, i32, i32) {
    %c0_i32 = arith.constant 0 : i32
    %c0_i32_0 = arith.constant 0 : i32
    %c0_i32_1 = arith.constant 0 : i32
    return %arg0, %c0_i32, %c0_i32_0 : i32, i32, i32
  }
  func.func @transform_1(%arg0: i32) -> (i32, i32, i32) {
    %c0_i32 = arith.constant 0 : i32
    %c0_i32_0 = arith.constant 0 : i32
    %c0_i32_1 = arith.constant 0 : i32
    return %arg0, %c0_i32, %c0_i32_0 : i32, i32, i32
  }
  func.func @transform_2(%arg0: i32) -> (i32, i32) {
    %c0_i32 = arith.constant 0 : i32
    %c0_i32_0 = arith.constant 0 : i32
    %c0_i32_1 = arith.constant 0 : i32
    return %c0_i32, %c0_i32_0 : i32, i32
  }
  func.func @transform_3(%arg0: i32) -> (i32, i32) {
    %c0_i32 = arith.constant 0 : i32
    %c0_i32_0 = arith.constant 0 : i32
    %c0_i32_1 = arith.constant 0 : i32
    return %c0_i32, %c0_i32_0 : i32, i32
  }
  func.func @transform_4(%arg0: i32) -> (i32, i32) {
    %c0_i32 = arith.constant 0 : i32
    %c0_i32_0 = arith.constant 0 : i32
    %c0_i32_1 = arith.constant 0 : i32
    return %c0_i32, %c0_i32_0 : i32, i32
  }
  func.func @transform_5(%arg0: i32) -> (i32, i32) {
    %c0_i32 = arith.constant 0 : i32
    %c0_i32_0 = arith.constant 0 : i32
    %c0_i32_1 = arith.constant 0 : i32
    return %c0_i32, %c0_i32_0 : i32, i32
  }
  func.func @transform_6(%arg0: i32) -> (i32, i32) {
    %c0_i32 = arith.constant 0 : i32
    %c0_i32_0 = arith.constant 0 : i32
    %c0_i32_1 = arith.constant 0 : i32
    return %c0_i32, %c0_i32_0 : i32, i32
  }
  func.func @transform_7(%arg0: i32) -> (i32, i32) {
    %c0_i32 = arith.constant 0 : i32
    %c0_i32_0 = arith.constant 0 : i32
    %c0_i32_1 = arith.constant 0 : i32
    return %c0_i32, %c0_i32_0 : i32, i32
  }
  func.func @transform_8(%arg0: i32) -> (i32, i32) {
    %c0_i32 = arith.constant 0 : i32
    %c0_i32_0 = arith.constant 0 : i32
    %c0_i32_1 = arith.constant 0 : i32
    return %c0_i32, %c0_i32_0 : i32, i32
  }
  func.func @transform_9(%arg0: i32) -> (i32, i32) {
    %c0_i32 = arith.constant 0 : i32
    %c0_i32_0 = arith.constant 0 : i32
    %c0_i32_1 = arith.constant 0 : i32
    return %c0_i32, %c0_i32_0 : i32, i32
  }
  func.func @transform_10(%arg0: i32) -> (i32, i32) {
    %c0_i32 = arith.constant 0 : i32
    %c0_i32_0 = arith.constant 0 : i32
    %c0_i32_1 = arith.constant 0 : i32
    return %c0_i32, %c0_i32_0 : i32, i32
  }
  func.func @transform_11(%arg0: i32) -> (i32, i32) {
    %c0_i32 = arith.constant 0 : i32
    %c0_i32_0 = arith.constant 0 : i32
    %c0_i32_1 = arith.constant 0 : i32
    return %c0_i32, %c0_i32_0 : i32, i32
  }
  func.func @transform_12(%arg0: i32) -> (i32, i32) {
    %c0_i32 = arith.constant 0 : i32
    %c0_i32_0 = arith.constant 0 : i32
    %c0_i32_1 = arith.constant 0 : i32
    return %c0_i32, %c0_i32_0 : i32, i32
  }
  func.func @transform_13(%arg0: i32) -> (i32, i32, i32) {
    %c0_i32 = arith.constant 0 : i32
    %c0_i32_0 = arith.constant 0 : i32
    %c0_i32_1 = arith.constant 0 : i32
    return %arg0, %c0_i32, %c0_i32_0 : i32, i32, i32
  }
}

</mosaic_0001>

<llo_original>
// kernel: edge_aware_forward.1
$region0: #{edge_aware_forward.1}
  #allocation0 [shape = 'u32[]', space=smem, size = 0x4, offset = 0x4, fixed_abs, tag = 'smem constant byte address 0x4 - core index']
  #allocation1 [shape = 'u32[144,128]{1,0:T(1,128)}', space=vmem, size = 0x12000, scoped, tag = 'internal scratch']
  #allocation2 [shape = 'f32[1,1]{1,0:T(1,128)S(1)}', space=vmem, size = 0x200, scoped, tag = 'scoped memory for edge_aware_forward.1']
  %s0 = inlined_call_operand.vmem [shape: bf16[2,64,256], index: 0, kind: input, shape index: {}]
  %s1 = inlined_call_operand.vmem [shape: bf16[2,16,256], index: 1, kind: input, shape index: {}]
  %s2 = inlined_call_operand.vmem [shape: bf16[256,256], index: 2, kind: input, shape index: {}]
  %s3 = inlined_call_operand.vmem [shape: f32[1,256], index: 3, kind: input, shape index: {}]
  %s4 = inlined_call_operand.vmem [shape: bf16[256,256], index: 4, kind: input, shape index: {}]
  %s5 = inlined_call_operand.vmem [shape: f32[1,256], index: 5, kind: input, shape index: {}]
  %s6 = inlined_call_operand.vmem [shape: bf16[256,64], index: 6, kind: input, shape index: {}]
  %s7 = inlined_call_operand.vmem [shape: bf16[256,16], index: 7, kind: input, shape index: {}]
  %s8 = inlined_call_operand.vmem [shape: bf16[512,16], index: 8, kind: input, shape index: {}]
  %s9 = inlined_call_operand.vmem [shape: f32[256,2], index: 9, kind: input, shape index: {}]
  %s10 = inlined_call_operand.vmem [shape: bf16[64,256], index: 10, kind: input, shape index: {}]
  %s11 = inlined_call_operand.vmem [shape: bf16[256,64], index: 11, kind: input, shape index: {}]
  %s12 = inlined_call_operand.<no memory space> [shape: f32[1,1], index: 12, kind: input, shape index: {}]
  %s13 = inlined_call_operand.hbm [shape: f32[2,64,64], index: 13, kind: output, shape index: {}]
  %s14 = sld [smem:[#allocation0]]
  $region85: #{edge_aware_forward.1} parent=0
    _
  %s16 = ssub.s32 1, %s14
  %s17 = scalar_select 0, %s16, %s14
  %v18 = vstv %s12
  %19 = vst [vmem:[#allocation2] sm:$0x1] %v18
  $region1: #{edge_aware_forward.1} parent=0
    #allocation3 [shape = 'u8[65536]{0}', space=vmem, size = 0x10000, scoped, tag = 'output window, operand 0']
    #allocation4 [shape = 's32[2]{0}', space=sflag, size = 0x8, scoped, tag = 'scoped memory for edge_aware_forward.1']
    %20 = vsyncpa [#allocation4], 0
    %s21 = scalar_lea.sflag [#allocation4], 1
    %22 = vsyncpa %s21, 0
    loop: start=0, step=1, limit=4
    $region2: #{edge_aware_forward.1} parent=1 // loop_pre_header
      _
    $region3: #{edge_aware_forward.1} parent=1 // loop_header
      %s24 = sphi 0, %s28
      %p25 = scmp.ge.s32.totalorder %s24, 4
      %s34 = sphi 0, %s36
      %s37 = sphi 0, %s34
      %s38 = sphi 0, %s37
      %s54 = sphi 0, %s38
      %s60 = sphi 0, %s62
      %s63 = sphi 0, %s60
      %s64 = sphi 0, %s63
      %s80 = sphi 0, %s64
      %s84 = sphi 0, %s84
      %s86 = sphi 0, %s84
      %s87 = sphi 0, %s86
      %s101 = sphi 0, %s87
      %s105 = sphi 0, %s105
      %s107 = sphi 0, %s105
      %s108 = sphi 0, %s107
      %s122 = sphi 0, %s108
      %s126 = sphi 0, %s126
      %s128 = sphi 0, %s126
      %s129 = sphi 0, %s128
      %s143 = sphi 0, %s129
      %s147 = sphi 0, %s147
      %s149 = sphi 0, %s147
      %s150 = sphi 0, %s149
      %s164 = sphi 0, %s150
      %s168 = sphi 0, %s168
      %s170 = sphi 0, %s168
      %s171 = sphi 0, %s170
      %s185 = sphi 0, %s171
      %s189 = sphi 0, %s189
      %s191 = sphi 0, %s189
      %s192 = sphi 0, %s191
      %s206 = sphi 0, %s192
      %s210 = sphi 0, %s210
      %s212 = sphi 0, %s210
      %s213 = sphi 0, %s212
      %s227 = sphi 0, %s213
      %s231 = sphi 0, %s231
      %s233 = sphi 0, %s231
      %s234 = sphi 0, %s233
      %s248 = sphi 0, %s234
      %s252 = sphi 0, %s252
      %s254 = sphi 0, %s252
      %s255 = sphi 0, %s254
      %s269 = sphi 0, %s255
      %s273 = sphi 0, %s273
      %s275 = sphi 0, %s273
      %s276 = sphi 0, %s275
      %s290 = sphi 0, %s276
      %s294 = sphi 0, %s294
      %s296 = sphi 0, %s294
      %s297 = sphi 0, %s296
      %s311 = sphi 0, %s297
      %s317 = sphi 0, %s319
      %s320 = sphi 0, %s317
      %s321 = sphi 0, %s320
      %s337 = sphi 0, %s321
    $region4: #{edge_aware_forward.1} parent=1 // loop_header_branch
      %27 = sbr.rel (%p25) target = $region8
    $region5: #{edge_aware_forward.1} parent=1 // loop_body
      %s29 = ssub.s32 %s24, 1
      %s30 = ssub.s32 %s24, 2
      %s31 = sadd.s32 %s24, 1
      %s32 = ssub.s32 %s24, %s31
      %p33 = scmp.eq.s32.totalorder %s32, 0
      %s35 = sadd.s32 %s34, 1
      %s36 = scalar_select %p33, %s34, %s35
      %p39 = pneg %p33
      %p40 = scmp.eq.s32.totalorder %s24, 1
      %p41 = por %p39, %p40
      %p42 = scmp.ne.s32.totalorder %s34, %s37
      %p43 = scmp.eq.s32.totalorder %s24, 0
      %p44 = por %p42, %p43
      %p45 = scmp.ne.s32.totalorder %s34, %s37
      %p46 = scmp.eq.s32.totalorder %s29, 1
      %p47 = por %p45, %p46
      %p48 = scmp.ne.s32.totalorder %s37, %s38
      %p49 = scmp.eq.s32.totalorder %s29, 0
      %p50 = por %p48, %p49
      %p51 = scmp.ne.s32.totalorder %s37, %s38
      %p52 = scmp.eq.s32.totalorder %s30, 1
      %p53 = por %p51, %p52
      %p55 = scmp.ne.s32.totalorder %s38, %s54
      %p56 = scmp.eq.s32.totalorder %s30, 0
      %p57 = por %p55, %p56
      %s58 = ssub.s32 %s24, %s31
      %p59 = scmp.eq.s32.totalorder %s58, 0
      %s61 = sadd.s32 %s60, 1
      %s62 = scalar_select %p59, %s60, %s61
      %p65 = pneg %p59
      %p66 = scmp.eq.s32.totalorder %s24, 1
      %p67 = por %p65, %p66
      %p68 = scmp.ne.s32.totalorder %s60, %s63
      %p69 = scmp.eq.s32.totalorder %s24, 0
      %p70 = por %p68, %p69
      %p71 = scmp.ne.s32.totalorder %s60, %s63
      %p72 = scmp.eq.s32.totalorder %s29, 1
      %p73 = por %p71, %p72
      %p74 = scmp.ne.s32.totalorder %s63, %s64
      %p75 = scmp.eq.s32.totalorder %s29, 0
      %p76 = por %p74, %p75
      %p77 = scmp.ne.s32.totalorder %s63, %s64
      %p78 = scmp.eq.s32.totalorder %s30, 1
      %p79 = por %p77, %p78
      %p81 = scmp.ne.s32.totalorder %s64, %s80
      %p82 = scmp.eq.s32.totalorder %s30, 0
      %p83 = por %p81, %p82
      %s85 = sadd.s32 %s84, 1
      %p88 = scmp.eq.s32.totalorder %s24, 1
      %p89 = scmp.ne.s32.totalorder %s84, %s86
      %p90 = scmp.eq.s32.totalorder %s24, 0
      %p91 = por %p89, %p90
      %p92 = scmp.ne.s32.totalorder %s84, %s86
      %p93 = scmp.eq.s32.totalorder %s29, 1
      %p94 = por %p92, %p93
      %p95 = scmp.ne.s32.totalorder %s86, %s87
      %p96 = scmp.eq.s32.totalorder %s29, 0
      %p97 = por %p95, %p96
      %p98 = scmp.ne.s32.totalorder %s86, %s87
      %p99 = scmp.eq.s32.totalorder %s30, 1
      %p100 = por %p98, %p99
      %p102 = scmp.ne.s32.totalorder %s87, %s101
      %p103 = scmp.eq.s32.totalorder %s30, 0
      %p104 = por %p102, %p103
      %s106 = sadd.s32 %s105, 1
      %p109 = scmp.eq.s32.totalorder %s24, 1
      %p110 = scmp.ne.s32.totalorder %s105, %s107
      %p111 = scmp.eq.s32.totalorder %s24, 0
      %p112 = por %p110, %p111
      %p113 = scmp.ne.s32.totalorder %s105, %s107
      %p114 = scmp.eq.s32.totalorder %s29, 1
      %p115 = por %p113, %p114
      %p116 = scmp.ne.s32.totalorder %s107, %s108
      %p117 = scmp.eq.s32.totalorder %s29, 0
      %p118 = por %p116, %p117
      %p119 = scmp.ne.s32.totalorder %s107, %s108
      %p120 = scmp.eq.s32.totalorder %s30, 1
      %p121 = por %p119, %p120
      %p123 = scmp.ne.s32.totalorder %s108, %s122
      %p124 = scmp.eq.s32.totalorder %s30, 0
      %p125 = por %p123, %p124
      %s127 = sadd.s32 %s126, 1
      %p130 = scmp.eq.s32.totalorder %s24, 1
      %p131 = scmp.ne.s32.totalorder %s126, %s128
      %p132 = scmp.eq.s32.totalorder %s24, 0
      %p133 = por %p131, %p132
      %p134 = scmp.ne.s32.totalorder %s126, %s128
      %p135 = scmp.eq.s32.totalorder %s29, 1
      %p136 = por %p134, %p135
      %p137 = scmp.ne.s32.totalorder %s128, %s129
      %p138 = scmp.eq.s32.totalorder %s29, 0
      %p139 = por %p137, %p138
      %p140 = scmp.ne.s32.totalorder %s128, %s129
      %p141 = scmp.eq.s32.totalorder %s30, 1
      %p142 = por %p140, %p141
      %p144 = scmp.ne.s32.totalorder %s129, %s143
      %p145 = scmp.eq.s32.totalorder %s30, 0
      %p146 = por %p144, %p145
      %s148 = sadd.s32 %s147, 1
      %p151 = scmp.eq.s32.totalorder %s24, 1
      %p152 = scmp.ne.s32.totalorder %s147, %s149
      %p153 = scmp.eq.s32.totalorder %s24, 0
      %p154 = por %p152, %p153
      %p155 = scmp.ne.s32.totalorder %s147, %s149
      %p156 = scmp.eq.s32.totalorder %s29, 1
      %p157 = por %p155, %p156
      %p158 = scmp.ne.s32.totalorder %s149, %s150
      %p159 = scmp.eq.s32.totalorder %s29, 0
      %p160 = por %p158, %p159
      %p161 = scmp.ne.s32.totalorder %s149, %s150
      %p162 = scmp.eq.s32.totalorder %s30, 1
      %p163 = por %p161, %p162
      %p165 = scmp.ne.s32.totalorder %s150, %s164
      %p166 = scmp.eq.s32.totalorder %s30, 0
      %p167 = por %p165, %p166
      %s169 = sadd.s32 %s168, 1
      %p172 = scmp.eq.s32.totalorder %s24, 1
      %p173 = scmp.ne.s32.totalorder %s168, %s170
      %p174 = scmp.eq.s32.totalorder %s24, 0
      %p175 = por %p173, %p174
      %p176 = scmp.ne.s32.totalorder %s168, %s170
      %p177 = scmp.eq.s32.totalorder %s29, 1
      %p178 = por %p176, %p177
      %p179 = scmp.ne.s32.totalorder %s170, %s171
      %p180 = scmp.eq.s32.totalorder %s29, 0
      %p181 = por %p179, %p180
      %p182 = scmp.ne.s32.totalorder %s170, %s171
      %p183 = scmp.eq.s32.totalorder %s30, 1
      %p184 = por %p182, %p183
      %p186 = scmp.ne.s32.totalorder %s171, %s185
      %p187 = scmp.eq.s32.totalorder %s30, 0
      %p188 = por %p186, %p187
      %s190 = sadd.s32 %s189, 1
      %p193 = scmp.eq.s32.totalorder %s24, 1
      %p194 = scmp.ne.s32.totalorder %s189, %s191
      %p195 = scmp.eq.s32.totalorder %s24, 0
      %p196 = por %p194, %p195
      %p197 = scmp.ne.s32.totalorder %s189, %s191
      %p198 = scmp.eq.s32.totalorder %s29, 1
      %p199 = por %p197, %p198
      %p200 = scmp.ne.s32.totalorder %s191, %s192
      %p201 = scmp.eq.s32.totalorder %s29, 0
      %p202 = por %p200, %p201
      %p203 = scmp.ne.s32.totalorder %s191, %s192
      %p204 = scmp.eq.s32.totalorder %s30, 1
      %p205 = por %p203, %p204
      %p207 = scmp.ne.s32.totalorder %s192, %s206
      %p208 = scmp.eq.s32.totalorder %s30, 0
      %p209 = por %p207, %p208
      %s211 = sadd.s32 %s210, 1
      %p214 = scmp.eq.s32.totalorder %s24, 1
      %p215 = scmp.ne.s32.totalorder %s210, %s212
      %p216 = scmp.eq.s32.totalorder %s24, 0
      %p217 = por %p215, %p216
      %p218 = scmp.ne.s32.totalorder %s210, %s212
      %p219 = scmp.eq.s32.totalorder %s29, 1
      %p220 = por %p218, %p219
      %p221 = scmp.ne.s32.totalorder %s212, %s213
      %p222 = scmp.eq.s32.totalorder %s29, 0
      %p223 = por %p221, %p222
      %p224 = scmp.ne.s32.totalorder %s212, %s213
      %p225 = scmp.eq.s32.totalorder %s30, 1
      %p226 = por %p224, %p225
      %p228 = scmp.ne.s32.totalorder %s213, %s227
      %p229 = scmp.eq.s32.totalorder %s30, 0
      %p230 = por %p228, %p229
      %s232 = sadd.s32 %s231, 1
      %p235 = scmp.eq.s32.totalorder %s24, 1
      %p236 = scmp.ne.s32.totalorder %s231, %s233
      %p237 = scmp.eq.s32.totalorder %s24, 0
      %p238 = por %p236, %p237
      %p239 = scmp.ne.s32.totalorder %s231, %s233
      %p240 = scmp.eq.s32.totalorder %s29, 1
      %p241 = por %p239, %p240
      %p242 = scmp.ne.s32.totalorder %s233, %s234
      %p243 = scmp.eq.s32.totalorder %s29, 0
      %p244 = por %p242, %p243
      %p245 = scmp.ne.s32.totalorder %s233, %s234
      %p246 = scmp.eq.s32.totalorder %s30, 1
      %p247 = por %p245, %p246
      %p249 = scmp.ne.s32.totalorder %s234, %s248
      %p250 = scmp.eq.s32.totalorder %s30, 0
      %p251 = por %p249, %p250
      %s253 = sadd.s32 %s252, 1
      %p256 = scmp.eq.s32.totalorder %s24, 1
      %p257 = scmp.ne.s32.totalorder %s252, %s254
      %p258 = scmp.eq.s32.totalorder %s24, 0
      %p259 = por %p257, %p258
      %p260 = scmp.ne.s32.totalorder %s252, %s254
      %p261 = scmp.eq.s32.totalorder %s29, 1
      %p262 = por %p260, %p261
      %p263 = scmp.ne.s32.totalorder %s254, %s255
      %p264 = scmp.eq.s32.totalorder %s29, 0
      %p265 = por %p263, %p264
      %p266 = scmp.ne.s32.totalorder %s254, %s255
      %p267 = scmp.eq.s32.totalorder %s30, 1
      %p268 = por %p266, %p267
      %p270 = scmp.ne.s32.totalorder %s255, %s269
      %p271 = scmp.eq.s32.totalorder %s30, 0
      %p272 = por %p270, %p271
      %s274 = sadd.s32 %s273, 1
      %p277 = scmp.eq.s32.totalorder %s24, 1
      %p278 = scmp.ne.s32.totalorder %s273, %s275
      %p279 = scmp.eq.s32.totalorder %s24, 0
      %p280 = por %p278, %p279
      %p281 = scmp.ne.s32.totalorder %s273, %s275
      %p282 = scmp.eq.s32.totalorder %s29, 1
      %p283 = por %p281, %p282
      %p284 = scmp.ne.s32.totalorder %s275, %s276
      %p285 = scmp.eq.s32.totalorder %s29, 0
      %p286 = por %p284, %p285
      %p287 = scmp.ne.s32.totalorder %s275, %s276
      %p288 = scmp.eq.s32.totalorder %s30, 1
      %p289 = por %p287, %p288
      %p291 = scmp.ne.s32.totalorder %s276, %s290
      %p292 = scmp.eq.s32.totalorder %s30, 0
      %p293 = por %p291, %p292
      %s295 = sadd.s32 %s294, 1
      %p298 = scmp.eq.s32.totalorder %s24, 1
      %p299 = scmp.ne.s32.totalorder %s294, %s296
      %p300 = scmp.eq.s32.totalorder %s24, 0
      %p301 = por %p299, %p300
      %p302 = scmp.ne.s32.totalorder %s294, %s296
      %p303 = scmp.eq.s32.totalorder %s29, 1
      %p304 = por %p302, %p303
      %p305 = scmp.ne.s32.totalorder %s296, %s297
      %p306 = scmp.eq.s32.totalorder %s29, 0
      %p307 = por %p305, %p306
      %p308 = scmp.ne.s32.totalorder %s296, %s297
      %p309 = scmp.eq.s32.totalorder %s30, 1
      %p310 = por %p308, %p309
      %p312 = scmp.ne.s32.totalorder %s297, %s311
      %p313 = scmp.eq.s32.totalorder %s30, 0
      %p314 = por %p312, %p313
      %s315 = ssub.s32 %s24, %s31
      %p316 = scmp.eq.s32.totalorder %s315, 0
      %s318 = sadd.s32 %s317, 1
      %s319 = scalar_select %p316, %s317, %s318
      %p322 = pneg %p316
      %p323 = scmp.eq.s32.totalorder %s24, 1
      %p324 = por %p322, %p323
      %p325 = scmp.ne.s32.totalorder %s317, %s320
      %p326 = scmp.eq.s32.totalorder %s24, 0
      %p327 = por %p325, %p326
      %p328 = scmp.ne.s32.totalorder %s317, %s320
      %p329 = scmp.eq.s32.totalorder %s29, 1
      %p330 = por %p328, %p329
      %p331 = scmp.ne.s32.totalorder %s320, %s321
      %p332 = scmp.eq.s32.totalorder %s29, 0
      %p333 = por %p331, %p332
      %p334 = scmp.ne.s32.totalorder %s320, %s321
      %p335 = scmp.eq.s32.totalorder %s30, 1
      %p336 = por %p334, %p335
      %p338 = scmp.ne.s32.totalorder %s321, %s337
      %p339 = scmp.eq.s32.totalorder %s30, 0
      %p340 = por %p338, %p339
      %p341 = scmp.le.s32.totalorder 1, %s24
      %p342 = scmp.lt.s32.totalorder %s24, 3
      %p343 = pnand %p341, %p342
      %p344 = pneg %p343
      // Predicated region
      $region9: #{edge_aware_forward.1} parent=5 // pred_check
        _
      $region10: #{edge_aware_forward.1} parent=5 // pred_check_branch
        %346 = sbr.rel (%p343) target = $region12
      $region11: #{edge_aware_forward.1} parent=5 // pred_region
        %s347 = ssub.s32 %s24, 1
        // Predicated region
        $region13: #{edge_aware_forward.1} parent=11 // pred_check
          %p348 = pneg %p97
        $region14: #{edge_aware_forward.1} parent=11 // pred_check_branch
          %350 = sbr.rel (%p348) target = $region16
        $region15: #{edge_aware_forward.1} parent=11 // pred_region
          _
        $region16: #{edge_aware_forward.1} parent=11 // pred_fallthru
          _
        // Predicated region
        $region17: #{edge_aware_forward.1} parent=11 // pred_check
          %p351 = pneg %p118
        $region18: #{edge_aware_forward.1} parent=11 // pred_check_branch
          %353 = sbr.rel (%p351) target = $region20
        $region19: #{edge_aware_forward.1} parent=11 // pred_region
          _
        $region20: #{edge_aware_forward.1} parent=11 // pred_fallthru
          _
        // Predicated region
        $region21: #{edge_aware_forward.1} parent=11 // pred_check
          %p354 = pneg %p139
        $region22: #{edge_aware_forward.1} parent=11 // pred_check_branch
          %356 = sbr.rel (%p354) target = $region24
        $region23: #{edge_aware_forward.1} parent=11 // pred_region
          _
        $region24: #{edge_aware_forward.1} parent=11 // pred_fallthru
          _
        // Predicated region
        $region25: #{edge_aware_forward.1} parent=11 // pred_check
          %p357 = pneg %p160
        $region26: #{edge_aware_forward.1} parent=11 // pred_check_branch
          %359 = sbr.rel (%p357) target = $region28
        $region27: #{edge_aware_forward.1} parent=11 // pred_region
          _
        $region28: #{edge_aware_forward.1} parent=11 // pred_fallthru
          _
        // Predicated region
        $region29: #{edge_aware_forward.1} parent=11 // pred_check
          %p360 = pneg %p181
        $region30: #{edge_aware_forward.1} parent=11 // pred_check_branch
          %362 = sbr.rel (%p360) target = $region32
        $region31: #{edge_aware_forward.1} parent=11 // pred_region
          _
        $region32: #{edge_aware_forward.1} parent=11 // pred_fallthru
          _
        // Predicated region
        $region33: #{edge_aware_forward.1} parent=11 // pred_check
          %p363 = pneg %p202
        $region34: #{edge_aware_forward.1} parent=11 // pred_check_branch
          %365 = sbr.rel (%p363) target = $region36
        $region35: #{edge_aware_forward.1} parent=11 // pred_region
          _
        $region36: #{edge_aware_forward.1} parent=11 // pred_fallthru
          _
        // Predicated region
        $region37: #{edge_aware_forward.1} parent=11 // pred_check
          %p366 = pneg %p223
        $region38: #{edge_aware_forward.1} parent=11 // pred_check_branch
          %368 = sbr.rel (%p366) target = $region40
        $region39: #{edge_aware_forward.1} parent=11 // pred_region
          _
        $region40: #{edge_aware_forward.1} parent=11 // pred_fallthru
          _
        // Predicated region
        $region41: #{edge_aware_forward.1} parent=11 // pred_check
          %p369 = pneg %p244
        $region42: #{edge_aware_forward.1} parent=11 // pred_check_branch
          %371 = sbr.rel (%p369) target = $region44
        $region43: #{edge_aware_forward.1} parent=11 // pred_region
          _
        $region44: #{edge_aware_forward.1} parent=11 // pred_fallthru
          _
        // Predicated region
        $region45: #{edge_aware_forward.1} parent=11 // pred_check
          %p372 = pneg %p265
        $region46: #{edge_aware_forward.1} parent=11 // pred_check_branch
          %374 = sbr.rel (%p372) target = $region48
        $region47: #{edge_aware_forward.1} parent=11 // pred_region
          _
        $region48: #{edge_aware_forward.1} parent=11 // pred_fallthru
          _
        // Predicated region
        $region49: #{edge_aware_forward.1} parent=11 // pred_check
          %p375 = pneg %p286
        $region50: #{edge_aware_forward.1} parent=11 // pred_check_branch
          %377 = sbr.rel (%p375) target = $region52
        $region51: #{edge_aware_forward.1} parent=11 // pred_region
          _
        $region52: #{edge_aware_forward.1} parent=11 // pred_fallthru
          _
        // Predicated region
        $region53: #{edge_aware_forward.1} parent=11 // pred_check
          %p378 = pneg %p307
        $region54: #{edge_aware_forward.1} parent=11 // pred_check_branch
          %380 = sbr.rel (%p378) target = $region56
        $region55: #{edge_aware_forward.1} parent=11 // pred_region
          _
        $region56: #{edge_aware_forward.1} parent=11 // pred_fallthru
          _
      $region12: #{edge_aware_forward.1} parent=5 // pred_fallthru
        _
      %p381 = scmp.lt.s32.totalorder %s24, 2
      // Predicated region
      $region57: #{edge_aware_forward.1} parent=5 // pred_check
        %p382 = pneg %p381
      $region58: #{edge_aware_forward.1} parent=5 // pred_check_branch
        %384 = sbr.rel (%p382) target = $region60
      $region59: #{edge_aware_forward.1} parent=5 // pred_region
        // Predicated region
        $region61: #{edge_aware_forward.1} parent=59 // pred_check
          %p385 = pneg %p44
        $region62: #{edge_aware_forward.1} parent=59 // pred_check_branch
          %387 = sbr.rel (%p385) target = $region64
        $region63: #{edge_aware_forward.1} parent=59 // pred_region
          %p388 = scmp.lt.s32.totalorder %s24, 1
          %s389 = scalar_select %p388, %s24, 1
          %s390 = smul.addr %s389, 16
          %s391 = smul.addr %s390, 4
          %s392 = scalar_lea.vmem %s0, %s391
        $region64: #{edge_aware_forward.1} parent=59 // pred_fallthru
          _
        // Predicated region
        $region65: #{edge_aware_forward.1} parent=59 // pred_check
          %p393 = pneg %p70
        $region66: #{edge_aware_forward.1} parent=59 // pred_check_branch
          %395 = sbr.rel (%p393) target = $region68
        $region67: #{edge_aware_forward.1} parent=59 // pred_region
          %p396 = scmp.lt.s32.totalorder %s24, 1
          %s397 = scalar_select %p396, %s24, 1
          %s398 = smul.addr %s397, 4
          %s399 = smul.addr %s398, 4
          %s400 = scalar_lea.vmem %s1, %s399
        $region68: #{edge_aware_forward.1} parent=59 // pred_fallthru
          _
      $region60: #{edge_aware_forward.1} parent=5 // pred_fallthru
        _
      %p401 = scmp.le.s32.totalorder 1, %s24
      %p402 = scmp.lt.s32.totalorder %s24, 3
      %p403 = pnand %p401, %p402
      %p404 = pneg %p403
      // Predicated region
      $region69: #{edge_aware_forward.1} parent=5 // pred_check
        _
      $region70: #{edge_aware_forward.1} parent=5 // pred_check_branch
        %406 = sbr.rel (%p403) target = $region72
      $region71: #{edge_aware_forward.1} parent=5 // pred_region
        %s407 = ssub.s32 %s24, 1
        %p408 = scmp.lt.s32.totalorder %s29, 1
        %s409 = scalar_select %p408, %s29, 1
        %s410 = smul.addr %s409, 16
        %s411 = smul.addr %s410, 4
        %s412 = scalar_lea.vmem %s0, %s411
        %p413 = pneg %p50
        %p414 = pneg %p47
        %p415 = scmp.lt.s32.totalorder %s29, 1
        %s416 = scalar_select %p415, %s29, 1
        %s417 = smul.addr %s416, 4
        %s418 = smul.addr %s417, 4
        %s419 = scalar_lea.vmem %s1, %s418
        %p420 = pneg %p76
        %p421 = pneg %p73
        %p422 = pneg %p97
        %p423 = pneg %p94
        %p424 = pneg %p118
        %p425 = pneg %p115
        %p426 = pneg %p139
        %p427 = pneg %p136
        %p428 = pneg %p160
        %p429 = pneg %p157
        %p430 = pneg %p181
        %p431 = pneg %p178
        %p432 = pneg %p202
        %p433 = pneg %p199
        %p434 = pneg %p223
        %p435 = pneg %p220
        %p436 = pneg %p244
        %p437 = pneg %p241
        %p438 = pneg %p265
        %p439 = pneg %p262
        %p440 = pneg %p286
        %p441 = pneg %p283
        %p442 = pneg %p307
        %p443 = pneg %p304
        %p444 = pneg %p333
        %p445 = pneg %p330
        %s446 = sand.u32 %s320, 1
        %s447 = scalar_lea.sflag [#allocation4], %s446
        %s448 = sand.u32 %s320, 1
        %s449 = smul.addr %s448, 64
        %s450 = scalar_lea.vmem [#allocation3], %s449
        %p451 = scmp.lt.s32.totalorder %s29, 1
        %s452 = scalar_select %p451, %s29, 1
        %s453 = smul.addr %s452, 16
        %s454 = smul.addr %s453, 4
        %s455 = scalar_lea.vmem %s0, %s454
        %p456 = scmp.lt.s32.totalorder %s29, 1
        %s457 = scalar_select %p456, %s29, 1
        %s458 = smul.addr %s457, 4
        %s459 = smul.addr %s458, 4
        %s460 = scalar_lea.vmem %s1, %s459
        %v462 = vld [vmem:[%s455] sm:$0xff]
        %v463 = vld [vmem:[%s455 + $0x8] sm:$0xff]
        %v464 = vld [vmem:[%s455 + $0x10] sm:$0xff]
        %v465 = vld [vmem:[%s455 + $0x18] sm:$0xff]
        %v466 = vld [vmem:[%s455 + $0x20] sm:$0xff]
        %v467 = vld [vmem:[%s455 + $0x28] sm:$0xff]
        %v468 = vld [vmem:[%s455 + $0x30] sm:$0xff]
        %v469 = vld [vmem:[%s455 + $0x38] sm:$0xff]
        %v470 = vld [vmem:[%s2] sm:$0xff]
        %v471 = vld [vmem:[%s2 + $0x8] sm:$0xff]
        %v472 = vld [vmem:[%s2 + $0x10] sm:$0xff]
        %v473 = vld [vmem:[%s2 + $0x18] sm:$0xff]
        %v474 = vld [vmem:[%s2 + $0x20] sm:$0xff]
        %v475 = vld [vmem:[%s2 + $0x28] sm:$0xff]
        %v476 = vld [vmem:[%s2 + $0x30] sm:$0xff]
        %v477 = vld [vmem:[%s2 + $0x38] sm:$0xff]
        %v478 = vld [vmem:[%s2 + $0x40] sm:$0xff]
        %v479 = vld [vmem:[%s2 + $0x48] sm:$0xff]
        %v480 = vld [vmem:[%s2 + $0x50] sm:$0xff]
        %v481 = vld [vmem:[%s2 + $0x58] sm:$0xff]
        %v482 = vld [vmem:[%s2 + $0x60] sm:$0xff]
        %v483 = vld [vmem:[%s2 + $0x68] sm:$0xff]
        %v484 = vld [vmem:[%s2 + $0x70] sm:$0xff]
        %v485 = vld [vmem:[%s2 + $0x78] sm:$0xff]
        %v486 = vld [vmem:[%s2 + $0x80] sm:$0xff]
        %v487 = vld [vmem:[%s2 + $0x88] sm:$0xff]
        %v488 = vld [vmem:[%s2 + $0x90] sm:$0xff]
        %v489 = vld [vmem:[%s2 + $0x98] sm:$0xff]
        %v490 = vld [vmem:[%s2 + $0xa0] sm:$0xff]
        %v491 = vld [vmem:[%s2 + $0xa8] sm:$0xff]
        %v492 = vld [vmem:[%s2 + $0xb0] sm:$0xff]
        %v493 = vld [vmem:[%s2 + $0xb8] sm:$0xff]
        %v494 = vld [vmem:[%s2 + $0xc0] sm:$0xff]
        %v495 = vld [vmem:[%s2 + $0xc8] sm:$0xff]
        %v496 = vld [vmem:[%s2 + $0xd0] sm:$0xff]
        %v497 = vld [vmem:[%s2 + $0xd8] sm:$0xff]
        %v498 = vld [vmem:[%s2 + $0xe0] sm:$0xff]
        %v499 = vld [vmem:[%s2 + $0xe8] sm:$0xff]
        %v500 = vld [vmem:[%s2 + $0xf0] sm:$0xff]
        %v501 = vld [vmem:[%s2 + $0xf8] sm:$0xff]
        %v510 = vunpack.c.l.b16 %v462
        %v511 = vunpack.c.h.b16 %v462
        %v512 = vunpack.c.l.b16 %v463
        %v513 = vunpack.c.h.b16 %v463
        %v514 = vunpack.c.l.b16 %v464
        %v515 = vunpack.c.h.b16 %v464
        %v516 = vunpack.c.l.b16 %v465
        %v517 = vunpack.c.h.b16 %v465
        %v518 = vunpack.c.l.b16 %v466
        %v519 = vunpack.c.h.b16 %v466
        %v520 = vunpack.c.l.b16 %v467
        %v521 = vunpack.c.h.b16 %v467
        %v522 = vunpack.c.l.b16 %v468
        %v523 = vunpack.c.h.b16 %v468
        %v524 = vunpack.c.l.b16 %v469
        %v525 = vunpack.c.h.b16 %v469
        %v526 = vpack.c.b16 %v512, %v510
        %v527 = vpack.c.b16 %v513, %v511
        %v528 = vpack.c.b16 %v516, %v514
        %v529 = vpack.c.b16 %v517, %v515
        %v530 = vpack.c.b16 %v520, %v518
        %v531 = vpack.c.b16 %v521, %v519
        %v532 = vpack.c.b16 %v524, %v522
        %v533 = vpack.c.b16 %v525, %v523
        %v574 = vunpack.c.l.b16 %v470
        %v575 = vunpack.c.h.b16 %v470
        %v576 = vunpack.c.l.b16 %v471
        %v577 = vunpack.c.h.b16 %v471
        %v578 = vunpack.c.l.b16 %v472
        %v579 = vunpack.c.h.b16 %v472
        %v580 = vunpack.c.l.b16 %v473
        %v581 = vunpack.c.h.b16 %v473
        %v582 = vunpack.c.l.b16 %v474
        %v583 = vunpack.c.h.b16 %v474
        %v584 = vunpack.c.l.b16 %v475
        %v585 = vunpack.c.h.b16 %v475
        %v586 = vunpack.c.l.b16 %v476
        %v587 = vunpack.c.h.b16 %v476
        %v588 = vunpack.c.l.b16 %v477
        %v589 = vunpack.c.h.b16 %v477
        %v590 = vunpack.c.l.b16 %v478
        %v591 = vunpack.c.h.b16 %v478
        %v592 = vunpack.c.l.b16 %v479
        %v593 = vunpack.c.h.b16 %v479
        %v594 = vunpack.c.l.b16 %v480
        %v595 = vunpack.c.h.b16 %v480
        %v596 = vunpack.c.l.b16 %v481
        %v597 = vunpack.c.h.b16 %v481
        %v598 = vunpack.c.l.b16 %v482
        %v599 = vunpack.c.h.b16 %v482
        %v600 = vunpack.c.l.b16 %v483
        %v601 = vunpack.c.h.b16 %v483
        %v602 = vunpack.c.l.b16 %v484
        %v603 = vunpack.c.h.b16 %v484
        %v604 = vunpack.c.l.b16 %v485
        %v605 = vunpack.c.h.b16 %v485
        %v606 = vunpack.c.l.b16 %v486
        %v607 = vunpack.c.h.b16 %v486
        %v608 = vunpack.c.l.b16 %v487
        %v609 = vunpack.c.h.b16 %v487
        %v610 = vunpack.c.l.b16 %v488
        %v611 = vunpack.c.h.b16 %v488
        %v612 = vunpack.c.l.b16 %v489
        %v613 = vunpack.c.h.b16 %v489
        %v614 = vunpack.c.l.b16 %v490
        %v615 = vunpack.c.h.b16 %v490
        %v616 = vunpack.c.l.b16 %v491
        %v617 = vunpack.c.h.b16 %v491
        %v618 = vunpack.c.l.b16 %v492
        %v619 = vunpack.c.h.b16 %v492
        %v620 = vunpack.c.l.b16 %v493
        %v621 = vunpack.c.h.b16 %v493
        %v622 = vunpack.c.l.b16 %v494
        %v623 = vunpack.c.h.b16 %v494
        %v624 = vunpack.c.l.b16 %v495
        %v625 = vunpack.c.h.b16 %v495
        %v626 = vunpack.c.l.b16 %v496
        %v627 = vunpack.c.h.b16 %v496
        %v628 = vunpack.c.l.b16 %v497
        %v629 = vunpack.c.h.b16 %v497
        %v630 = vunpack.c.l.b16 %v498
        %v631 = vunpack.c.h.b16 %v498
        %v632 = vunpack.c.l.b16 %v499
        %v633 = vunpack.c.h.b16 %v499
        %v634 = vunpack.c.l.b16 %v500
        %v635 = vunpack.c.h.b16 %v500
        %v636 = vunpack.c.l.b16 %v501
        %v637 = vunpack.c.h.b16 %v501
        %v638 = vpack.c.b16 %v576, %v574
        %v639 = vpack.c.b16 %v577, %v575
        %v640 = vpack.c.b16 %v580, %v578
        %v641 = vpack.c.b16 %v581, %v579
        %v642 = vpack.c.b16 %v584, %v582
        %v643 = vpack.c.b16 %v585, %v583
        %v644 = vpack.c.b16 %v588, %v586
        %v645 = vpack.c.b16 %v589, %v587
        %v646 = vpack.c.b16 %v592, %v590
        %v647 = vpack.c.b16 %v593, %v591
        %v648 = vpack.c.b16 %v596, %v594
        %v649 = vpack.c.b16 %v597, %v595
        %v650 = vpack.c.b16 %v600, %v598
        %v651 = vpack.c.b16 %v601, %v599
        %v652 = vpack.c.b16 %v604, %v602
        %v653 = vpack.c.b16 %v605, %v603
        %v654 = vpack.c.b16 %v608, %v606
        %v655 = vpack.c.b16 %v609, %v607
        %v656 = vpack.c.b16 %v612, %v610
        %v657 = vpack.c.b16 %v613, %v611
        %v658 = vpack.c.b16 %v616, %v614
        %v659 = vpack.c.b16 %v617, %v615
        %v660 = vpack.c.b16 %v620, %v618
        %v661 = vpack.c.b16 %v621, %v619
        %v662 = vpack.c.b16 %v624, %v622
        %v663 = vpack.c.b16 %v625, %v623
        %v664 = vpack.c.b16 %v628, %v626
        %v665 = vpack.c.b16 %v629, %v627
        %v666 = vpack.c.b16 %v632, %v630
        %v667 = vpack.c.b16 %v633, %v631
        %v668 = vpack.c.b16 %v636, %v634
        %v669 = vpack.c.b16 %v637, %v635
        %702 = vmatprep.subr.bf16.mxu0 %v639
        %703 = vmatpush1.bf16.msra.mxu0 %v638
        %704 = vmatprep.subr.bf16.mxu0 %v641
        %705 = vmatpush1.bf16.msra.mxu0 %v640
        %706 = vmatprep.subr.bf16.mxu0 %v643
        %707 = vmatpush1.bf16.msra.mxu0 %v642
        %708 = vmatprep.subr.bf16.mxu0 %v645
        %709 = vmatpush1.bf16.msra.mxu0 %v644
        %710 = vmatprep.subr.bf16.mxu0 %v647
        %711 = vmatpush1.bf16.msra.mxu0 %v646
        %712 = vmatprep.subr.bf16.mxu0 %v649
        %713 = vmatpush1.bf16.msra.mxu0 %v648
        %714 = vmatprep.subr.bf16.mxu0 %v651
        %715 = vmatpush1.bf16.msra.mxu0 %v650
        %716 = vmatprep.subr.bf16.mxu0 %v653
        %717 = vmatpush1.bf16.msra.mxu0 %v652
        %718 = vmatprep.subr.bf16.mxu0 %v655
        %719 = vmatpush1.bf16.msra.mxu0 %v654
        %720 = vmatprep.subr.bf16.mxu0 %v657
        %721 = vmatpush1.bf16.msra.mxu0 %v656
        %722 = vmatprep.subr.bf16.mxu0 %v659
        %723 = vmatpush1.bf16.msra.mxu0 %v658
        %724 = vmatprep.subr.bf16.mxu0 %v661
        %725 = vmatpush1.bf16.msra.mxu0 %v660
        %726 = vmatprep.subr.bf16.mxu0 %v663
        %727 = vmatpush1.bf16.msra.mxu0 %v662
        %728 = vmatprep.subr.bf16.mxu0 %v665
        %729 = vmatpush1.bf16.msra.mxu0 %v664
        %730 = vmatprep.subr.bf16.mxu0 %v667
        %731 = vmatpush1.bf16.msra.mxu0 %v666
        %732 = vmatprep.subr.bf16.mxu0 %v669
        %733 = vmatpush1.bf16.msra.mxu0 %v668
        %734 = vmatprep.mubr.bf16.mxu0 %v527
        %735 = vmatmul.mubr.bf16.gmra.mrb[0].mxu0 %v526
        %v736 = vpop.f32.mrb[0].mxu0
        %v737 = vadd.f32 0.0, %v736
        %v738 = vpop.f32.mrb[0].mxu0
        %v739 = vadd.f32 0.0, %v738
        %v740 = vpop.f32.mrb[0].mxu0
        %v741 = vadd.f32 0.0, %v740
        %v742 = vpop.f32.mrb[0].mxu0
        %v743 = vadd.f32 0.0, %v742
        %744 = vmatprep.mubr.bf16.mxu0 %v529
        %745 = vmatmul.mubr.bf16.gmra.mrb[0].mxu0 %v528
        %v746 = vpop.f32.mrb[0].mxu0
        %v747 = vadd.f32 0.0, %v746
        %v748 = vpop.f32.mrb[0].mxu0
        %v749 = vadd.f32 0.0, %v748
        %v750 = vpop.f32.mrb[0].mxu0
        %v751 = vadd.f32 0.0, %v750
        %v752 = vpop.f32.mrb[0].mxu0
        %v753 = vadd.f32 0.0, %v752
        %754 = vmatprep.mubr.bf16.mxu0 %v531
        %755 = vmatmul.mubr.bf16.gmra.mrb[0].mxu0 %v530
        %v756 = vpop.f32.mrb[0].mxu0
        %v757 = vadd.f32 0.0, %v756
        %v758 = vpop.f32.mrb[0].mxu0
        %v759 = vadd.f32 0.0, %v758
        %v760 = vpop.f32.mrb[0].mxu0
        %v761 = vadd.f32 0.0, %v760
        %v762 = vpop.f32.mrb[0].mxu0
        %v763 = vadd.f32 0.0, %v762
        %764 = vmatprep.mubr.bf16.mxu0 %v533
        %765 = vmatmul.mubr.bf16.gmra.mrb[0].mxu0 %v532
        %v766 = vpop.f32.mrb[0].mxu0
        %v767 = vadd.f32 0.0, %v766
        %v768 = vpop.f32.mrb[0].mxu0
        %v769 = vadd.f32 0.0, %v768
        %v770 = vpop.f32.mrb[0].mxu0
        %v771 = vadd.f32 0.0, %v770
        %v772 = vpop.f32.mrb[0].mxu0
        %v773 = vadd.f32 0.0, %v772
        %774 = vdwg.mxu0
        %v775 = vld [vmem:[%s6] sm:$0xf]
        %v776 = vld [vmem:[%s6 + $0x4] sm:$0xf]
        %v777 = vld [vmem:[%s6 + $0x8] sm:$0xf]
        %v778 = vld [vmem:[%s6 + $0xc] sm:$0xf]
        %v779 = vld [vmem:[%s6 + $0x10] sm:$0xf]
        %v780 = vld [vmem:[%s6 + $0x14] sm:$0xf]
        %v781 = vld [vmem:[%s6 + $0x18] sm:$0xf]
        %v782 = vld [vmem:[%s6 + $0x1c] sm:$0xf]
        %v783 = vld [vmem:[%s6 + $0x20] sm:$0xf]
        %v784 = vld [vmem:[%s6 + $0x24] sm:$0xf]
        %v785 = vld [vmem:[%s6 + $0x28] sm:$0xf]
        %v786 = vld [vmem:[%s6 + $0x2c] sm:$0xf]
        %v787 = vld [vmem:[%s6 + $0x30] sm:$0xf]
        %v788 = vld [vmem:[%s6 + $0x34] sm:$0xf]
        %v789 = vld [vmem:[%s6 + $0x38] sm:$0xf]
        %v790 = vld [vmem:[%s6 + $0x3c] sm:$0xf]
        %v791 = vld [vmem:[%s6 + $0x40] sm:$0xf]
        %v792 = vld [vmem:[%s6 + $0x44] sm:$0xf]
        %v793 = vld [vmem:[%s6 + $0x48] sm:$0xf]
        %v794 = vld [vmem:[%s6 + $0x4c] sm:$0xf]
        %v795 = vld [vmem:[%s6 + $0x50] sm:$0xf]
        %v796 = vld [vmem:[%s6 + $0x54] sm:$0xf]
        %v797 = vld [vmem:[%s6 + $0x58] sm:$0xf]
        %v798 = vld [vmem:[%s6 + $0x5c] sm:$0xf]
        %v799 = vld [vmem:[%s6 + $0x60] sm:$0xf]
        %v800 = vld [vmem:[%s6 + $0x64] sm:$0xf]
        %v801 = vld [vmem:[%s6 + $0x68] sm:$0xf]
        %v802 = vld [vmem:[%s6 + $0x6c] sm:$0xf]
        %v803 = vld [vmem:[%s6 + $0x70] sm:$0xf]
        %v804 = vld [vmem:[%s6 + $0x74] sm:$0xf]
        %v805 = vld [vmem:[%s6 + $0x78] sm:$0xf]
        %v806 = vld [vmem:[%s6 + $0x7c] sm:$0xf]
        %v807 = vpack.c.bf16 %v741, %v737
        %v808 = vpack.c.bf16 %v743, %v739
        %v809 = vpack.c.bf16 %v751, %v747
        %v810 = vpack.c.bf16 %v753, %v749
        %v811 = vpack.c.bf16 %v761, %v757
        %v812 = vpack.c.bf16 %v763, %v759
        %v813 = vpack.c.bf16 %v771, %v767
        %v814 = vpack.c.bf16 %v773, %v769
        %v815 = vld [vmem:[%s3] sm:$0x3]
        %v817 = vlaneseq
        %v818 = vshrl.u32 %v817, 7
        %v819 = vsub.s32 0, %v818
        %v820 = vrot.slane %v815, %v819
        %v821 = vlaneseq
        %v822 = vshrl.u32 %v821, 7
        %v823 = vsub.s32 1, %v822
        %v824 = vrot.slane %v815, %v823
        %v859 = vunpack.c.l.b16 %v775
        %v860 = vunpack.c.l.b16 %v776
        %v861 = vunpack.c.l.b16 %v777
        %v862 = vunpack.c.l.b16 %v778
        %v863 = vunpack.c.l.b16 %v779
        %v864 = vunpack.c.l.b16 %v780
        %v865 = vunpack.c.l.b16 %v781
        %v866 = vunpack.c.l.b16 %v782
        %v867 = vunpack.c.l.b16 %v783
        %v868 = vunpack.c.l.b16 %v784
        %v869 = vunpack.c.l.b16 %v785
        %v870 = vunpack.c.l.b16 %v786
        %v871 = vunpack.c.l.b16 %v787
        %v872 = vunpack.c.l.b16 %v788
        %v873 = vunpack.c.l.b16 %v789
        %v874 = vunpack.c.l.b16 %v790
        %v875 = vunpack.c.l.b16 %v791
        %v876 = vunpack.c.l.b16 %v792
        %v877 = vunpack.c.l.b16 %v793
        %v878 = vunpack.c.l.b16 %v794
        %v879 = vunpack.c.l.b16 %v795
        %v880 = vunpack.c.l.b16 %v796
        %v881 = vunpack.c.l.b16 %v797
        %v882 = vunpack.c.l.b16 %v798
        %v883 = vunpack.c.l.b16 %v799
        %v884 = vunpack.c.l.b16 %v800
        %v885 = vunpack.c.l.b16 %v801
        %v886 = vunpack.c.l.b16 %v802
        %v887 = vunpack.c.l.b16 %v803
        %v888 = vunpack.c.l.b16 %v804
        %v889 = vunpack.c.l.b16 %v805
        %v890 = vunpack.c.l.b16 %v806
        %v891 = vpack.c.b16 %v860, %v859
        %v892 = vpack.c.b16 %v862, %v861
        %v893 = vpack.c.b16 %v864, %v863
        %v894 = vpack.c.b16 %v866, %v865
        %v895 = vpack.c.b16 %v868, %v867
        %v896 = vpack.c.b16 %v870, %v869
        %v897 = vpack.c.b16 %v872, %v871
        %v898 = vpack.c.b16 %v874, %v873
        %v899 = vpack.c.b16 %v876, %v875
        %v900 = vpack.c.b16 %v878, %v877
        %v901 = vpack.c.b16 %v880, %v879
        %v902 = vpack.c.b16 %v882, %v881
        %v903 = vpack.c.b16 %v884, %v883
        %v904 = vpack.c.b16 %v886, %v885
        %v905 = vpack.c.b16 %v888, %v887
        %v906 = vpack.c.b16 %v890, %v889
        %vm907 = vcmask 523264
        %v909 = vsel %vm907, %v891, 0
        %v912 = vsel %vm907, %v892, 0
        %v915 = vsel %vm907, %v893, 0
        %v918 = vsel %vm907, %v894, 0
        %v921 = vsel %vm907, %v895, 0
        %v924 = vsel %vm907, %v896, 0
        %v927 = vsel %vm907, %v897, 0
        %v930 = vsel %vm907, %v898, 0
        %v933 = vsel %vm907, %v899, 0
        %v936 = vsel %vm907, %v900, 0
        %v939 = vsel %vm907, %v901, 0
        %v942 = vsel %vm907, %v902, 0
        %v945 = vsel %vm907, %v903, 0
        %v948 = vsel %vm907, %v904, 0
        %v951 = vsel %vm907, %v905, 0
        %v954 = vsel %vm907, %v906, 0
        %956 = vmatprep.subr.bf16.mxu0 %v808
        %957 = vmatpush1.bf16.msra.mxu0 %v807
        %958 = vmatprep.subr.bf16.mxu0 %v810
        %959 = vmatpush1.bf16.msra.mxu0 %v809
        %960 = vmatprep.subr.bf16.mxu0 %v812
        %961 = vmatpush1.bf16.msra.mxu0 %v811
        %962 = vmatprep.subr.bf16.mxu0 %v814
        %963 = vmatpush1.bf16.msra.mxu0 %v813
        %964 = vmatprep.subr.bf16.mxu0 0
        %965 = vmatpush1.bf16.msra.mxu0 0
        %966 = vmatprep.subr.bf16.mxu0 0
        %967 = vmatpush1.bf16.msra.mxu0 0
        %968 = vmatprep.subr.bf16.mxu0 0
        %969 = vmatpush1.bf16.msra.mxu0 0
        %970 = vmatprep.subr.bf16.mxu0 0
        %971 = vmatpush1.bf16.msra.mxu0 0
        %972 = vmatprep.subr.bf16.mxu0 0
        %973 = vmatpush1.bf16.msra.mxu0 0
        %974 = vmatprep.subr.bf16.mxu0 0
        %975 = vmatpush1.bf16.msra.mxu0 0
        %976 = vmatprep.subr.bf16.mxu0 0
        %977 = vmatpush1.bf16.msra.mxu0 0
        %978 = vmatprep.subr.bf16.mxu0 0
        %979 = vmatpush1.bf16.msra.mxu0 0
        %980 = vmatprep.subr.bf16.mxu0 0
        %981 = vmatpush1.bf16.msra.mxu0 0
        %982 = vmatprep.subr.bf16.mxu0 0
        %983 = vmatpush1.bf16.msra.mxu0 0
        %984 = vmatprep.subr.bf16.mxu0 0
        %985 = vmatpush1.bf16.msra.mxu0 0
        %986 = vmatprep.subr.bf16.mxu0 0
        %987 = vmatpush1.bf16.msra.mxu0 0
        %988 = vmatprep.mubr.bf16.mxu0 0
        %989 = vmatmul.mubr.bf16.gmra.mrb[0].mxu0 %v909
        %v990 = vpop.f32.mrb[0].mxu0
        %v991 = vadd.f32 %v820, %v990
        %v992 = vpop.f32.mrb[0].mxu0
        %v993 = vadd.f32 %v824, %v992
        %v994 = vpop.f32.mrb[0].mxu0
        %v995 = vadd.f32 %v820, %v994
        %v996 = vpop.f32.mrb[0].mxu0
        %v997 = vadd.f32 %v824, %v996
        %998 = vmatprep.mubr.bf16.mxu0 0
        %999 = vmatmul.mubr.bf16.gmra.mrb[0].mxu0 %v912
        %v1000 = vpop.f32.mrb[0].mxu0
        %v1001 = vadd.f32 %v820, %v1000
        %v1002 = vpop.f32.mrb[0].mxu0
        %v1003 = vadd.f32 %v824, %v1002
        %v1004 = vpop.f32.mrb[0].mxu0
        %v1005 = vadd.f32 %v820, %v1004
        %v1006 = vpop.f32.mrb[0].mxu0
        %v1007 = vadd.f32 %v824, %v1006
        %1008 = vmatprep.mubr.bf16.mxu0 0
        %1009 = vmatmul.mubr.bf16.gmra.mrb[0].mxu0 %v915
        %v1010 = vpop.f32.mrb[0].mxu0
        %v1011 = vadd.f32 %v820, %v1010
        %v1012 = vpop.f32.mrb[0].mxu0
        %v1013 = vadd.f32 %v824, %v1012
        %v1014 = vpop.f32.mrb[0].mxu0
        %v1015 = vadd.f32 %v820, %v1014
        %v1016 = vpop.f32.mrb[0].mxu0
        %v1017 = vadd.f32 %v824, %v1016
        %1018 = vmatprep.mubr.bf16.mxu0 0
        %1019 = vmatmul.mubr.bf16.gmra.mrb[0].mxu0 %v918
        %v1020 = vpop.f32.mrb[0].mxu0
        %v1021 = vadd.f32 %v820, %v1020
        %v1022 = vpop.f32.mrb[0].mxu0
        %v1023 = vadd.f32 %v824, %v1022
        %v1024 = vpop.f32.mrb[0].mxu0
        %v1025 = vadd.f32 %v820, %v1024
        %v1026 = vpop.f32.mrb[0].mxu0
        %v1027 = vadd.f32 %v824, %v1026
        %1028 = vmatprep.mubr.bf16.mxu0 0
        %1029 = vmatmul.mubr.bf16.gmra.mrb[0].mxu0 %v921
        %v1030 = vpop.f32.mrb[0].mxu0
        %v1031 = vadd.f32 %v820, %v1030
        %v1032 = vpop.f32.mrb[0].mxu0
        %v1033 = vadd.f32 %v824, %v1032
        %v1034 = vpop.f32.mrb[0].mxu0
        %v1035 = vadd.f32 %v820, %v1034
        %v1036 = vpop.f32.mrb[0].mxu0
        %v1037 = vadd.f32 %v824, %v1036
        %1038 = vmatprep.mubr.bf16.mxu0 0
        %1039 = vmatmul.mubr.bf16.gmra.mrb[0].mxu0 %v924
        %v1040 = vpop.f32.mrb[0].mxu0
        %v1041 = vadd.f32 %v820, %v1040
        %v1042 = vpop.f32.mrb[0].mxu0
        %v1043 = vadd.f32 %v824, %v1042
        %v1044 = vpop.f32.mrb[0].mxu0
        %v1045 = vadd.f32 %v820, %v1044
        %v1046 = vpop.f32.mrb[0].mxu0
        %v1047 = vadd.f32 %v824, %v1046
        %1048 = vmatprep.mubr.bf16.mxu0 0
        %1049 = vmatmul.mubr.bf16.gmra.mrb[0].mxu0 %v927
        %v1050 = vpop.f32.mrb[0].mxu0
        %v1051 = vadd.f32 %v820, %v1050
        %v1052 = vpop.f32.mrb[0].mxu0
        %v1053 = vadd.f32 %v824, %v1052
        %v1054 = vpop.f32.mrb[0].mxu0
        %v1055 = vadd.f32 %v820, %v1054
        %v1056 = vpop.f32.mrb[0].mxu0
        %v1057 = vadd.f32 %v824, %v1056
        %1058 = vmatprep.mubr.bf16.mxu0 0
        %1059 = vmatmul.mubr.bf16.gmra.mrb[0].mxu0 %v930
        %v1060 = vpop.f32.mrb[0].mxu0
        %v1061 = vadd.f32 %v820, %v1060
        %v1062 = vpop.f32.mrb[0].mxu0
        %v1063 = vadd.f32 %v824, %v1062
        %v1064 = vpop.f32.mrb[0].mxu0
        %v1065 = vadd.f32 %v820, %v1064
        %v1066 = vpop.f32.mrb[0].mxu0
        %v1067 = vadd.f32 %v824, %v1066
        %1068 = vmatprep.mubr.bf16.mxu0 0
        %1069 = vmatmul.mubr.bf16.gmra.mrb[0].mxu0 %v933
        %v1070 = vpop.f32.mrb[0].mxu0
        %v1071 = vadd.f32 %v820, %v1070
        %v1072 = vpop.f32.mrb[0].mxu0
        %v1073 = vadd.f32 %v824, %v1072
        %v1074 = vpop.f32.mrb[0].mxu0
        %v1075 = vadd.f32 %v820, %v1074
        %v1076 = vpop.f32.mrb[0].mxu0
        %v1077 = vadd.f32 %v824, %v1076
        %1078 = vmatprep.mubr.bf16.mxu0 0
        %1079 = vmatmul.mubr.bf16.gmra.mrb[0].mxu0 %v936
        %v1080 = vpop.f32.mrb[0].mxu0
        %v1081 = vadd.f32 %v820, %v1080
        %v1082 = vpop.f32.mrb[0].mxu0
        %v1083 = vadd.f32 %v824, %v1082
        %v1084 = vpop.f32.mrb[0].mxu0
        %v1085 = vadd.f32 %v820, %v1084
        %v1086 = vpop.f32.mrb[0].mxu0
        %v1087 = vadd.f32 %v824, %v1086
        %1088 = vmatprep.mubr.bf16.mxu0 0
        %1089 = vmatmul.mubr.bf16.gmra.mrb[0].mxu0 %v939
        %v1090 = vpop.f32.mrb[0].mxu0
        %v1091 = vadd.f32 %v820, %v1090
        %v1092 = vpop.f32.mrb[0].mxu0
        %v1093 = vadd.f32 %v824, %v1092
        %v1094 = vpop.f32.mrb[0].mxu0
        %v1095 = vadd.f32 %v820, %v1094
        %v1096 = vpop.f32.mrb[0].mxu0
        %v1097 = vadd.f32 %v824, %v1096
        %1098 = vmatprep.mubr.bf16.mxu0 0
        %1099 = vmatmul.mubr.bf16.gmra.mrb[0].mxu0 %v942
        %v1100 = vpop.f32.mrb[0].mxu0
        %v1101 = vadd.f32 %v820, %v1100
        %v1102 = vpop.f32.mrb[0].mxu0
        %v1103 = vadd.f32 %v824, %v1102
        %v1104 = vpop.f32.mrb[0].mxu0
        %v1105 = vadd.f32 %v820, %v1104
        %v1106 = vpop.f32.mrb[0].mxu0
        %v1107 = vadd.f32 %v824, %v1106
        %1108 = vmatprep.mubr.bf16.mxu0 0
        %1109 = vmatmul.mubr.bf16.gmra.mrb[0].mxu0 %v945
        %v1110 = vpop.f32.mrb[0].mxu0
        %v1111 = vadd.f32 %v820, %v1110
        %v1112 = vpop.f32.mrb[0].mxu0
        %v1113 = vadd.f32 %v824, %v1112
        %v1114 = vpop.f32.mrb[0].mxu0
        %v1115 = vadd.f32 %v820, %v1114
        %v1116 = vpop.f32.mrb[0].mxu0
        %v1117 = vadd.f32 %v824, %v1116
        %1118 = vmatprep.mubr.bf16.mxu0 0
        %1119 = vmatmul.mubr.bf16.gmra.mrb[0].mxu0 %v948
        %v1120 = vpop.f32.mrb[0].mxu0
        %v1121 = vadd.f32 %v820, %v1120
        %v1122 = vpop.f32.mrb[0].mxu0
        %v1123 = vadd.f32 %v824, %v1122
        %v1124 = vpop.f32.mrb[0].mxu0
        %v1125 = vadd.f32 %v820, %v1124
        %v1126 = vpop.f32.mrb[0].mxu0
        %v1127 = vadd.f32 %v824, %v1126
        %1128 = vmatprep.mubr.bf16.mxu0 0
        %1129 = vmatmul.mubr.bf16.gmra.mrb[0].mxu0 %v951
        %v1130 = vpop.f32.mrb[0].mxu0
        %v1131 = vadd.f32 %v820, %v1130
        %v1132 = vpop.f32.mrb[0].mxu0
        %v1133 = vadd.f32 %v824, %v1132
        %v1134 = vpop.f32.mrb[0].mxu0
        %v1135 = vadd.f32 %v820, %v1134
        %v1136 = vpop.f32.mrb[0].mxu0
        %v1137 = vadd.f32 %v824, %v1136
        %1138 = vmatprep.mubr.bf16.mxu0 0
        %1139 = vmatmul.mubr.bf16.gmra.mrb[0].mxu0 %v954
        %v1140 = vpop.f32.mrb[0].mxu0
        %v1141 = vadd.f32 %v820, %v1140
        %v1142 = vpop.f32.mrb[0].mxu0
        %v1143 = vadd.f32 %v824, %v1142
        %v1144 = vpop.f32.mrb[0].mxu0
        %v1145 = vadd.f32 %v820, %v1144
        %v1146 = vpop.f32.mrb[0].mxu0
        %v1147 = vadd.f32 %v824, %v1146
        %1148 = vdwg.mxu0
        %v1149 = vpack.c.bf16 %v995, %v991
        %v1150 = vpack.c.bf16 %v997, %v993
        %v1151 = vpack.c.bf16 %v1005, %v1001
        %v1152 = vpack.c.bf16 %v1007, %v1003
        %v1153 = vpack.c.bf16 %v1015, %v1011
        %v1154 = vpack.c.bf16 %v1017, %v1013
        %v1155 = vpack.c.bf16 %v1025, %v1021
        %v1156 = vpack.c.bf16 %v1027, %v1023
        %v1157 = vpack.c.bf16 %v1035, %v1031
        %v1158 = vpack.c.bf16 %v1037, %v1033
        %v1159 = vpack.c.bf16 %v1045, %v1041
        %v1160 = vpack.c.bf16 %v1047, %v1043
        %v1161 = vpack.c.bf16 %v1055, %v1051
        %v1162 = vpack.c.bf16 %v1057, %v1053
        %v1163 = vpack.c.bf16 %v1065, %v1061
        %v1164 = vpack.c.bf16 %v1067, %v1063
        %v1165 = vpack.c.bf16 %v1075, %v1071
        %v1166 = vpack.c.bf16 %v1077, %v1073
        %v1167 = vpack.c.bf16 %v1085, %v1081
        %v1168 = vpack.c.bf16 %v1087, %v1083
        %v1169 = vpack.c.bf16 %v1095, %v1091
        %v1170 = vpack.c.bf16 %v1097, %v1093
        %v1171 = vpack.c.bf16 %v1105, %v1101
        %v1172 = vpack.c.bf16 %v1107, %v1103
        %v1173 = vpack.c.bf16 %v1115, %v1111
        %v1174 = vpack.c.bf16 %v1117, %v1113
        %v1175 = vpack.c.bf16 %v1125, %v1121
        %v1176 = vpack.c.bf16 %v1127, %v1123
        %v1177 = vpack.c.bf16 %v1135, %v1131
        %v1178 = vpack.c.bf16 %v1137, %v1133
        %v1179 = vpack.c.bf16 %v1145, %v1141
        %v1180 = vpack.c.bf16 %v1147, %v1143
        %v1181 = vld [vmem:[%s8] sm:$0xf]
        %v1182 = vld [vmem:[%s8 + $0x4] sm:$0xf]
        %v1183 = vld [vmem:[%s8 + $0x8] sm:$0xf]
        %v1184 = vld [vmem:[%s8 + $0xc] sm:$0xf]
        %v1185 = vld [vmem:[%s8 + $0x10] sm:$0xf]
        %v1186 = vld [vmem:[%s8 + $0x14] sm:$0xf]
        %v1187 = vld [vmem:[%s8 + $0x18] sm:$0xf]
        %v1188 = vld [vmem:[%s8 + $0x1c] sm:$0xf]
        %v1189 = vld [vmem:[%s8 + $0x20] sm:$0xf]
        %v1190 = vld [vmem:[%s8 + $0x24] sm:$0xf]
        %v1191 = vld [vmem:[%s8 + $0x28] sm:$0xf]
        %v1192 = vld [vmem:[%s8 + $0x2c] sm:$0xf]
        %v1193 = vld [vmem:[%s8 + $0x30] sm:$0xf]
        %v1194 = vld [vmem:[%s8 + $0x34] sm:$0xf]
        %v1195 = vld [vmem:[%s8 + $0x38] sm:$0xf]
        %v1196 = vld [vmem:[%s8 + $0x3c] sm:$0xf]
        %v1197 = vld [vmem:[%s8 + $0x40] sm:$0xf]
        %v1198 = vld [vmem:[%s8 + $0x44] sm:$0xf]
        %v1199 = vld [vmem:[%s8 + $0x48] sm:$0xf]
        %v1200 = vld [vmem:[%s8 + $0x4c] sm:$0xf]
        %v1201 = vld [vmem:[%s8 + $0x50] sm:$0xf]
        %v1202 = vld [vmem:[%s8 + $0x54] sm:$0xf]
        %v1203 = vld [vmem:[%s8 + $0x58] sm:$0xf]
        %v1204 = vld [vmem:[%s8 + $0x5c] sm:$0xf]
        %v1205 = vld [vmem:[%s8 + $0x60] sm:$0xf]
        %v1206 = vld [vmem:[%s8 + $0x64] sm:$0xf]
        %v1207 = vld [vmem:[%s8 + $0x68] sm:$0xf]
        %v1208 = vld [vmem:[%s8 + $0x6c] sm:$0xf]
        %v1209 = vld [vmem:[%s8 + $0x70] sm:$0xf]
        %v1210 = vld [vmem:[%s8 + $0x74] sm:$0xf]
        %v1211 = vld [vmem:[%s8 + $0x78] sm:$0xf]
        %v1212 = vld [vmem:[%s8 + $0x7c] sm:$0xf]
        %v1213 = vld [vmem:[%s460] sm:$0xff]
        %v1214 = vld [vmem:[%s460 + $0x8] sm:$0xff]
        %v1215 = vld [vmem:[%s4] sm:$0xff]
        %v1216 = vld [vmem:[%s4 + $0x8] sm:$0xff]
        %v1217 = vld [vmem:[%s4 + $0x10] sm:$0xff]
        %v1218 = vld [vmem:[%s4 + $0x18] sm:$0xff]
        %v1219 = vld [vmem:[%s4 + $0x20] sm:$0xff]
        %v1220 = vld [vmem:[%s4 + $0x28] sm:$0xff]
        %v1221 = vld [vmem:[%s4 + $0x30] sm:$0xff]
        %v1222 = vld [vmem:[%s4 + $0x38] sm:$0xff]
        %v1223 = vld [vmem:[%s4 + $0x40] sm:$0xff]
        %v1224 = vld [vmem:[%s4 + $0x48] sm:$0xff]
        %v1225 = vld [vmem:[%s4 + $0x50] sm:$0xff]
        %v1226 = vld [vmem:[%s4 + $0x58] sm:$0xff]
        %v1227 = vld [vmem:[%s4 + $0x60] sm:$0xff]
        %v1228 = vld [vmem:[%s4 + $0x68] sm:$0xff]
        %v1229 = vld [vmem:[%s4 + $0x70] sm:$0xff]
        %v1230 = vld [vmem:[%s4 + $0x78] sm:$0xff]
        %v1231 = vld [vmem:[%s4 + $0x80] sm:$0xff]
        %v1232 = vld [vmem:[%s4 + $0x88] sm:$0xff]
        %v1233 = vld [vmem:[%s4 + $0x90] sm:$0xff]
        %v1234 = vld [vmem:[%s4 + $0x98] sm:$0xff]
        %v1235 = vld [vmem:[%s4 + $0xa0] sm:$0xff]
        %v1236 = vld [vmem:[%s4 + $0xa8] sm:$0xff]
        %v1237 = vld [vmem:[%s4 + $0xb0] sm:$0xff]
        %v1238 = vld [vmem:[%s4 + $0xb8] sm:$0xff]
        %v1239 = vld [vmem:[%s4 + $0xc0] sm:$0xff]
        %v1240 = vld [vmem:[%s4 + $0xc8] sm:$0xff]
        %v1241 = vld [vmem:[%s4 + $0xd0] sm:$0xff]
        %v1242 = vld [vmem:[%s4 + $0xd8] sm:$0xff]
        %v1243 = vld [vmem:[%s4 + $0xe0] sm:$0xff]
        %v1244 = vld [vmem:[%s4 + $0xe8] sm:$0xff]
        %v1245 = vld [vmem:[%s4 + $0xf0] sm:$0xff]
        %v1246 = vld [vmem:[%s4 + $0xf8] sm:$0xff]
        %v1249 = vunpack.c.l.b16 %v1213
        %v1250 = vunpack.c.h.b16 %v1213
        %v1251 = vunpack.c.l.b16 %v1214
        %v1252 = vunpack.c.h.b16 %v1214
        %v1253 = vpack.c.b16 %v1251, %v1249
        %v1254 = vpack.c.b16 %v1252, %v1250
        %v1289 = vunpack.c.l.b16 %v1215
        %v1290 = vunpack.c.h.b16 %v1215
        %v1291 = vunpack.c.l.b16 %v1216
        %v1292 = vunpack.c.h.b16 %v1216
        %v1293 = vunpack.c.l.b16 %v1217
        %v1294 = vunpack.c.h.b16 %v1217
        %v1295 = vunpack.c.l.b16 %v1218
        %v1296 = vunpack.c.h.b16 %v1218
        %v1297 = vunpack.c.l.b16 %v1219
        %v1298 = vunpack.c.h.b16 %v1219
        %v1299 = vunpack.c.l.b16 %v1220
        %v1300 = vunpack.c.h.b16 %v1220
        %v1301 = vunpack.c.l.b16 %v1221
        %v1302 = vunpack.c.h.b16 %v1221
        %v1303 = vunpack.c.l.b16 %v1222
        %v1304 = vunpack.c.h.b16 %v1222
        %v1305 = vunpack.c.l.b16 %v1223
        %v1306 = vunpack.c.h.b16 %v1223
        %v1307 = vunpack.c.l.b16 %v1224
        %v1308 = vunpack.c.h.b16 %v1224
        %v1309 = vunpack.c.l.b16 %v1225
        %v1310 = vunpack.c.h.b16 %v1225
        %v1311 = vunpack.c.l.b16 %v1226
        %v1312 = vunpack.c.h.b16 %v1226
        %v1313 = vunpack.c.l.b16 %v1227
        %v1314 = vunpack.c.h.b16 %v1227
        %v1315 = vunpack.c.l.b16 %v1228
        %v1316 = vunpack.c.h.b16 %v1228
        %v1317 = vunpack.c.l.b16 %v1229
        %v1318 = vunpack.c.h.b16 %v1229
        %v1319 = vunpack.c.l.b16 %v1230
        %v1320 = vunpack.c.h.b16 %v1230
        %v1321 = vunpack.c.l.b16 %v1231
        %v1322 = vunpack.c.h.b16 %v1231
        %v1323 = vunpack.c.l.b16 %v1232
        %v1324 = vunpack.c.h.b16 %v1232
        %v1325 = vunpack.c.l.b16 %v1233
        %v1326 = vunpack.c.h.b16 %v1233
        %v1327 = vunpack.c.l.b16 %v1234
        %v1328 = vunpack.c.h.b16 %v1234
        %v1329 = vunpack.c.l.b16 %v1235
        %v1330 = vunpack.c.h.b16 %v1235
        %v1331 = vunpack.c.l.b16 %v1236
        %v1332 = vunpack.c.h.b16 %v1236
        %v1333 = vunpack.c.l.b16 %v1237
        %v1334 = vunpack.c.h.b16 %v1237
        %v1335 = vunpack.c.l.b16 %v1238
        %v1336 = vunpack.c.h.b16 %v1238
        %v1337 = vunpack.c.l.b16 %v1239
        %v1338 = vunpack.c.h.b16 %v1239
        %v1339 = vunpack.c.l.b16 %v1240
        %v1340 = vunpack.c.h.b16 %v1240
        %v1341 = vunpack.c.l.b16 %v1241
        %v1342 = vunpack.c.h.b16 %v1241
        %v1343 = vunpack.c.l.b16 %v1242
        %v1344 = vunpack.c.h.b16 %v1242
        %v1345 = vunpack.c.l.b16 %v1243
        %v1346 = vunpack.c.h.b16 %v1243
        %v1347 = vunpack.c.l.b16 %v1244
        %v1348 = vunpack.c.h.b16 %v1244
        %v1349 = vunpack.c.l.b16 %v1245
        %v1350 = vunpack.c.h.b16 %v1245
        %v1351 = vunpack.c.l.b16 %v1246
        %v1352 = vunpack.c.h.b16 %v1246
        %v1353 = vpack.c.b16 %v1291, %v1289
        %v1354 = vpack.c.b16 %v1292, %v1290
        %v1355 = vpack.c.b16 %v1295, %v1293
        %v1356 = vpack.c.b16 %v1296, %v1294
        %v1357 = vpack.c.b16 %v1299, %v1297
        %v1358 = vpack.c.b16 %v1300, %v1298
        %v1359 = vpack.c.b16 %v1303, %v1301
        %v1360 = vpack.c.b16 %v1304, %v1302
        %v1361 = vpack.c.b16 %v1307, %v1305
        %v1362 = vpack.c.b16 %v1308, %v1306
        %v1363 = vpack.c.b16 %v1311, %v1309
        %v1364 = vpack.c.b16 %v1312, %v1310
        %v1365 = vpack.c.b16 %v1315, %v1313
        %v1366 = vpack.c.b16 %v1316, %v1314
        %v1367 = vpack.c.b16 %v1319, %v1317
        %v1368 = vpack.c.b16 %v1320, %v1318
        %v1369 = vpack.c.b16 %v1323, %v1321
        %v1370 = vpack.c.b16 %v1324, %v1322
        %v1371 = vpack.c.b16 %v1327, %v1325
        %v1372 = vpack.c.b16 %v1328, %v1326
        %v1373 = vpack.c.b16 %v1331, %v1329
        %v1374 = vpack.c.b16 %v1332, %v1330
        %v1375 = vpack.c.b16 %v1335, %v1333
        %v1376 = vpack.c.b16 %v1336, %v1334
        %v1377 = vpack.c.b16 %v1339, %v1337
        %v1378 = vpack.c.b16 %v1340, %v1338
        %v1379 = vpack.c.b16 %v1343, %v1341
        %v1380 = vpack.c.b16 %v1344, %v1342
        %v1381 = vpack.c.b16 %v1347, %v1345
        %v1382 = vpack.c.b16 %v1348, %v1346
        %v1383 = vpack.c.b16 %v1351, %v1349
        %v1384 = vpack.c.b16 %v1352, %v1350
        %1417 = vmatprep.subr.bf16.mxu0 %v1354
        %1418 = vmatpush1.bf16.msra.mxu0 %v1353
        %1419 = vmatprep.subr.bf16.mxu0 %v1356
        %1420 = vmatpush1.bf16.msra.mxu0 %v1355
        %1421 = vmatprep.subr.bf16.mxu0 %v1358
        %1422 = vmatpush1.bf16.msra.mxu0 %v1357
        %1423 = vmatprep.subr.bf16.mxu0 %v1360
        %1424 = vmatpush1.bf16.msra.mxu0 %v1359
        %1425 = vmatprep.subr.bf16.mxu0 %v1362
        %1426 = vmatpush1.bf16.msra.mxu0 %v1361
        %1427 = vmatprep.subr.bf16.mxu0 %v1364
        %1428 = vmatpush1.bf16.msra.mxu0 %v1363
        %1429 = vmatprep.subr.bf16.mxu0 %v1366
        %1430 = vmatpush1.bf16.msra.mxu0 %v1365
        %1431 = vmatprep.subr.bf16.mxu0 %v1368
        %1432 = vmatpush1.bf16.msra.mxu0 %v1367
        %1433 = vmatprep.subr.bf16.mxu0 %v1370
        %1434 = vmatpush1.bf16.msra.mxu0 %v1369
        %1435 = vmatprep.subr.bf16.mxu0 %v1372
        %1436 = vmatpush1.bf16.msra.mxu0 %v1371
        %1437 = vmatprep.subr.bf16.mxu0 %v1374
        %1438 = vmatpush1.bf16.msra.mxu0 %v1373
        %1439 = vmatprep.subr.bf16.mxu0 %v1376
        %1440 = vmatpush1.bf16.msra.mxu0 %v1375
        %1441 = vmatprep.subr.bf16.mxu0 %v1378
        %1442 = vmatpush1.bf16.msra.mxu0 %v1377
        %1443 = vmatprep.subr.bf16.mxu0 %v1380
        %1444 = vmatpush1.bf16.msra.mxu0 %v1379
        %1445 = vmatprep.subr.bf16.mxu0 %v1382
        %1446 = vmatpush1.bf16.msra.mxu0 %v1381
        %1447 = vmatprep.subr.bf16.mxu0 %v1384
        %1448 = vmatpush1.bf16.msra.mxu0 %v1383
        %1449 = vmatprep.mubr.bf16.mxu0 %v1254
        %1450 = vmatmul.mubr.bf16.gmra.mrb[0].mxu0 %v1253
        %v1451 = vpop.f32.mrb[0].mxu0
        %v1452 = vadd.f32 0.0, %v1451
        %v1453 = vpop.f32.mrb[0].mxu0
        %v1454 = vadd.f32 0.0, %v1453
        %v1455 = vpop.f32.mrb[0].mxu0
        %v1456 = vadd.f32 0.0, %v1455
        %v1457 = vpop.f32.mrb[0].mxu0
        %v1458 = vadd.f32 0.0, %v1457
        %1459 = vdwg.mxu0
        %v1460 = vld [vmem:[%s7] sm:$0xf]
        %v1461 = vld [vmem:[%s7 + $0x4] sm:$0xf]
        %v1462 = vld [vmem:[%s7 + $0x8] sm:$0xf]
        %v1463 = vld [vmem:[%s7 + $0xc] sm:$0xf]
        %v1464 = vld [vmem:[%s7 + $0x10] sm:$0xf]
        %v1465 = vld [vmem:[%s7 + $0x14] sm:$0xf]
        %v1466 = vld [vmem:[%s7 + $0x18] sm:$0xf]
        %v1467 = vld [vmem:[%s7 + $0x1c] sm:$0xf]
        %v1468 = vld [vmem:[%s7 + $0x20] sm:$0xf]
        %v1469 = vld [vmem:[%s7 + $0x24] sm:$0xf]
        %v1470 = vld [vmem:[%s7 + $0x28] sm:$0xf]
        %v1471 = vld [vmem:[%s7 + $0x2c] sm:$0xf]
        %v1472 = vld [vmem:[%s7 + $0x30] sm:$0xf]
        %v1473 = vld [vmem:[%s7 + $0x34] sm:$0xf]
        %v1474 = vld [vmem:[%s7 + $0x38] sm:$0xf]
        %v1475 = vld [vmem:[%s7 + $0x3c] sm:$0xf]
        %v1476 = vld [vmem:[%s7 + $0x40] sm:$0xf]
        %v1477 = vld [vmem:[%s7 + $0x44] sm:$0xf]
        %v1478 = vld [vmem:[%s7 + $0x48] sm:$0xf]
        %v1479 = vld [vmem:[%s7 + $0x4c] sm:$0xf]
        %v1480 = vld [vmem:[%s7 + $0x50] sm:$0xf]
        %v1481 = vld [vmem:[%s7 + $0x54] sm:$0xf]
        %v1482 = vld [vmem:[%s7 + $0x58] sm:$0xf]
        %v1483 = vld [vmem:[%s7 + $0x5c] sm:$0xf]
        %v1484 = vld [vmem:[%s7 + $0x60] sm:$0xf]
        %v1485 = vld [vmem:[%s7 + $0x64] sm:$0xf]
        %v1486 = vld [vmem:[%s7 + $0x68] sm:$0xf]
        %v1487 = vld [vmem:[%s7 + $0x6c] sm:$0xf]
        %v1488 = vld [vmem:[%s7 + $0x70] sm:$0xf]
        %v1489 = vld [vmem:[%s7 + $0x74] sm:$0xf]
        %v1490 = vld [vmem:[%s7 + $0x78] sm:$0xf]
        %v1491 = vld [vmem:[%s7 + $0x7c] sm:$0xf]
        %v1492 = vpack.c.bf16 %v1456, %v1452
        %v1493 = vpack.c.bf16 %v1458, %v1454
        %v1494 = vld [vmem:[%s5] sm:$0x3]
        %v1496 = vlaneseq
        %v1497 = vshrl.u32 %v1496, 7
        %v1498 = vsub.s32 0, %v1497
        %v1499 = vrot.slane %v1494, %v1498
        %v1500 = vlaneseq
        %v1501 = vshrl.u32 %v1500, 7
        %v1502 = vsub.s32 1, %v1501
        %v1503 = vrot.slane %v1494, %v1502
        %v1538 = vunpack.c.l.b16 %v1460
        %v1539 = vunpack.c.l.b16 %v1461
        %v1540 = vunpack.c.l.b16 %v1462
        %v1541 = vunpack.c.l.b16 %v1463
        %v1542 = vunpack.c.l.b16 %v1464
        %v1543 = vunpack.c.l.b16 %v1465
        %v1544 = vunpack.c.l.b16 %v1466
        %v1545 = vunpack.c.l.b16 %v1467
        %v1546 = vunpack.c.l.b16 %v1468
        %v1547 = vunpack.c.l.b16 %v1469
        %v1548 = vunpack.c.l.b16 %v1470
        %v1549 = vunpack.c.l.b16 %v1471
        %v1550 = vunpack.c.l.b16 %v1472
        %v1551 = vunpack.c.l.b16 %v1473
        %v1552 = vunpack.c.l.b16 %v1474
        %v1553 = vunpack.c.l.b16 %v1475
        %v1554 = vunpack.c.l.b16 %v1476
        %v1555 = vunpack.c.l.b16 %v1477
        %v1556 = vunpack.c.l.b16 %v1478
        %v1557 = vunpack.c.l.b16 %v1479
        %v1558 = vunpack.c.l.b16 %v1480
        %v1559 = vunpack.c.l.b16 %v1481
        %v1560 = vunpack.c.l.b16 %v1482
        %v1561 = vunpack.c.l.b16 %v1483
        %v1562 = vunpack.c.l.b16 %v1484
        %v1563 = vunpack.c.l.b16 %v1485
        %v1564 = vunpack.c.l.b16 %v1486
        %v1565 = vunpack.c.l.b16 %v1487
        %v1566 = vunpack.c.l.b16 %v1488
        %v1567 = vunpack.c.l.b16 %v1489
        %v1568 = vunpack.c.l.b16 %v1490
        %v1569 = vunpack.c.l.b16 %v1491
        %v1570 = vpack.c.b16 %v1539, %v1538
        %v1571 = vpack.c.b16 %v1541, %v1540
        %v1572 = vpack.c.b16 %v1543, %v1542
        %v1573 = vpack.c.b16 %v1545, %v1544
        %v1574 = vpack.c.b16 %v1547, %v1546
        %v1575 = vpack.c.b16 %v1549, %v1548
        %v1576 = vpack.c.b16 %v1551, %v1550
        %v1577 = vpack.c.b16 %v1553, %v1552
        %v1578 = vpack.c.b16 %v1555, %v1554
        %v1579 = vpack.c.b16 %v1557, %v1556
        %v1580 = vpack.c.b16 %v1559, %v1558
        %v1581 = vpack.c.b16 %v1561, %v1560
        %v1582 = vpack.c.b16 %v1563, %v1562
        %v1583 = vpack.c.b16 %v1565, %v1564
        %v1584 = vpack.c.b16 %v1567, %v1566
        %v1585 = vpack.c.b16 %v1569, %v1568
        %vm1586 = vcmask 130048
        %v1588 = vsel %vm1586, %v1570, 0
        %v1591 = vsel %vm1586, %v1571, 0
        %v1594 = vsel %vm1586, %v1572, 0
        %v1597 = vsel %vm1586, %v1573, 0
        %v1600 = vsel %vm1586, %v1574, 0
        %v1603 = vsel %vm1586, %v1575, 0
        %v1606 = vsel %vm1586, %v1576, 0
        %v1609 = vsel %vm1586, %v1577, 0
        %v1612 = vsel %vm1586, %v1578, 0
        %v1615 = vsel %vm1586, %v1579, 0
        %v1618 = vsel %vm1586, %v1580, 0
        %v1621 = vsel %vm1586, %v1581, 0
        %v1624 = vsel %vm1586, %v1582, 0
        %v1627 = vsel %vm1586, %v1583, 0
        %v1630 = vsel %vm1586, %v1584, 0
        %v1633 = vsel %vm1586, %v1585, 0
        %1635 = vmatprep.subr.bf16.mxu0 %v1493
        %1636 = vmatpush1.bf16.msra.mxu0 %v1492
        %1637 = vmatprep.subr.bf16.mxu0 0
        %1638 = vmatpush1.bf16.msra.mxu0 0
        %1639 = vmatprep.subr.bf16.mxu0 0
        %1640 = vmatpush1.bf16.msra.mxu0 0
        %1641 = vmatprep.subr.bf16.mxu0 0
        %1642 = vmatpush1.bf16.msra.mxu0 0
        %1643 = vmatprep.subr.bf16.mxu0 0
        %1644 = vmatpush1.bf16.msra.mxu0 0
        %1645 = vmatprep.subr.bf16.mxu0 0
        %1646 = vmatpush1.bf16.msra.mxu0 0
        %1647 = vmatprep.subr.bf16.mxu0 0
        %1648 = vmatpush1.bf16.msra.mxu0 0
        %1649 = vmatprep.subr.bf16.mxu0 0
        %1650 = vmatpush1.bf16.msra.mxu0 0
        %1651 = vmatprep.subr.bf16.mxu0 0
        %1652 = vmatpush1.bf16.msra.mxu0 0
        %1653 = vmatprep.subr.bf16.mxu0 0
        %1654 = vmatpush1.bf16.msra.mxu0 0
        %1655 = vmatprep.subr.bf16.mxu0 0
        %1656 = vmatpush1.bf16.msra.mxu0 0
        %1657 = vmatprep.subr.bf16.mxu0 0
        %1658 = vmatpush1.bf16.msra.mxu0 0
        %1659 = vmatprep.subr.bf16.mxu0 0
        %1660 = vmatpush1.bf16.msra.mxu0 0
        %1661 = vmatprep.subr.bf16.mxu0 0
        %1662 = vmatpush1.bf16.msra.mxu0 0
        %1663 = vmatprep.subr.bf16.mxu0 0
        %1664 = vmatpush1.bf16.msra.mxu0 0
        %1665 = vmatprep.subr.bf16.mxu0 0
        %1666 = vmatpush1.bf16.msra.mxu0 0
        %1667 = vmatprep.mubr.bf16.mxu0 0
        %1668 = vmatmul.mubr.bf16.gmra.mrb[0].mxu0 %v1588
        %v1669 = vpop.f32.mrb[0].mxu0
        %v1670 = vadd.f32 %v1499, %v1669
        %v1671 = vpop.f32.mrb[0].mxu0
        %v1672 = vadd.f32 %v1503, %v1671
        %v1673 = vpop.f32.mrb[0].mxu0
        %v1674 = vadd.f32 %v1499, %v1673
        %v1675 = vpop.f32.mrb[0].mxu0
        %v1676 = vadd.f32 %v1503, %v1675
        %1677 = vmatprep.mubr.bf16.mxu0 0
        %1678 = vmatmul.mubr.bf16.gmra.mrb[0].mxu0 %v1591
        %v1679 = vpop.f32.mrb[0].mxu0
        %v1680 = vadd.f32 %v1499, %v1679
        %v1681 = vpop.f32.mrb[0].mxu0
        %v1682 = vadd.f32 %v1503, %v1681
        %v1683 = vpop.f32.mrb[0].mxu0
        %v1684 = vadd.f32 %v1499, %v1683
        %v1685 = vpop.f32.mrb[0].mxu0
        %v1686 = vadd.f32 %v1503, %v1685
        %1687 = vmatprep.mubr.bf16.mxu0 0
        %1688 = vmatmul.mubr.bf16.gmra.mrb[0].mxu0 %v1594
        %v1689 = vpop.f32.mrb[0].mxu0
        %v1690 = vadd.f32 %v1499, %v1689
        %v1691 = vpop.f32.mrb[0].mxu0
        %v1692 = vadd.f32 %v1503, %v1691
        %v1693 = vpop.f32.mrb[0].mxu0
        %v1694 = vadd.f32 %v1499, %v1693
        %v1695 = vpop.f32.mrb[0].mxu0
        %v1696 = vadd.f32 %v1503, %v1695
        %1697 = vmatprep.mubr.bf16.mxu0 0
        %1698 = vmatmul.mubr.bf16.gmra.mrb[0].mxu0 %v1597
        %v1699 = vpop.f32.mrb[0].mxu0
        %v1700 = vadd.f32 %v1499, %v1699
        %v1701 = vpop.f32.mrb[0].mxu0
        %v1702 = vadd.f32 %v1503, %v1701
        %v1703 = vpop.f32.mrb[0].mxu0
        %v1704 = vadd.f32 %v1499, %v1703
        %v1705 = vpop.f32.mrb[0].mxu0
        %v1706 = vadd.f32 %v1503, %v1705
        %1707 = vmatprep.mubr.bf16.mxu0 0
        %1708 = vmatmul.mubr.bf16.gmra.mrb[0].mxu0 %v1600
        %v1709 = vpop.f32.mrb[0].mxu0
        %v1710 = vadd.f32 %v1499, %v1709
        %v1711 = vpop.f32.mrb[0].mxu0
        %v1712 = vadd.f32 %v1503, %v1711
        %v1713 = vpop.f32.mrb[0].mxu0
        %v1714 = vadd.f32 %v1499, %v1713
        %v1715 = vpop.f32.mrb[0].mxu0
        %v1716 = vadd.f32 %v1503, %v1715
        %1717 = vmatprep.mubr.bf16.mxu0 0
        %1718 = vmatmul.mubr.bf16.gmra.mrb[0].mxu0 %v1603
        %v1719 = vpop.f32.mrb[0].mxu0
        %v1720 = vadd.f32 %v1499, %v1719
        %v1721 = vpop.f32.mrb[0].mxu0
        %v1722 = vadd.f32 %v1503, %v1721
        %v1723 = vpop.f32.mrb[0].mxu0
        %v1724 = vadd.f32 %v1499, %v1723
        %v1725 = vpop.f32.mrb[0].mxu0
        %v1726 = vadd.f32 %v1503, %v1725
        %1727 = vmatprep.mubr.bf16.mxu0 0
        %1728 = vmatmul.mubr.bf16.gmra.mrb[0].mxu0 %v1606
        %v1729 = vpop.f32.mrb[0].mxu0
        %v1730 = vadd.f32 %v1499, %v1729
        %v1731 = vpop.f32.mrb[0].mxu0
        %v1732 = vadd.f32 %v1503, %v1731
        %v1733 = vpop.f32.mrb[0].mxu0
        %v1734 = vadd.f32 %v1499, %v1733
        %v1735 = vpop.f32.mrb[0].mxu0
        %v1736 = vadd.f32 %v1503, %v1735
        %1737 = vmatprep.mubr.bf16.mxu0 0
        %1738 = vmatmul.mubr.bf16.gmra.mrb[0].mxu0 %v1609
        %v1739 = vpop.f32.mrb[0].mxu0
        %v1740 = vadd.f32 %v1499, %v1739
        %v1741 = vpop.f32.mrb[0].mxu0
        %v1742 = vadd.f32 %v1503, %v1741
        %v1743 = vpop.f32.mrb[0].mxu0
        %v1744 = vadd.f32 %v1499, %v1743
        %v1745 = vpop.f32.mrb[0].mxu0
        %v1746 = vadd.f32 %v1503, %v1745
        %1747 = vmatprep.mubr.bf16.mxu0 0
        %1748 = vmatmul.mubr.bf16.gmra.mrb[0].mxu0 %v1612
        %v1749 = vpop.f32.mrb[0].mxu0
        %v1750 = vadd.f32 %v1499, %v1749
        %v1751 = vpop.f32.mrb[0].mxu0
        %v1752 = vadd.f32 %v1503, %v1751
        %v1753 = vpop.f32.mrb[0].mxu0
        %v1754 = vadd.f32 %v1499, %v1753
        %v1755 = vpop.f32.mrb[0].mxu0
        %v1756 = vadd.f32 %v1503, %v1755
        %1757 = vmatprep.mubr.bf16.mxu0 0
        %1758 = vmatmul.mubr.bf16.gmra.mrb[0].mxu0 %v1615
        %v1759 = vpop.f32.mrb[0].mxu0
        %v1760 = vadd.f32 %v1499, %v1759
        %v1761 = vpop.f32.mrb[0].mxu0
        %v1762 = vadd.f32 %v1503, %v1761
        %v1763 = vpop.f32.mrb[0].mxu0
        %v1764 = vadd.f32 %v1499, %v1763
        %v1765 = vpop.f32.mrb[0].mxu0
        %v1766 = vadd.f32 %v1503, %v1765
        %1767 = vmatprep.mubr.bf16.mxu0 0
        %1768 = vmatmul.mubr.bf16.gmra.mrb[0].mxu0 %v1618
        %v1769 = vpop.f32.mrb[0].mxu0
        %v1770 = vadd.f32 %v1499, %v1769
        %v1771 = vpop.f32.mrb[0].mxu0
        %v1772 = vadd.f32 %v1503, %v1771
        %v1773 = vpop.f32.mrb[0].mxu0
        %v1774 = vadd.f32 %v1499, %v1773
        %v1775 = vpop.f32.mrb[0].mxu0
        %v1776 = vadd.f32 %v1503, %v1775
        %1777 = vmatprep.mubr.bf16.mxu0 0
        %1778 = vmatmul.mubr.bf16.gmra.mrb[0].mxu0 %v1621
        %v1779 = vpop.f32.mrb[0].mxu0
        %v1780 = vadd.f32 %v1499, %v1779
        %v1781 = vpop.f32.mrb[0].mxu0
        %v1782 = vadd.f32 %v1503, %v1781
        %v1783 = vpop.f32.mrb[0].mxu0
        %v1784 = vadd.f32 %v1499, %v1783
        %v1785 = vpop.f32.mrb[0].mxu0
        %v1786 = vadd.f32 %v1503, %v1785
        %1787 = vmatprep.mubr.bf16.mxu0 0
        %1788 = vmatmul.mubr.bf16.gmra.mrb[0].mxu0 %v1624
        %v1789 = vpop.f32.mrb[0].mxu0
        %v1790 = vadd.f32 %v1499, %v1789
        %v1791 = vpop.f32.mrb[0].mxu0
        %v1792 = vadd.f32 %v1503, %v1791
        %v1793 = vpop.f32.mrb[0].mxu0
        %v1794 = vadd.f32 %v1499, %v1793
        %v1795 = vpop.f32.mrb[0].mxu0
        %v1796 = vadd.f32 %v1503, %v1795
        %1797 = vmatprep.mubr.bf16.mxu0 0
        %1798 = vmatmul.mubr.bf16.gmra.mrb[0].mxu0 %v1627
        %v1799 = vpop.f32.mrb[0].mxu0
        %v1800 = vadd.f32 %v1499, %v1799
        %v1801 = vpop.f32.mrb[0].mxu0
        %v1802 = vadd.f32 %v1503, %v1801
        %v1803 = vpop.f32.mrb[0].mxu0
        %v1804 = vadd.f32 %v1499, %v1803
        %v1805 = vpop.f32.mrb[0].mxu0
        %v1806 = vadd.f32 %v1503, %v1805
        %1807 = vmatprep.mubr.bf16.mxu0 0
        %1808 = vmatmul.mubr.bf16.gmra.mrb[0].mxu0 %v1630
        %v1809 = vpop.f32.mrb[0].mxu0
        %v1810 = vadd.f32 %v1499, %v1809
        %v1811 = vpop.f32.mrb[0].mxu0
        %v1812 = vadd.f32 %v1503, %v1811
        %v1813 = vpop.f32.mrb[0].mxu0
        %v1814 = vadd.f32 %v1499, %v1813
        %v1815 = vpop.f32.mrb[0].mxu0
        %v1816 = vadd.f32 %v1503, %v1815
        %1817 = vmatprep.mubr.bf16.mxu0 0
        %1818 = vmatmul.mubr.bf16.gmra.mrb[0].mxu0 %v1633
        %v1819 = vpop.f32.mrb[0].mxu0
        %v1820 = vadd.f32 %v1499, %v1819
        %v1821 = vpop.f32.mrb[0].mxu0
        %v1822 = vadd.f32 %v1503, %v1821
        %v1823 = vpop.f32.mrb[0].mxu0
        %v1824 = vadd.f32 %v1499, %v1823
        %v1825 = vpop.f32.mrb[0].mxu0
        %v1826 = vadd.f32 %v1503, %v1825
        %1827 = vdwg.mxu0
        %v1828 = vpack.c.bf16 %v1674, %v1670
        %v1829 = vpack.c.bf16 %v1676, %v1672
        %v1830 = vpack.c.bf16 %v1684, %v1680
        %v1831 = vpack.c.bf16 %v1686, %v1682
        %v1832 = vpack.c.bf16 %v1694, %v1690
        %v1833 = vpack.c.bf16 %v1696, %v1692
        %v1834 = vpack.c.bf16 %v1704, %v1700
        %v1835 = vpack.c.bf16 %v1706, %v1702
        %v1836 = vpack.c.bf16 %v1714, %v1710
        %v1837 = vpack.c.bf16 %v1716, %v1712
        %v1838 = vpack.c.bf16 %v1724, %v1720
        %v1839 = vpack.c.bf16 %v1726, %v1722
        %v1840 = vpack.c.bf16 %v1734, %v1730
        %v1841 = vpack.c.bf16 %v1736, %v1732
        %v1842 = vpack.c.bf16 %v1744, %v1740
        %v1843 = vpack.c.bf16 %v1746, %v1742
        %v1844 = vpack.c.bf16 %v1754, %v1750
        %v1845 = vpack.c.bf16 %v1756, %v1752
        %v1846 = vpack.c.bf16 %v1764, %v1760
        %v1847 = vpack.c.bf16 %v1766, %v1762
        %v1848 = vpack.c.bf16 %v1774, %v1770
        %v1849 = vpack.c.bf16 %v1776, %v1772
        %v1850 = vpack.c.bf16 %v1784, %v1780
        %v1851 = vpack.c.bf16 %v1786, %v1782
        %v1852 = vpack.c.bf16 %v1794, %v1790
        %v1853 = vpack.c.bf16 %v1796, %v1792
        %v1854 = vpack.c.bf16 %v1804, %v1800
        %v1855 = vpack.c.bf16 %v1806, %v1802
        %v1856 = vpack.c.bf16 %v1814, %v1810
        %v1857 = vpack.c.bf16 %v1816, %v1812
        %v1858 = vpack.c.bf16 %v1824, %v1820
        %v1859 = vpack.c.bf16 %v1826, %v1822
        %v1860 = vld [vmem:[%s8 + $0x80] sm:$0xf]
        %v1861 = vld [vmem:[%s8 + $0x84] sm:$0xf]
        %v1862 = vld [vmem:[%s8 + $0x88] sm:$0xf]
        %v1863 = vld [vmem:[%s8 + $0x8c] sm:$0xf]
        %v1864 = vld [vmem:[%s8 + $0x90] sm:$0xf]
        %v1865 = vld [vmem:[%s8 + $0x94] sm:$0xf]
        %v1866 = vld [vmem:[%s8 + $0x98] sm:$0xf]
        %v1867 = vld [vmem:[%s8 + $0x9c] sm:$0xf]
        %v1868 = vld [vmem:[%s8 + $0xa0] sm:$0xf]
        %v1869 = vld [vmem:[%s8 + $0xa4] sm:$0xf]
        %v1870 = vld [vmem:[%s8 + $0xa8] sm:$0xf]
        %v1871 = vld [vmem:[%s8 + $0xac] sm:$0xf]
        %v1872 = vld [vmem:[%s8 + $0xb0] sm:$0xf]
        %v1873 = vld [vmem:[%s8 + $0xb4] sm:$0xf]
        %v1874 = vld [vmem:[%s8 + $0xb8] sm:$0xf]
        %v1875 = vld [vmem:[%s8 + $0xbc] sm:$0xf]
        %v1876 = vld [vmem:[%s8 + $0xc0] sm:$0xf]
        %v1877 = vld [vmem:[%s8 + $0xc4] sm:$0xf]
        %v1878 = vld [vmem:[%s8 + $0xc8] sm:$0xf]
        %v1879 = vld [vmem:[%s8 + $0xcc] sm:$0xf]
        %v1880 = vld [vmem:[%s8 + $0xd0] sm:$0xf]
        %v1881 = vld [vmem:[%s8 + $0xd4] sm:$0xf]
        %v1882 = vld [vmem:[%s8 + $0xd8] sm:$0xf]
        %v1883 = vld [vmem:[%s8 + $0xdc] sm:$0xf]
        %v1884 = vld [vmem:[%s8 + $0xe0] sm:$0xf]
        %v1885 = vld [vmem:[%s8 + $0xe4] sm:$0xf]
        %v1886 = vld [vmem:[%s8 + $0xe8] sm:$0xf]
        %v1887 = vld [vmem:[%s8 + $0xec] sm:$0xf]
        %v1888 = vld [vmem:[%s8 + $0xf0] sm:$0xf]
        %v1889 = vld [vmem:[%s8 + $0xf4] sm:$0xf]
        %v1890 = vld [vmem:[%s8 + $0xf8] sm:$0xf]
        %v1891 = vld [vmem:[%s8 + $0xfc] sm:$0xf]
        %v1924 = vunpack.c.l.b16 %v1860
        %v1925 = vunpack.c.l.b16 %v1861
        %v1926 = vunpack.c.l.b16 %v1862
        %v1927 = vunpack.c.l.b16 %v1863
        %v1928 = vunpack.c.l.b16 %v1864
        %v1929 = vunpack.c.l.b16 %v1865
        %v1930 = vunpack.c.l.b16 %v1866
        %v1931 = vunpack.c.l.b16 %v1867
        %v1932 = vunpack.c.l.b16 %v1868
        %v1933 = vunpack.c.l.b16 %v1869
        %v1934 = vunpack.c.l.b16 %v1870
        %v1935 = vunpack.c.l.b16 %v1871
        %v1936 = vunpack.c.l.b16 %v1872
        %v1937 = vunpack.c.l.b16 %v1873
        %v1938 = vunpack.c.l.b16 %v1874
        %v1939 = vunpack.c.l.b16 %v1875
        %v1940 = vunpack.c.l.b16 %v1876
        %v1941 = vunpack.c.l.b16 %v1877
        %v1942 = vunpack.c.l.b16 %v1878
        %v1943 = vunpack.c.l.b16 %v1879
        %v1944 = vunpack.c.l.b16 %v1880
        %v1945 = vunpack.c.l.b16 %v1881
        %v1946 = vunpack.c.l.b16 %v1882
        %v1947 = vunpack.c.l.b16 %v1883
        %v1948 = vunpack.c.l.b16 %v1884
        %v1949 = vunpack.c.l.b16 %v1885
        %v1950 = vunpack.c.l.b16 %v1886
        %v1951 = vunpack.c.l.b16 %v1887
        %v1952 = vunpack.c.l.b16 %v1888
        %v1953 = vunpack.c.l.b16 %v1889
        %v1954 = vunpack.c.l.b16 %v1890
        %v1955 = vunpack.c.l.b16 %v1891
        %v1956 = vpack.c.b16 %v1925, %v1924
        %v1957 = vpack.c.b16 %v1927, %v1926
        %v1958 = vpack.c.b16 %v1929, %v1928
        %v1959 = vpack.c.b16 %v1931, %v1930
        %v1960 = vpack.c.b16 %v1933, %v1932
        %v1961 = vpack.c.b16 %v1935, %v1934
        %v1962 = vpack.c.b16 %v1937, %v1936
        %v1963 = vpack.c.b16 %v1939, %v1938
        %v1964 = vpack.c.b16 %v1941, %v1940
        %v1965 = vpack.c.b16 %v1943, %v1942
        %v1966 = vpack.c.b16 %v1945, %v1944
        %v1967 = vpack.c.b16 %v1947, %v1946
        %v1968 = vpack.c.b16 %v1949, %v1948
        %v1969 = vpack.c.b16 %v1951, %v1950
        %v1970 = vpack.c.b16 %v1953, %v1952
        %v1971 = vpack.c.b16 %v1955, %v1954
        %1988 = vmatprep.subr.bf16.mxu0 0
        %1989 = vmatpush1.bf16.msra.mxu0 %v1956
        %1990 = vmatprep.subr.bf16.mxu0 0
        %1991 = vmatpush1.bf16.msra.mxu0 %v1957
        %1992 = vmatprep.subr.bf16.mxu0 0
        %1993 = vmatpush1.bf16.msra.mxu0 %v1958
        %1994 = vmatprep.subr.bf16.mxu0 0
        %1995 = vmatpush1.bf16.msra.mxu0 %v1959
        %1996 = vmatprep.subr.bf16.mxu0 0
        %1997 = vmatpush1.bf16.msra.mxu0 %v1960
        %1998 = vmatprep.subr.bf16.mxu0 0
        %1999 = vmatpush1.bf16.msra.mxu0 %v1961
        %2000 = vmatprep.subr.bf16.mxu0 0
        %2001 = vmatpush1.bf16.msra.mxu0 %v1962
        %2002 = vmatprep.subr.bf16.mxu0 0
        %2003 = vmatpush1.bf16.msra.mxu0 %v1963
        %2004 = vmatprep.subr.bf16.mxu0 0
        %2005 = vmatpush1.bf16.msra.mxu0 %v1964
        %2006 = vmatprep.subr.bf16.mxu0 0
        %2007 = vmatpush1.bf16.msra.mxu0 %v1965
        %2008 = vmatprep.subr.bf16.mxu0 0
        %2009 = vmatpush1.bf16.msra.mxu0 %v1966
        %2010 = vmatprep.subr.bf16.mxu0 0
        %2011 = vmatpush1.bf16.msra.mxu0 %v1967
        %2012 = vmatprep.subr.bf16.mxu0 0
        %2013 = vmatpush1.bf16.msra.mxu0 %v1968
        %2014 = vmatprep.subr.bf16.mxu0 0
        %2015 = vmatpush1.bf16.msra.mxu0 %v1969
        %2016 = vmatprep.subr.bf16.mxu0 0
        %2017 = vmatpush1.bf16.msra.mxu0 %v1970
        %2018 = vmatprep.subr.bf16.mxu0 0
        %2019 = vmatpush1.bf16.msra.mxu0 %v1971
        %2020 = vmatprep.mubr.bf16.mxu0 %v1829
        %2021 = vmatmul.mubr.bf16.gmra.mrb[0].mxu0 %v1828
        %v2022 = vpop.f32.mrb[0].mxu0
        %v2023 = vadd.f32 0.0, %v2022
        %v2024 = vpop.f32.mrb[0].mxu0
        %v2025 = vpop.f32.mrb[0].mxu0
        %v2026 = vadd.f32 0.0, %v2025
        %v2027 = vpop.f32.mrb[0].mxu0
        %2028 = vmatprep.mubr.bf16.mxu0 %v1831
        %2029 = vmatmul.mubr.bf16.gmra.mrb[0].mxu0 %v1830
        %v2030 = vpop.f32.mrb[0].mxu0
        %v2031 = vadd.f32 0.0, %v2030
        %v2032 = vpop.f32.mrb[0].mxu0
        %v2033 = vpop.f32.mrb[0].mxu0
        %v2034 = vadd.f32 0.0, %v2033
        %v2035 = vpop.f32.mrb[0].mxu0
        %2036 = vmatprep.mubr.bf16.mxu0 %v1833
        %2037 = vmatmul.mubr.bf16.gmra.mrb[0].mxu0 %v1832
        %v2038 = vpop.f32.mrb[0].mxu0
        %v2039 = vadd.f32 0.0, %v2038
        %v2040 = vpop.f32.mrb[0].mxu0
        %v2041 = vpop.f32.mrb[0].mxu0
        %v2042 = vadd.f32 0.0, %v2041
        %v2043 = vpop.f32.mrb[0].mxu0
        %2044 = vmatprep.mubr.bf16.mxu0 %v1835
        %2045 = vmatmul.mubr.bf16.gmra.mrb[0].mxu0 %v1834
        %v2046 = vpop.f32.mrb[0].mxu0
        %v2047 = vadd.f32 0.0, %v2046
        %v2048 = vpop.f32.mrb[0].mxu0
        %v2049 = vpop.f32.mrb[0].mxu0
        %v2050 = vadd.f32 0.0, %v2049
        %v2051 = vpop.f32.mrb[0].mxu0
        %2052 = vmatprep.mubr.bf16.mxu0 %v1837
        %2053 = vmatmul.mubr.bf16.gmra.mrb[0].mxu0 %v1836
        %v2054 = vpop.f32.mrb[0].mxu0
        %v2055 = vadd.f32 0.0, %v2054
        %v2056 = vpop.f32.mrb[0].mxu0
        %v2057 = vpop.f32.mrb[0].mxu0
        %v2058 = vadd.f32 0.0, %v2057
        %v2059 = vpop.f32.mrb[0].mxu0
        %2060 = vmatprep.mubr.bf16.mxu0 %v1839
        %2061 = vmatmul.mubr.bf16.gmra.mrb[0].mxu0 %v1838
        %v2062 = vpop.f32.mrb[0].mxu0
        %v2063 = vadd.f32 0.0, %v2062
        %v2064 = vpop.f32.mrb[0].mxu0
        %v2065 = vpop.f32.mrb[0].mxu0
        %v2066 = vadd.f32 0.0, %v2065
        %v2067 = vpop.f32.mrb[0].mxu0
        %2068 = vmatprep.mubr.bf16.mxu0 %v1841
        %2069 = vmatmul.mubr.bf16.gmra.mrb[0].mxu0 %v1840
        %v2070 = vpop.f32.mrb[0].mxu0
        %v2071 = vadd.f32 0.0, %v2070
        %v2072 = vpop.f32.mrb[0].mxu0
        %v2073 = vpop.f32.mrb[0].mxu0
        %v2074 = vadd.f32 0.0, %v2073
        %v2075 = vpop.f32.mrb[0].mxu0
        %2076 = vmatprep.mubr.bf16.mxu0 %v1843
        %2077 = vmatmul.mubr.bf16.gmra.mrb[0].mxu0 %v1842
        %v2078 = vpop.f32.mrb[0].mxu0
        %v2079 = vadd.f32 0.0, %v2078
        %v2080 = vpop.f32.mrb[0].mxu0
        %v2081 = vpop.f32.mrb[0].mxu0
        %v2082 = vadd.f32 0.0, %v2081
        %v2083 = vpop.f32.mrb[0].mxu0
        %2084 = vmatprep.mubr.bf16.mxu0 %v1845
        %2085 = vmatmul.mubr.bf16.gmra.mrb[0].mxu0 %v1844
        %v2086 = vpop.f32.mrb[0].mxu0
        %v2087 = vadd.f32 0.0, %v2086
        %v2088 = vpop.f32.mrb[0].mxu0
        %v2089 = vpop.f32.mrb[0].mxu0
        %v2090 = vadd.f32 0.0, %v2089
        %v2091 = vpop.f32.mrb[0].mxu0
        %2092 = vmatprep.mubr.bf16.mxu0 %v1847
        %2093 = vmatmul.mubr.bf16.gmra.mrb[0].mxu0 %v1846
        %v2094 = vpop.f32.mrb[0].mxu0
        %v2095 = vadd.f32 0.0, %v2094
        %v2096 = vpop.f32.mrb[0].mxu0
        %v2097 = vpop.f32.mrb[0].mxu0
        %v2098 = vadd.f32 0.0, %v2097
        %v2099 = vpop.f32.mrb[0].mxu0
        %2100 = vmatprep.mubr.bf16.mxu0 %v1849
        %2101 = vmatmul.mubr.bf16.gmra.mrb[0].mxu0 %v1848
        %v2102 = vpop.f32.mrb[0].mxu0
        %v2103 = vadd.f32 0.0, %v2102
        %v2104 = vpop.f32.mrb[0].mxu0
        %v2105 = vpop.f32.mrb[0].mxu0
        %v2106 = vadd.f32 0.0, %v2105
        %v2107 = vpop.f32.mrb[0].mxu0
        %2108 = vmatprep.mubr.bf16.mxu0 %v1851
        %2109 = vmatmul.mubr.bf16.gmra.mrb[0].mxu0 %v1850
        %v2110 = vpop.f32.mrb[0].mxu0
        %v2111 = vadd.f32 0.0, %v2110
        %v2112 = vpop.f32.mrb[0].mxu0
        %v2113 = vpop.f32.mrb[0].mxu0
        %v2114 = vadd.f32 0.0, %v2113
        %v2115 = vpop.f32.mrb[0].mxu0
        %2116 = vmatprep.mubr.bf16.mxu0 %v1853
        %2117 = vmatmul.mubr.bf16.gmra.mrb[0].mxu0 %v1852
        %v2118 = vpop.f32.mrb[0].mxu0
        %v2119 = vadd.f32 0.0, %v2118
        %v2120 = vpop.f32.mrb[0].mxu0
        %v2121 = vpop.f32.mrb[0].mxu0
        %v2122 = vadd.f32 0.0, %v2121
        %v2123 = vpop.f32.mrb[0].mxu0
        %2124 = vmatprep.mubr.bf16.mxu0 %v1855
        %2125 = vmatmul.mubr.bf16.gmra.mrb[0].mxu0 %v1854
        %v2126 = vpop.f32.mrb[0].mxu0
        %v2127 = vadd.f32 0.0, %v2126
        %v2128 = vpop.f32.mrb[0].mxu0
        %v2129 = vpop.f32.mrb[0].mxu0
        %v2130 = vadd.f32 0.0, %v2129
        %v2131 = vpop.f32.mrb[0].mxu0
        %2132 = vmatprep.mubr.bf16.mxu0 %v1857
        %2133 = vmatmul.mubr.bf16.gmra.mrb[0].mxu0 %v1856
        %v2134 = vpop.f32.mrb[0].mxu0
        %v2135 = vadd.f32 0.0, %v2134
        %v2136 = vpop.f32.mrb[0].mxu0
        %v2137 = vpop.f32.mrb[0].mxu0
        %v2138 = vadd.f32 0.0, %v2137
        %v2139 = vpop.f32.mrb[0].mxu0
        %2140 = vmatprep.mubr.bf16.mxu0 %v1859
        %2141 = vmatmul.mubr.bf16.gmra.mrb[0].mxu0 %v1858
        %v2142 = vpop.f32.mrb[0].mxu0
        %v2143 = vadd.f32 0.0, %v2142
        %v2144 = vpop.f32.mrb[0].mxu0
        %v2145 = vpop.f32.mrb[0].mxu0
        %v2146 = vadd.f32 0.0, %v2145
        %v2147 = vpop.f32.mrb[0].mxu0
        %2148 = vdwg.mxu0
        %v2181 = vunpack.c.l.b16 %v1181
        %v2182 = vunpack.c.l.b16 %v1182
        %v2183 = vunpack.c.l.b16 %v1183
        %v2184 = vunpack.c.l.b16 %v1184
        %v2185 = vunpack.c.l.b16 %v1185
        %v2186 = vunpack.c.l.b16 %v1186
        %v2187 = vunpack.c.l.b16 %v1187
        %v2188 = vunpack.c.l.b16 %v1188
        %v2189 = vunpack.c.l.b16 %v1189
        %v2190 = vunpack.c.l.b16 %v1190
        %v2191 = vunpack.c.l.b16 %v1191
        %v2192 = vunpack.c.l.b16 %v1192
        %v2193 = vunpack.c.l.b16 %v1193
        %v2194 = vunpack.c.l.b16 %v1194
        %v2195 = vunpack.c.l.b16 %v1195
        %v2196 = vunpack.c.l.b16 %v1196
        %v2197 = vunpack.c.l.b16 %v1197
        %v2198 = vunpack.c.l.b16 %v1198
        %v2199 = vunpack.c.l.b16 %v1199
        %v2200 = vunpack.c.l.b16 %v1200
        %v2201 = vunpack.c.l.b16 %v1201
        %v2202 = vunpack.c.l.b16 %v1202
        %v2203 = vunpack.c.l.b16 %v1203
        %v2204 = vunpack.c.l.b16 %v1204
        %v2205 = vunpack.c.l.b16 %v1205
        %v2206 = vunpack.c.l.b16 %v1206
        %v2207 = vunpack.c.l.b16 %v1207
        %v2208 = vunpack.c.l.b16 %v1208
        %v2209 = vunpack.c.l.b16 %v1209
        %v2210 = vunpack.c.l.b16 %v1210
        %v2211 = vunpack.c.l.b16 %v1211
        %v2212 = vunpack.c.l.b16 %v1212
        %v2213 = vpack.c.b16 %v2182, %v2181
        %v2214 = vpack.c.b16 %v2184, %v2183
        %v2215 = vpack.c.b16 %v2186, %v2185
        %v2216 = vpack.c.b16 %v2188, %v2187
        %v2217 = vpack.c.b16 %v2190, %v2189
        %v2218 = vpack.c.b16 %v2192, %v2191
        %v2219 = vpack.c.b16 %v2194, %v2193
        %v2220 = vpack.c.b16 %v2196, %v2195
        %v2221 = vpack.c.b16 %v2198, %v2197
        %v2222 = vpack.c.b16 %v2200, %v2199
        %v2223 = vpack.c.b16 %v2202, %v2201
        %v2224 = vpack.c.b16 %v2204, %v2203
        %v2225 = vpack.c.b16 %v2206, %v2205
        %v2226 = vpack.c.b16 %v2208, %v2207
        %v2227 = vpack.c.b16 %v2210, %v2209
        %v2228 = vpack.c.b16 %v2212, %v2211
        %2245 = vmatprep.subr.bf16.mxu0 0
        %2246 = vmatpush1.bf16.msra.mxu0 %v2213
        %2247 = vmatprep.subr.bf16.mxu0 0
        %2248 = vmatpush1.bf16.msra.mxu0 %v2214
        %2249 = vmatprep.subr.bf16.mxu0 0
        %2250 = vmatpush1.bf16.msra.mxu0 %v2215
        %2251 = vmatprep.subr.bf16.mxu0 0
        %2252 = vmatpush1.bf16.msra.mxu0 %v2216
        %2253 = vmatprep.subr.bf16.mxu0 0
        %2254 = vmatpush1.bf16.msra.mxu0 %v2217
        %2255 = vmatprep.subr.bf16.mxu0 0
        %2256 = vmatpush1.bf16.msra.mxu0 %v2218
        %2257 = vmatprep.subr.bf16.mxu0 0
        %2258 = vmatpush1.bf16.msra.mxu0 %v2219
        %2259 = vmatprep.subr.bf16.mxu0 0
        %2260 = vmatpush1.bf16.msra.mxu0 %v2220
        %2261 = vmatprep.subr.bf16.mxu0 0
        %2262 = vmatpush1.bf16.msra.mxu0 %v2221
        %2263 = vmatprep.subr.bf16.mxu0 0
        %2264 = vmatpush1.bf16.msra.mxu0 %v2222
        %2265 = vmatprep.subr.bf16.mxu0 0
        %2266 = vmatpush1.bf16.msra.mxu0 %v2223
        %2267 = vmatprep.subr.bf16.mxu0 0
        %2268 = vmatpush1.bf16.msra.mxu0 %v2224
        %2269 = vmatprep.subr.bf16.mxu0 0
        %2270 = vmatpush1.bf16.msra.mxu0 %v2225
        %2271 = vmatprep.subr.bf16.mxu0 0
        %2272 = vmatpush1.bf16.msra.mxu0 %v2226
        %2273 = vmatprep.subr.bf16.mxu0 0
        %2274 = vmatpush1.bf16.msra.mxu0 %v2227
        %2275 = vmatprep.subr.bf16.mxu0 0
        %2276 = vmatpush1.bf16.msra.mxu0 %v2228
        %2277 = vmatprep.mubr.bf16.mxu0 %v1150
        %2278 = vmatmul.mubr.bf16.gmra.mrb[0].mxu0 %v1149
        %v2279 = vpop.f32.mrb[0].mxu0
        %v2280 = vadd.f32 %v2023, %v2279
        %v2281 = vpop.f32.mrb[0].mxu0
        %v2282 = vpop.f32.mrb[0].mxu0
        %v2283 = vadd.f32 %v2026, %v2282
        %v2284 = vpop.f32.mrb[0].mxu0
        %2285 = vmatprep.mubr.bf16.mxu0 %v1152
        %2286 = vmatmul.mubr.bf16.gmra.mrb[0].mxu0 %v1151
        %v2287 = vpop.f32.mrb[0].mxu0
        %v2288 = vadd.f32 %v2031, %v2287
        %v2289 = vpop.f32.mrb[0].mxu0
        %v2290 = vpop.f32.mrb[0].mxu0
        %v2291 = vadd.f32 %v2034, %v2290
        %v2292 = vpop.f32.mrb[0].mxu0
        %2293 = vmatprep.mubr.bf16.mxu0 %v1154
        %2294 = vmatmul.mubr.bf16.gmra.mrb[0].mxu0 %v1153
        %v2295 = vpop.f32.mrb[0].mxu0
        %v2296 = vadd.f32 %v2039, %v2295
        %v2297 = vpop.f32.mrb[0].mxu0
        %v2298 = vpop.f32.mrb[0].mxu0
        %v2299 = vadd.f32 %v2042, %v2298
        %v2300 = vpop.f32.mrb[0].mxu0
        %2301 = vmatprep.mubr.bf16.mxu0 %v1156
        %2302 = vmatmul.mubr.bf16.gmra.mrb[0].mxu0 %v1155
        %v2303 = vpop.f32.mrb[0].mxu0
        %v2304 = vadd.f32 %v2047, %v2303
        %v2305 = vpop.f32.mrb[0].mxu0
        %v2306 = vpop.f32.mrb[0].mxu0
        %v2307 = vadd.f32 %v2050, %v2306
        %v2308 = vpop.f32.mrb[0].mxu0
        %2309 = vmatprep.mubr.bf16.mxu0 %v1158
        %2310 = vmatmul.mubr.bf16.gmra.mrb[0].mxu0 %v1157
        %v2311 = vpop.f32.mrb[0].mxu0
        %v2312 = vadd.f32 %v2055, %v2311
        %v2313 = vpop.f32.mrb[0].mxu0
        %v2314 = vpop.f32.mrb[0].mxu0
        %v2315 = vadd.f32 %v2058, %v2314
        %v2316 = vpop.f32.mrb[0].mxu0
        %2317 = vmatprep.mubr.bf16.mxu0 %v1160
        %2318 = vmatmul.mubr.bf16.gmra.mrb[0].mxu0 %v1159
        %v2319 = vpop.f32.mrb[0].mxu0
        %v2320 = vadd.f32 %v2063, %v2319
        %v2321 = vpop.f32.mrb[0].mxu0
        %v2322 = vpop.f32.mrb[0].mxu0
        %v2323 = vadd.f32 %v2066, %v2322
        %v2324 = vpop.f32.mrb[0].mxu0
        %2325 = vmatprep.mubr.bf16.mxu0 %v1162
        %2326 = vmatmul.mubr.bf16.gmra.mrb[0].mxu0 %v1161
        %v2327 = vpop.f32.mrb[0].mxu0
        %v2328 = vadd.f32 %v2071, %v2327
        %v2329 = vpop.f32.mrb[0].mxu0
        %v2330 = vpop.f32.mrb[0].mxu0
        %v2331 = vadd.f32 %v2074, %v2330
        %v2332 = vpop.f32.mrb[0].mxu0
        %2333 = vmatprep.mubr.bf16.mxu0 %v1164
        %2334 = vmatmul.mubr.bf16.gmra.mrb[0].mxu0 %v1163
        %v2335 = vpop.f32.mrb[0].mxu0
        %v2336 = vadd.f32 %v2079, %v2335
        %v2337 = vpop.f32.mrb[0].mxu0
        %v2338 = vpop.f32.mrb[0].mxu0
        %v2339 = vadd.f32 %v2082, %v2338
        %v2340 = vpop.f32.mrb[0].mxu0
        %2341 = vmatprep.mubr.bf16.mxu0 %v1166
        %2342 = vmatmul.mubr.bf16.gmra.mrb[0].mxu0 %v1165
        %v2343 = vpop.f32.mrb[0].mxu0
        %v2344 = vadd.f32 %v2087, %v2343
        %v2345 = vpop.f32.mrb[0].mxu0
        %v2346 = vpop.f32.mrb[0].mxu0
        %v2347 = vadd.f32 %v2090, %v2346
        %v2348 = vpop.f32.mrb[0].mxu0
        %2349 = vmatprep.mubr.bf16.mxu0 %v1168
        %2350 = vmatmul.mubr.bf16.gmra.mrb[0].mxu0 %v1167
        %v2351 = vpop.f32.mrb[0].mxu0
        %v2352 = vadd.f32 %v2095, %v2351
        %v2353 = vpop.f32.mrb[0].mxu0
        %v2354 = vpop.f32.mrb[0].mxu0
        %v2355 = vadd.f32 %v2098, %v2354
        %v2356 = vpop.f32.mrb[0].mxu0
        %2357 = vmatprep.mubr.bf16.mxu0 %v1170
        %2358 = vmatmul.mubr.bf16.gmra.mrb[0].mxu0 %v1169
        %v2359 = vpop.f32.mrb[0].mxu0
        %v2360 = vadd.f32 %v2103, %v2359
        %v2361 = vpop.f32.mrb[0].mxu0
        %v2362 = vpop.f32.mrb[0].mxu0
        %v2363 = vadd.f32 %v2106, %v2362
        %v2364 = vpop.f32.mrb[0].mxu0
        %2365 = vmatprep.mubr.bf16.mxu0 %v1172
        %2366 = vmatmul.mubr.bf16.gmra.mrb[0].mxu0 %v1171
        %v2367 = vpop.f32.mrb[0].mxu0
        %v2368 = vadd.f32 %v2111, %v2367
        %v2369 = vpop.f32.mrb[0].mxu0
        %v2370 = vpop.f32.mrb[0].mxu0
        %v2371 = vadd.f32 %v2114, %v2370
        %v2372 = vpop.f32.mrb[0].mxu0
        %2373 = vmatprep.mubr.bf16.mxu0 %v1174
        %2374 = vmatmul.mubr.bf16.gmra.mrb[0].mxu0 %v1173
        %v2375 = vpop.f32.mrb[0].mxu0
        %v2376 = vadd.f32 %v2119, %v2375
        %v2377 = vpop.f32.mrb[0].mxu0
        %v2378 = vpop.f32.mrb[0].mxu0
        %v2379 = vadd.f32 %v2122, %v2378
        %v2380 = vpop.f32.mrb[0].mxu0
        %2381 = vmatprep.mubr.bf16.mxu0 %v1176
        %2382 = vmatmul.mubr.bf16.gmra.mrb[0].mxu0 %v1175
        %v2383 = vpop.f32.mrb[0].mxu0
        %v2384 = vadd.f32 %v2127, %v2383
        %v2385 = vpop.f32.mrb[0].mxu0
        %v2386 = vpop.f32.mrb[0].mxu0
        %v2387 = vadd.f32 %v2130, %v2386
        %v2388 = vpop.f32.mrb[0].mxu0
        %2389 = vmatprep.mubr.bf16.mxu0 %v1178
        %2390 = vmatmul.mubr.bf16.gmra.mrb[0].mxu0 %v1177
        %v2391 = vpop.f32.mrb[0].mxu0
        %v2392 = vadd.f32 %v2135, %v2391
        %v2393 = vpop.f32.mrb[0].mxu0
        %v2394 = vpop.f32.mrb[0].mxu0
        %v2395 = vadd.f32 %v2138, %v2394
        %v2396 = vpop.f32.mrb[0].mxu0
        %2397 = vmatprep.mubr.bf16.mxu0 %v1180
        %2398 = vmatmul.mubr.bf16.gmra.mrb[0].mxu0 %v1179
        %v2399 = vpop.f32.mrb[0].mxu0
        %v2400 = vadd.f32 %v2143, %v2399
        %v2401 = vpop.f32.mrb[0].mxu0
        %v2402 = vpop.f32.mrb[0].mxu0
        %v2403 = vadd.f32 %v2146, %v2402
        %v2404 = vpop.f32.mrb[0].mxu0
        %2405 = vdwg.mxu0
        %v2406 = vld [vmem:[%s9] sm:$0xff]
        %v2407 = vld [vmem:[%s9 + $0x8] sm:$0xff]
        %v2408 = vld [vmem:[%s9 + $0x10] sm:$0xff]
        %v2409 = vld [vmem:[%s9 + $0x18] sm:$0xff]
        %v2410 = vld [vmem:[%s9 + $0x20] sm:$0xff]
        %v2411 = vld [vmem:[%s9 + $0x28] sm:$0xff]
        %v2412 = vld [vmem:[%s9 + $0x30] sm:$0xff]
        %v2413 = vld [vmem:[%s9 + $0x38] sm:$0xff]
        %v2414 = vld [vmem:[%s9 + $0x40] sm:$0xff]
        %v2415 = vld [vmem:[%s9 + $0x48] sm:$0xff]
        %v2416 = vld [vmem:[%s9 + $0x50] sm:$0xff]
        %v2417 = vld [vmem:[%s9 + $0x58] sm:$0xff]
        %v2418 = vld [vmem:[%s9 + $0x60] sm:$0xff]
        %v2419 = vld [vmem:[%s9 + $0x68] sm:$0xff]
        %v2420 = vld [vmem:[%s9 + $0x70] sm:$0xff]
        %v2421 = vld [vmem:[%s9 + $0x78] sm:$0xff]
        %v2422 = vld [vmem:[%s9 + $0x80] sm:$0xff]
        %v2423 = vld [vmem:[%s9 + $0x88] sm:$0xff]
        %v2424 = vld [vmem:[%s9 + $0x90] sm:$0xff]
        %v2425 = vld [vmem:[%s9 + $0x98] sm:$0xff]
        %v2426 = vld [vmem:[%s9 + $0xa0] sm:$0xff]
        %v2427 = vld [vmem:[%s9 + $0xa8] sm:$0xff]
        %v2428 = vld [vmem:[%s9 + $0xb0] sm:$0xff]
        %v2429 = vld [vmem:[%s9 + $0xb8] sm:$0xff]
        %v2430 = vld [vmem:[%s9 + $0xc0] sm:$0xff]
        %v2431 = vld [vmem:[%s9 + $0xc8] sm:$0xff]
        %v2432 = vld [vmem:[%s9 + $0xd0] sm:$0xff]
        %v2433 = vld [vmem:[%s9 + $0xd8] sm:$0xff]
        %v2434 = vld [vmem:[%s9 + $0xe0] sm:$0xff]
        %v2435 = vld [vmem:[%s9 + $0xe8] sm:$0xff]
        %v2436 = vld [vmem:[%s9 + $0xf0] sm:$0xff]
        %v2437 = vld [vmem:[%s9 + $0xf8] sm:$0xff]
        %vm2470 = vcmask 1046528
        %v2471 = vrot.slane %v2406, 1
        %v2472 = vrot.slane %v2407, 1
        %v2473 = vsel %vm2470, %v2471, %v2472
        %v2474 = vrot.slane %v2408, 1
        %v2475 = vsel %vm2470, %v2472, %v2474
        %v2476 = vrot.slane %v2409, 1
        %v2477 = vsel %vm2470, %v2474, %v2476
        %v2478 = vrot.slane %v2410, 1
        %v2479 = vsel %vm2470, %v2476, %v2478
        %v2480 = vrot.slane %v2411, 1
        %v2481 = vsel %vm2470, %v2478, %v2480
        %v2482 = vrot.slane %v2412, 1
        %v2483 = vsel %vm2470, %v2480, %v2482
        %v2484 = vrot.slane %v2413, 1
        %v2485 = vsel %vm2470, %v2482, %v2484
        %v2486 = vrot.slane %v2414, 1
        %v2487 = vsel %vm2470, %v2484, %v2486
        %v2488 = vrot.slane %v2415, 1
        %v2489 = vsel %vm2470, %v2486, %v2488
        %v2490 = vrot.slane %v2416, 1
        %v2491 = vsel %vm2470, %v2488, %v2490
        %v2492 = vrot.slane %v2417, 1
        %v2493 = vsel %vm2470, %v2490, %v2492
        %v2494 = vrot.slane %v2418, 1
        %v2495 = vsel %vm2470, %v2492, %v2494
        %v2496 = vrot.slane %v2419, 1
        %v2497 = vsel %vm2470, %v2494, %v2496
        %v2498 = vrot.slane %v2420, 1
        %v2499 = vsel %vm2470, %v2496, %v2498
        %v2500 = vrot.slane %v2421, 1
        %v2501 = vsel %vm2470, %v2498, %v2500
        %v2502 = vrot.slane %v2422, 1
        %v2503 = vsel %vm2470, %v2500, %v2502
        %v2504 = vrot.slane %v2423, 1
        %v2505 = vsel %vm2470, %v2502, %v2504
        %v2506 = vrot.slane %v2424, 1
        %v2507 = vsel %vm2470, %v2504, %v2506
        %v2508 = vrot.slane %v2425, 1
        %v2509 = vsel %vm2470, %v2506, %v2508
        %v2510 = vrot.slane %v2426, 1
        %v2511 = vsel %vm2470, %v2508, %v2510
        %v2512 = vrot.slane %v2427, 1
        %v2513 = vsel %vm2470, %v2510, %v2512
        %v2514 = vrot.slane %v2428, 1
        %v2515 = vsel %vm2470, %v2512, %v2514
        %v2516 = vrot.slane %v2429, 1
        %v2517 = vsel %vm2470, %v2514, %v2516
        %v2518 = vrot.slane %v2430, 1
        %v2519 = vsel %vm2470, %v2516, %v2518
        %v2520 = vrot.slane %v2431, 1
        %v2521 = vsel %vm2470, %v2518, %v2520
        %v2522 = vrot.slane %v2432, 1
        %v2523 = vsel %vm2470, %v2520, %v2522
        %v2524 = vrot.slane %v2433, 1
        %v2525 = vsel %vm2470, %v2522, %v2524
        %v2526 = vrot.slane %v2434, 1
        %v2527 = vsel %vm2470, %v2524, %v2526
        %v2528 = vrot.slane %v2435, 1
        %v2529 = vsel %vm2470, %v2526, %v2528
        %v2530 = vrot.slane %v2436, 1
        %v2531 = vsel %vm2470, %v2528, %v2530
        %v2532 = vrot.slane %v2437, 1
        %v2533 = vsel %vm2470, %v2530, %v2532
        %v2567 = vmul.f32 %v2471, 0.0
        %v2568 = vmul.f32 %v2473, 0.0
        %v2569 = vmul.f32 %v2475, 0.0
        %v2570 = vmul.f32 %v2280, %v2477
        %v2571 = vmul.f32 %v2283, %v2479
        %v2572 = vmul.f32 %v2288, %v2481
        %v2573 = vmul.f32 %v2291, %v2483
        %v2574 = vmul.f32 %v2296, %v2485
        %v2575 = vmul.f32 %v2299, %v2487
        %v2576 = vmul.f32 %v2304, %v2489
        %v2577 = vmul.f32 %v2307, %v2491
        %v2578 = vmul.f32 %v2312, %v2493
        %v2579 = vmul.f32 %v2315, %v2495
        %v2580 = vmul.f32 %v2320, %v2497
        %v2581 = vmul.f32 %v2323, %v2499
        %v2582 = vmul.f32 %v2328, %v2501
        %v2583 = vmul.f32 %v2331, %v2503
        %v2584 = vmul.f32 %v2336, %v2505
        %v2585 = vmul.f32 %v2339, %v2507
        %v2586 = vmul.f32 %v2344, %v2509
        %v2587 = vmul.f32 %v2347, %v2511
        %v2588 = vmul.f32 %v2352, %v2513
        %v2589 = vmul.f32 %v2355, %v2515
        %v2590 = vmul.f32 %v2360, %v2517
        %v2591 = vmul.f32 %v2363, %v2519
        %v2592 = vmul.f32 %v2368, %v2521
        %v2593 = vmul.f32 %v2371, %v2523
        %v2594 = vmul.f32 %v2376, %v2525
        %v2595 = vmul.f32 %v2379, %v2527
        %v2596 = vmul.f32 %v2384, %v2529
        %v2597 = vmul.f32 %v2387, %v2531
        %v2598 = vmul.f32 %v2392, %v2533
        %v2599 = vmul.f32 %v2395, %v2532
        %v2631 = vrot.slane 0.0, 1
        %v2632 = vsel %vm2470, %v2631, %v2631
        %v2633 = vrot.slane %v2280, 1
        %v2634 = vsel %vm2470, %v2631, %v2633
        %v2635 = vrot.slane %v2283, 1
        %v2636 = vsel %vm2470, %v2633, %v2635
        %v2637 = vrot.slane %v2288, 1
        %v2638 = vsel %vm2470, %v2635, %v2637
        %v2639 = vrot.slane %v2291, 1
        %v2640 = vsel %vm2470, %v2637, %v2639
        %v2641 = vrot.slane %v2296, 1
        %v2642 = vsel %vm2470, %v2639, %v2641
        %v2643 = vrot.slane %v2299, 1
        %v2644 = vsel %vm2470, %v2641, %v2643
        %v2645 = vrot.slane %v2304, 1
        %v2646 = vsel %vm2470, %v2643, %v2645
        %v2647 = vrot.slane %v2307, 1
        %v2648 = vsel %vm2470, %v2645, %v2647
        %v2649 = vrot.slane %v2312, 1
        %v2650 = vsel %vm2470, %v2647, %v2649
        %v2651 = vrot.slane %v2315, 1
        %v2652 = vsel %vm2470, %v2649, %v2651
        %v2653 = vrot.slane %v2320, 1
        %v2654 = vsel %vm2470, %v2651, %v2653
        %v2655 = vrot.slane %v2323, 1
        %v2656 = vsel %vm2470, %v2653, %v2655
        %v2657 = vrot.slane %v2328, 1
        %v2658 = vsel %vm2470, %v2655, %v2657
        %v2659 = vrot.slane %v2331, 1
        %v2660 = vsel %vm2470, %v2657, %v2659
        %v2661 = vrot.slane %v2336, 1
        %v2662 = vsel %vm2470, %v2659, %v2661
        %v2663 = vrot.slane %v2339, 1
        %v2664 = vsel %vm2470, %v2661, %v2663
        %v2665 = vrot.slane %v2344, 1
        %v2666 = vsel %vm2470, %v2663, %v2665
        %v2667 = vrot.slane %v2347, 1
        %v2668 = vsel %vm2470, %v2665, %v2667
        %v2669 = vrot.slane %v2352, 1
        %v2670 = vsel %vm2470, %v2667, %v2669
        %v2671 = vrot.slane %v2355, 1
        %v2672 = vsel %vm2470, %v2669, %v2671
        %v2673 = vrot.slane %v2360, 1
        %v2674 = vsel %vm2470, %v2671, %v2673
        %v2675 = vrot.slane %v2363, 1
        %v2676 = vsel %vm2470, %v2673, %v2675
        %v2677 = vrot.slane %v2368, 1
        %v2678 = vsel %vm2470, %v2675, %v2677
        %v2679 = vrot.slane %v2371, 1
        %v2680 = vsel %vm2470, %v2677, %v2679
        %v2681 = vrot.slane %v2376, 1
        %v2682 = vsel %vm2470, %v2679, %v2681
        %v2683 = vrot.slane %v2379, 1
        %v2684 = vsel %vm2470, %v2681, %v2683
        %v2685 = vrot.slane %v2384, 1
        %v2686 = vsel %vm2470, %v2683, %v2685
        %v2687 = vrot.slane %v2387, 1
        %v2688 = vsel %vm2470, %v2685, %v2687
        %v2689 = vrot.slane %v2392, 1
        %v2690 = vsel %vm2470, %v2687, %v2689
        %v2691 = vrot.slane %v2395, 1
        %v2692 = vsel %vm2470, %v2689, %v2691
        %2693 = vrot.lane.b32.xlu0 %v2631, 127
        %v2694 = vpop.permute.xlu0 %2693
        %2695 = vrot.lane.b32.xlu0 %v2632, 127
        %v2696 = vpop.permute.xlu0 %2695
        %2697 = vrot.lane.b32.xlu0 %v2634, 127
        %v2698 = vpop.permute.xlu0 %2697
        %2699 = vrot.lane.b32.xlu0 %v2636, 127
        %v2700 = vpop.permute.xlu0 %2699
        %2701 = vrot.lane.b32.xlu0 %v2638, 127
        %v2702 = vpop.permute.xlu0 %2701
        %2703 = vrot.lane.b32.xlu0 %v2640, 127
        %v2704 = vpop.permute.xlu0 %2703
        %2705 = vrot.lane.b32.xlu0 %v2642, 127
        %v2706 = vpop.permute.xlu0 %2705
        %2707 = vrot.lane.b32.xlu0 %v2644, 127
        %v2708 = vpop.permute.xlu0 %2707
        %2709 = vrot.lane.b32.xlu0 %v2646, 127
        %v2710 = vpop.permute.xlu0 %2709
        %2711 = vrot.lane.b32.xlu0 %v2648, 127
        %v2712 = vpop.permute.xlu0 %2711
        %2713 = vrot.lane.b32.xlu0 %v2650, 127
        %v2714 = vpop.permute.xlu0 %2713
        %2715 = vrot.lane.b32.xlu0 %v2652, 127
        %v2716 = vpop.permute.xlu0 %2715
        %2717 = vrot.lane.b32.xlu0 %v2654, 127
        %v2718 = vpop.permute.xlu0 %2717
        %2719 = vrot.lane.b32.xlu0 %v2656, 127
        %v2720 = vpop.permute.xlu0 %2719
        %2721 = vrot.lane.b32.xlu0 %v2658, 127
        %v2722 = vpop.permute.xlu0 %2721
        %2723 = vrot.lane.b32.xlu0 %v2660, 127
        %v2724 = vpop.permute.xlu0 %2723
        %2725 = vrot.lane.b32.xlu0 %v2662, 127
        %v2726 = vpop.permute.xlu0 %2725
        %2727 = vrot.lane.b32.xlu0 %v2664, 127
        %v2728 = vpop.permute.xlu0 %2727
        %2729 = vrot.lane.b32.xlu0 %v2666, 127
        %v2730 = vpop.permute.xlu0 %2729
        %2731 = vrot.lane.b32.xlu0 %v2668, 127
        %v2732 = vpop.permute.xlu0 %2731
        %2733 = vrot.lane.b32.xlu0 %v2670, 127
        %v2734 = vpop.permute.xlu0 %2733
        %2735 = vrot.lane.b32.xlu0 %v2672, 127
        %v2736 = vpop.permute.xlu0 %2735
        %2737 = vrot.lane.b32.xlu0 %v2674, 127
        %v2738 = vpop.permute.xlu0 %2737
        %2739 = vrot.lane.b32.xlu0 %v2676, 127
        %v2740 = vpop.permute.xlu0 %2739
        %2741 = vrot.lane.b32.xlu0 %v2678, 127
        %v2742 = vpop.permute.xlu0 %2741
        %2743 = vrot.lane.b32.xlu0 %v2680, 127
        %v2744 = vpop.permute.xlu0 %2743
        %2745 = vrot.lane.b32.xlu0 %v2682, 127
        %v2746 = vpop.permute.xlu0 %2745
        %2747 = vrot.lane.b32.xlu0 %v2684, 127
        %v2748 = vpop.permute.xlu0 %2747
        %2749 = vrot.lane.b32.xlu0 %v2686, 127
        %v2750 = vpop.permute.xlu0 %2749
        %2751 = vrot.lane.b32.xlu0 %v2688, 127
        %v2752 = vpop.permute.xlu0 %2751
        %2753 = vrot.lane.b32.xlu0 %v2690, 127
        %v2754 = vpop.permute.xlu0 %2753
        %2755 = vrot.lane.b32.xlu0 %v2692, 127
        %v2756 = vpop.permute.xlu0 %2755
        %2757 = vrot.lane.b32.xlu0 %v2691, 127
        %v2758 = vpop.permute.xlu0 %2757
        %v2792 = vadd.f32 %v2567, %v2694
        %v2793 = vadd.f32 %v2568, %v2696
        %v2794 = vadd.f32 %v2569, %v2698
        %v2795 = vadd.f32 %v2570, %v2700
        %v2796 = vadd.f32 %v2571, %v2702
        %v2797 = vadd.f32 %v2572, %v2704
        %v2798 = vadd.f32 %v2573, %v2706
        %v2799 = vadd.f32 %v2574, %v2708
        %v2800 = vadd.f32 %v2575, %v2710
        %v2801 = vadd.f32 %v2576, %v2712
        %v2802 = vadd.f32 %v2577, %v2714
        %v2803 = vadd.f32 %v2578, %v2716
        %v2804 = vadd.f32 %v2579, %v2718
        %v2805 = vadd.f32 %v2580, %v2720
        %v2806 = vadd.f32 %v2581, %v2722
        %v2807 = vadd.f32 %v2582, %v2724
        %v2808 = vadd.f32 %v2583, %v2726
        %v2809 = vadd.f32 %v2584, %v2728
        %v2810 = vadd.f32 %v2585, %v2730
        %v2811 = vadd.f32 %v2586, %v2732
        %v2812 = vadd.f32 %v2587, %v2734
        %v2813 = vadd.f32 %v2588, %v2736
        %v2814 = vadd.f32 %v2589, %v2738
        %v2815 = vadd.f32 %v2590, %v2740
        %v2816 = vadd.f32 %v2591, %v2742
        %v2817 = vadd.f32 %v2592, %v2744
        %v2818 = vadd.f32 %v2593, %v2746
        %v2819 = vadd.f32 %v2594, %v2748
        %v2820 = vadd.f32 %v2595, %v2750
        %v2821 = vadd.f32 %v2596, %v2752
        %v2822 = vadd.f32 %v2597, %v2754
        %v2823 = vadd.f32 %v2598, %v2756
        %v2824 = vadd.f32 %v2599, %v2758
        %vm2825 = vcmask 1040384
        %v2826 = vrot.slane %v2406, 7
        %v2827 = vrot.slane %v2407, 7
        %v2828 = vsel %vm2825, %v2826, %v2827
        %v2829 = vrot.slane %v2408, 7
        %v2830 = vsel %vm2825, %v2827, %v2829
        %v2831 = vrot.slane %v2409, 7
        %v2832 = vsel %vm2825, %v2829, %v2831
        %v2833 = vrot.slane %v2410, 7
        %v2834 = vsel %vm2825, %v2831, %v2833
        %v2835 = vrot.slane %v2411, 7
        %v2836 = vsel %vm2825, %v2833, %v2835
        %v2837 = vrot.slane %v2412, 7
        %v2838 = vsel %vm2825, %v2835, %v2837
        %v2839 = vrot.slane %v2413, 7
        %v2840 = vsel %vm2825, %v2837, %v2839
        %v2841 = vrot.slane %v2414, 7
        %v2842 = vsel %vm2825, %v2839, %v2841
        %v2843 = vrot.slane %v2415, 7
        %v2844 = vsel %vm2825, %v2841, %v2843
        %v2845 = vrot.slane %v2416, 7
        %v2846 = vsel %vm2825, %v2843, %v2845
        %v2847 = vrot.slane %v2417, 7
        %v2848 = vsel %vm2825, %v2845, %v2847
        %v2849 = vrot.slane %v2418, 7
        %v2850 = vsel %vm2825, %v2847, %v2849
        %v2851 = vrot.slane %v2419, 7
        %v2852 = vsel %vm2825, %v2849, %v2851
        %v2853 = vrot.slane %v2420, 7
        %v2854 = vsel %vm2825, %v2851, %v2853
        %v2855 = vrot.slane %v2421, 7
        %v2856 = vsel %vm2825, %v2853, %v2855
        %v2857 = vrot.slane %v2422, 7
        %v2858 = vsel %vm2825, %v2855, %v2857
        %v2859 = vrot.slane %v2423, 7
        %v2860 = vsel %vm2825, %v2857, %v2859
        %v2861 = vrot.slane %v2424, 7
        %v2862 = vsel %vm2825, %v2859, %v2861
        %v2863 = vrot.slane %v2425, 7
        %v2864 = vsel %vm2825, %v2861, %v2863
        %v2865 = vrot.slane %v2426, 7
        %v2866 = vsel %vm2825, %v2863, %v2865
        %v2867 = vrot.slane %v2427, 7
        %v2868 = vsel %vm2825, %v2865, %v2867
        %v2869 = vrot.slane %v2428, 7
        %v2870 = vsel %vm2825, %v2867, %v2869
        %v2871 = vrot.slane %v2429, 7
        %v2872 = vsel %vm2825, %v2869, %v2871
        %v2873 = vrot.slane %v2430, 7
        %v2874 = vsel %vm2825, %v2871, %v2873
        %v2875 = vrot.slane %v2431, 7
        %v2876 = vsel %vm2825, %v2873, %v2875
        %v2877 = vrot.slane %v2432, 7
        %v2878 = vsel %vm2825, %v2875, %v2877
        %v2879 = vrot.slane %v2433, 7
        %v2880 = vsel %vm2825, %v2877, %v2879
        %v2881 = vrot.slane %v2434, 7
        %v2882 = vsel %vm2825, %v2879, %v2881
        %v2883 = vrot.slane %v2435, 7
        %v2884 = vsel %vm2825, %v2881, %v2883
        %v2885 = vrot.slane %v2436, 7
        %v2886 = vsel %vm2825, %v2883, %v2885
        %v2887 = vrot.slane %v2437, 7
        %v2888 = vsel %vm2825, %v2885, %v2887
        %2889 = vrot.lane.b32.xlu0 %v2826, 1
        %v2890 = vpop.permute.xlu0 %2889
        %2891 = vrot.lane.b32.xlu0 %v2828, 1
        %v2892 = vpop.permute.xlu0 %2891
        %2893 = vrot.lane.b32.xlu0 %v2830, 1
        %v2894 = vpop.permute.xlu0 %2893
        %2895 = vrot.lane.b32.xlu0 %v2832, 1
        %v2896 = vpop.permute.xlu0 %2895
        %2897 = vrot.lane.b32.xlu0 %v2834, 1
        %v2898 = vpop.permute.xlu0 %2897
        %2899 = vrot.lane.b32.xlu0 %v2836, 1
        %v2900 = vpop.permute.xlu0 %2899
        %2901 = vrot.lane.b32.xlu0 %v2838, 1
        %v2902 = vpop.permute.xlu0 %2901
        %2903 = vrot.lane.b32.xlu0 %v2840, 1
        %v2904 = vpop.permute.xlu0 %2903
        %2905 = vrot.lane.b32.xlu0 %v2842, 1
        %v2906 = vpop.permute.xlu0 %2905
        %2907 = vrot.lane.b32.xlu0 %v2844, 1
        %v2908 = vpop.permute.xlu0 %2907
        %2909 = vrot.lane.b32.xlu0 %v2846, 1
        %v2910 = vpop.permute.xlu0 %2909
        %2911 = vrot.lane.b32.xlu0 %v2848, 1
        %v2912 = vpop.permute.xlu0 %2911
        %2913 = vrot.lane.b32.xlu0 %v2850, 1
        %v2914 = vpop.permute.xlu0 %2913
        %2915 = vrot.lane.b32.xlu0 %v2852, 1
        %v2916 = vpop.permute.xlu0 %2915
        %2917 = vrot.lane.b32.xlu0 %v2854, 1
        %v2918 = vpop.permute.xlu0 %2917
        %2919 = vrot.lane.b32.xlu0 %v2856, 1
        %v2920 = vpop.permute.xlu0 %2919
        %2921 = vrot.lane.b32.xlu0 %v2858, 1
        %v2922 = vpop.permute.xlu0 %2921
        %2923 = vrot.lane.b32.xlu0 %v2860, 1
        %v2924 = vpop.permute.xlu0 %2923
        %2925 = vrot.lane.b32.xlu0 %v2862, 1
        %v2926 = vpop.permute.xlu0 %2925
        %2927 = vrot.lane.b32.xlu0 %v2864, 1
        %v2928 = vpop.permute.xlu0 %2927
        %2929 = vrot.lane.b32.xlu0 %v2866, 1
        %v2930 = vpop.permute.xlu0 %2929
        %2931 = vrot.lane.b32.xlu0 %v2868, 1
        %v2932 = vpop.permute.xlu0 %2931
        %2933 = vrot.lane.b32.xlu0 %v2870, 1
        %v2934 = vpop.permute.xlu0 %2933
        %2935 = vrot.lane.b32.xlu0 %v2872, 1
        %v2936 = vpop.permute.xlu0 %2935
        %2937 = vrot.lane.b32.xlu0 %v2874, 1
        %v2938 = vpop.permute.xlu0 %2937
        %2939 = vrot.lane.b32.xlu0 %v2876, 1
        %v2940 = vpop.permute.xlu0 %2939
        %2941 = vrot.lane.b32.xlu0 %v2878, 1
        %v2942 = vpop.permute.xlu0 %2941
        %2943 = vrot.lane.b32.xlu0 %v2880, 1
        %v2944 = vpop.permute.xlu0 %2943
        %2945 = vrot.lane.b32.xlu0 %v2882, 1
        %v2946 = vpop.permute.xlu0 %2945
        %2947 = vrot.lane.b32.xlu0 %v2884, 1
        %v2948 = vpop.permute.xlu0 %2947
        %2949 = vrot.lane.b32.xlu0 %v2886, 1
        %v2950 = vpop.permute.xlu0 %2949
        %2951 = vrot.lane.b32.xlu0 %v2888, 1
        %v2952 = vpop.permute.xlu0 %2951
        %2953 = vrot.lane.b32.xlu0 %v2887, 1
        %v2954 = vpop.permute.xlu0 %2953
        %v2988 = vmul.f32 %v2890, 0.0
        %v2989 = vmul.f32 %v2892, 0.0
        %v2990 = vmul.f32 %v2280, %v2894
        %v2991 = vmul.f32 %v2283, %v2896
        %v2992 = vmul.f32 %v2288, %v2898
        %v2993 = vmul.f32 %v2291, %v2900
        %v2994 = vmul.f32 %v2296, %v2902
        %v2995 = vmul.f32 %v2299, %v2904
        %v2996 = vmul.f32 %v2304, %v2906
        %v2997 = vmul.f32 %v2307, %v2908
        %v2998 = vmul.f32 %v2312, %v2910
        %v2999 = vmul.f32 %v2315, %v2912
        %v3000 = vmul.f32 %v2320, %v2914
        %v3001 = vmul.f32 %v2323, %v2916
        %v3002 = vmul.f32 %v2328, %v2918
        %v3003 = vmul.f32 %v2331, %v2920
        %v3004 = vmul.f32 %v2336, %v2922
        %v3005 = vmul.f32 %v2339, %v2924
        %v3006 = vmul.f32 %v2344, %v2926
        %v3007 = vmul.f32 %v2347, %v2928
        %v3008 = vmul.f32 %v2352, %v2930
        %v3009 = vmul.f32 %v2355, %v2932
        %v3010 = vmul.f32 %v2360, %v2934
        %v3011 = vmul.f32 %v2363, %v2936
        %v3012 = vmul.f32 %v2368, %v2938
        %v3013 = vmul.f32 %v2371, %v2940
        %v3014 = vmul.f32 %v2376, %v2942
        %v3015 = vmul.f32 %v2379, %v2944
        %v3016 = vmul.f32 %v2384, %v2946
        %v3017 = vmul.f32 %v2387, %v2948
        %v3018 = vmul.f32 %v2392, %v2950
        %v3019 = vmul.f32 %v2395, %v2952
        %v3020 = vmul.f32 %v2400, %v2954
        %vm3054 = vcmask 1045504
        %v3055 = vrot.slane %v2988, 2
        %v3056 = vrot.slane %v2989, 2
        %v3057 = vsel %vm3054, %v3055, %v3056
        %v3058 = vrot.slane %v2990, 2
        %v3059 = vsel %vm3054, %v3056, %v3058
        %v3060 = vrot.slane %v2991, 2
        %v3061 = vsel %vm3054, %v3058, %v3060
        %v3062 = vrot.slane %v2992, 2
        %v3063 = vsel %vm3054, %v3060, %v3062
        %v3064 = vrot.slane %v2993, 2
        %v3065 = vsel %vm3054, %v3062, %v3064
        %v3066 = vrot.slane %v2994, 2
        %v3067 = vsel %vm3054, %v3064, %v3066
        %v3068 = vrot.slane %v2995, 2
        %v3069 = vsel %vm3054, %v3066, %v3068
        %v3070 = vrot.slane %v2996, 2
        %v3071 = vsel %vm3054, %v3068, %v3070
        %v3072 = vrot.slane %v2997, 2
        %v3073 = vsel %vm3054, %v3070, %v3072
        %v3074 = vrot.slane %v2998, 2
        %v3075 = vsel %vm3054, %v3072, %v3074
        %v3076 = vrot.slane %v2999, 2
        %v3077 = vsel %vm3054, %v3074, %v3076
        %v3078 = vrot.slane %v3000, 2
        %v3079 = vsel %vm3054, %v3076, %v3078
        %v3080 = vrot.slane %v3001, 2
        %v3081 = vsel %vm3054, %v3078, %v3080
        %v3082 = vrot.slane %v3002, 2
        %v3083 = vsel %vm3054, %v3080, %v3082
        %v3084 = vrot.slane %v3003, 2
        %v3085 = vsel %vm3054, %v3082, %v3084
        %v3086 = vrot.slane %v3004, 2
        %v3087 = vsel %vm3054, %v3084, %v3086
        %v3088 = vrot.slane %v3005, 2
        %v3089 = vsel %vm3054, %v3086, %v3088
        %v3090 = vrot.slane %v3006, 2
        %v3091 = vsel %vm3054, %v3088, %v3090
        %v3092 = vrot.slane %v3007, 2
        %v3093 = vsel %vm3054, %v3090, %v3092
        %v3094 = vrot.slane %v3008, 2
        %v3095 = vsel %vm3054, %v3092, %v3094
        %v3096 = vrot.slane %v3009, 2
        %v3097 = vsel %vm3054, %v3094, %v3096
        %v3098 = vrot.slane %v3010, 2
        %v3099 = vsel %vm3054, %v3096, %v3098
        %v3100 = vrot.slane %v3011, 2
        %v3101 = vsel %vm3054, %v3098, %v3100
        %v3102 = vrot.slane %v3012, 2
        %v3103 = vsel %vm3054, %v3100, %v3102
        %v3104 = vrot.slane %v3013, 2
        %v3105 = vsel %vm3054, %v3102, %v3104
        %v3106 = vrot.slane %v3014, 2
        %v3107 = vsel %vm3054, %v3104, %v3106
        %v3108 = vrot.slane %v3015, 2
        %v3109 = vsel %vm3054, %v3106, %v3108
        %v3110 = vrot.slane %v3016, 2
        %v3111 = vsel %vm3054, %v3108, %v3110
        %v3112 = vrot.slane %v3017, 2
        %v3113 = vsel %vm3054, %v3110, %v3112
        %v3114 = vrot.slane %v3018, 2
        %v3115 = vsel %vm3054, %v3112, %v3114
        %v3116 = vrot.slane %v3019, 2
        %v3117 = vsel %vm3054, %v3114, %v3116
        %v3118 = vrot.slane %v3020, 2
        %v3119 = vsel %vm3054, %v3116, %v3118
        %3120 = vrot.lane.b32.xlu0 %v3055, 126
        %v3121 = vpop.permute.xlu0 %3120
        %3122 = vrot.lane.b32.xlu0 %v3057, 126
        %v3123 = vpop.permute.xlu0 %3122
        %3124 = vrot.lane.b32.xlu0 %v3059, 126
        %v3125 = vpop.permute.xlu0 %3124
        %3126 = vrot.lane.b32.xlu0 %v3061, 126
        %v3127 = vpop.permute.xlu0 %3126
        %3128 = vrot.lane.b32.xlu0 %v3063, 126
        %v3129 = vpop.permute.xlu0 %3128
        %3130 = vrot.lane.b32.xlu0 %v3065, 126
        %v3131 = vpop.permute.xlu0 %3130
        %3132 = vrot.lane.b32.xlu0 %v3067, 126
        %v3133 = vpop.permute.xlu0 %3132
        %3134 = vrot.lane.b32.xlu0 %v3069, 126
        %v3135 = vpop.permute.xlu0 %3134
        %3136 = vrot.lane.b32.xlu0 %v3071, 126
        %v3137 = vpop.permute.xlu0 %3136
        %3138 = vrot.lane.b32.xlu0 %v3073, 126
        %v3139 = vpop.permute.xlu0 %3138
        %3140 = vrot.lane.b32.xlu0 %v3075, 126
        %v3141 = vpop.permute.xlu0 %3140
        %3142 = vrot.lane.b32.xlu0 %v3077, 126
        %v3143 = vpop.permute.xlu0 %3142
        %3144 = vrot.lane.b32.xlu0 %v3079, 126
        %v3145 = vpop.permute.xlu0 %3144
        %3146 = vrot.lane.b32.xlu0 %v3081, 126
        %v3147 = vpop.permute.xlu0 %3146
        %3148 = vrot.lane.b32.xlu0 %v3083, 126
        %v3149 = vpop.permute.xlu0 %3148
        %3150 = vrot.lane.b32.xlu0 %v3085, 126
        %v3151 = vpop.permute.xlu0 %3150
        %3152 = vrot.lane.b32.xlu0 %v3087, 126
        %v3153 = vpop.permute.xlu0 %3152
        %3154 = vrot.lane.b32.xlu0 %v3089, 126
        %v3155 = vpop.permute.xlu0 %3154
        %3156 = vrot.lane.b32.xlu0 %v3091, 126
        %v3157 = vpop.permute.xlu0 %3156
        %3158 = vrot.lane.b32.xlu0 %v3093, 126
        %v3159 = vpop.permute.xlu0 %3158
        %3160 = vrot.lane.b32.xlu0 %v3095, 126
        %v3161 = vpop.permute.xlu0 %3160
        %3162 = vrot.lane.b32.xlu0 %v3097, 126
        %v3163 = vpop.permute.xlu0 %3162
        %3164 = vrot.lane.b32.xlu0 %v3099, 126
        %v3165 = vpop.permute.xlu0 %3164
        %3166 = vrot.lane.b32.xlu0 %v3101, 126
        %v3167 = vpop.permute.xlu0 %3166
        %3168 = vrot.lane.b32.xlu0 %v3103, 126
        %v3169 = vpop.permute.xlu0 %3168
        %3170 = vrot.lane.b32.xlu0 %v3105, 126
        %v3171 = vpop.permute.xlu0 %3170
        %3172 = vrot.lane.b32.xlu0 %v3107, 126
        %v3173 = vpop.permute.xlu0 %3172
        %3174 = vrot.lane.b32.xlu0 %v3109, 126
        %v3175 = vpop.permute.xlu0 %3174
        %3176 = vrot.lane.b32.xlu0 %v3111, 126
        %v3177 = vpop.permute.xlu0 %3176
        %3178 = vrot.lane.b32.xlu0 %v3113, 126
        %v3179 = vpop.permute.xlu0 %3178
        %3180 = vrot.lane.b32.xlu0 %v3115, 126
        %v3181 = vpop.permute.xlu0 %3180
        %3182 = vrot.lane.b32.xlu0 %v3117, 126
        %v3183 = vpop.permute.xlu0 %3182
        %3184 = vrot.lane.b32.xlu0 %v3119, 126
        %v3185 = vpop.permute.xlu0 %3184
        %v3219 = vadd.f32 %v2792, %v3121
        %v3220 = vadd.f32 %v2793, %v3123
        %v3221 = vadd.f32 %v2794, %v3125
        %v3222 = vadd.f32 %v2795, %v3127
        %v3223 = vadd.f32 %v2796, %v3129
        %v3224 = vadd.f32 %v2797, %v3131
        %v3225 = vadd.f32 %v2798, %v3133
        %v3226 = vadd.f32 %v2799, %v3135
        %v3227 = vadd.f32 %v2800, %v3137
        %v3228 = vadd.f32 %v2801, %v3139
        %v3229 = vadd.f32 %v2802, %v3141
        %v3230 = vadd.f32 %v2803, %v3143
        %v3231 = vadd.f32 %v2804, %v3145
        %v3232 = vadd.f32 %v2805, %v3147
        %v3233 = vadd.f32 %v2806, %v3149
        %v3234 = vadd.f32 %v2807, %v3151
        %v3235 = vadd.f32 %v2808, %v3153
        %v3236 = vadd.f32 %v2809, %v3155
        %v3237 = vadd.f32 %v2810, %v3157
        %v3238 = vadd.f32 %v2811, %v3159
        %v3239 = vadd.f32 %v2812, %v3161
        %v3240 = vadd.f32 %v2813, %v3163
        %v3241 = vadd.f32 %v2814, %v3165
        %v3242 = vadd.f32 %v2815, %v3167
        %v3243 = vadd.f32 %v2816, %v3169
        %v3244 = vadd.f32 %v2817, %v3171
        %v3245 = vadd.f32 %v2818, %v3173
        %v3246 = vadd.f32 %v2819, %v3175
        %v3247 = vadd.f32 %v2820, %v3177
        %v3248 = vadd.f32 %v2821, %v3179
        %v3249 = vadd.f32 %v2822, %v3181
        %v3250 = vadd.f32 %v2823, %v3183
        %v3251 = vadd.f32 %v2824, %v3185
        %3252 = vrot.lane.b32.xlu0 %v2471, 3
        %v3253 = vpop.permute.xlu0 %3252
        %3254 = vrot.lane.b32.xlu0 %v2473, 3
        %v3255 = vpop.permute.xlu0 %3254
        %3256 = vrot.lane.b32.xlu0 %v2475, 3
        %v3257 = vpop.permute.xlu0 %3256
        %3258 = vrot.lane.b32.xlu0 %v2477, 3
        %v3259 = vpop.permute.xlu0 %3258
        %3260 = vrot.lane.b32.xlu0 %v2479, 3
        %v3261 = vpop.permute.xlu0 %3260
        %3262 = vrot.lane.b32.xlu0 %v2481, 3
        %v3263 = vpop.permute.xlu0 %3262
        %3264 = vrot.lane.b32.xlu0 %v2483, 3
        %v3265 = vpop.permute.xlu0 %3264
        %3266 = vrot.lane.b32.xlu0 %v2485, 3
        %v3267 = vpop.permute.xlu0 %3266
        %3268 = vrot.lane.b32.xlu0 %v2487, 3
        %v3269 = vpop.permute.xlu0 %3268
        %3270 = vrot.lane.b32.xlu0 %v2489, 3
        %v3271 = vpop.permute.xlu0 %3270
        %3272 = vrot.lane.b32.xlu0 %v2491, 3
        %v3273 = vpop.permute.xlu0 %3272
        %3274 = vrot.lane.b32.xlu0 %v2493, 3
        %v3275 = vpop.permute.xlu0 %3274
        %3276 = vrot.lane.b32.xlu0 %v2495, 3
        %v3277 = vpop.permute.xlu0 %3276
        %3278 = vrot.lane.b32.xlu0 %v2497, 3
        %v3279 = vpop.permute.xlu0 %3278
        %3280 = vrot.lane.b32.xlu0 %v2499, 3
        %v3281 = vpop.permute.xlu0 %3280
        %3282 = vrot.lane.b32.xlu0 %v2501, 3
        %v3283 = vpop.permute.xlu0 %3282
        %3284 = vrot.lane.b32.xlu0 %v2503, 3
        %v3285 = vpop.permute.xlu0 %3284
        %3286 = vrot.lane.b32.xlu0 %v2505, 3
        %v3287 = vpop.permute.xlu0 %3286
        %3288 = vrot.lane.b32.xlu0 %v2507, 3
        %v3289 = vpop.permute.xlu0 %3288
        %3290 = vrot.lane.b32.xlu0 %v2509, 3
        %v3291 = vpop.permute.xlu0 %3290
        %3292 = vrot.lane.b32.xlu0 %v2511, 3
        %v3293 = vpop.permute.xlu0 %3292
        %3294 = vrot.lane.b32.xlu0 %v2513, 3
        %v3295 = vpop.permute.xlu0 %3294
        %3296 = vrot.lane.b32.xlu0 %v2515, 3
        %v3297 = vpop.permute.xlu0 %3296
        %3298 = vrot.lane.b32.xlu0 %v2517, 3
        %v3299 = vpop.permute.xlu0 %3298
        %3300 = vrot.lane.b32.xlu0 %v2519, 3
        %v3301 = vpop.permute.xlu0 %3300
        %3302 = vrot.lane.b32.xlu0 %v2521, 3
        %v3303 = vpop.permute.xlu0 %3302
        %3304 = vrot.lane.b32.xlu0 %v2523, 3
        %v3305 = vpop.permute.xlu0 %3304
        %3306 = vrot.lane.b32.xlu0 %v2525, 3
        %v3307 = vpop.permute.xlu0 %3306
        %3308 = vrot.lane.b32.xlu0 %v2527, 3
        %v3309 = vpop.permute.xlu0 %3308
        %3310 = vrot.lane.b32.xlu0 %v2529, 3
        %v3311 = vpop.permute.xlu0 %3310
        %3312 = vrot.lane.b32.xlu0 %v2531, 3
        %v3313 = vpop.permute.xlu0 %3312
        %3314 = vrot.lane.b32.xlu0 %v2533, 3
        %v3315 = vpop.permute.xlu0 %3314
        %3316 = vrot.lane.b32.xlu0 %v2532, 3
        %v3317 = vpop.permute.xlu0 %3316
        %v3351 = vmul.f32 %v3253, 0.0
        %v3352 = vmul.f32 %v2280, %v3255
        %v3353 = vmul.f32 %v2283, %v3257
        %v3354 = vmul.f32 %v2288, %v3259
        %v3355 = vmul.f32 %v2291, %v3261
        %v3356 = vmul.f32 %v2296, %v3263
        %v3357 = vmul.f32 %v2299, %v3265
        %v3358 = vmul.f32 %v2304, %v3267
        %v3359 = vmul.f32 %v2307, %v3269
        %v3360 = vmul.f32 %v2312, %v3271
        %v3361 = vmul.f32 %v2315, %v3273
        %v3362 = vmul.f32 %v2320, %v3275
        %v3363 = vmul.f32 %v2323, %v3277
        %v3364 = vmul.f32 %v2328, %v3279
        %v3365 = vmul.f32 %v2331, %v3281
        %v3366 = vmul.f32 %v2336, %v3283
        %v3367 = vmul.f32 %v2339, %v3285
        %v3368 = vmul.f32 %v2344, %v3287
        %v3369 = vmul.f32 %v2347, %v3289
        %v3370 = vmul.f32 %v2352, %v3291
        %v3371 = vmul.f32 %v2355, %v3293
        %v3372 = vmul.f32 %v2360, %v3295
        %v3373 = vmul.f32 %v2363, %v3297
        %v3374 = vmul.f32 %v2368, %v3299
        %v3375 = vmul.f32 %v2371, %v3301
        %v3376 = vmul.f32 %v2376, %v3303
        %v3377 = vmul.f32 %v2379, %v3305
        %v3378 = vmul.f32 %v2384, %v3307
        %v3379 = vmul.f32 %v2387, %v3309
        %v3380 = vmul.f32 %v2392, %v3311
        %v3381 = vmul.f32 %v2395, %v3313
        %v3382 = vmul.f32 %v2400, %v3315
        %v3383 = vmul.f32 %v2403, %v3317
        %3417 = vrot.lane.b32.xlu0 %v3351, 125
        %v3418 = vpop.permute.xlu0 %3417
        %3419 = vrot.lane.b32.xlu0 %v3352, 125
        %v3420 = vpop.permute.xlu0 %3419
        %3421 = vrot.lane.b32.xlu0 %v3353, 125
        %v3422 = vpop.permute.xlu0 %3421
        %3423 = vrot.lane.b32.xlu0 %v3354, 125
        %v3424 = vpop.permute.xlu0 %3423
        %3425 = vrot.lane.b32.xlu0 %v3355, 125
        %v3426 = vpop.permute.xlu0 %3425
        %3427 = vrot.lane.b32.xlu0 %v3356, 125
        %v3428 = vpop.permute.xlu0 %3427
        %3429 = vrot.lane.b32.xlu0 %v3357, 125
        %v3430 = vpop.permute.xlu0 %3429
        %3431 = vrot.lane.b32.xlu0 %v3358, 125
        %v3432 = vpop.permute.xlu0 %3431
        %3433 = vrot.lane.b32.xlu0 %v3359, 125
        %v3434 = vpop.permute.xlu0 %3433
        %3435 = vrot.lane.b32.xlu0 %v3360, 125
        %v3436 = vpop.permute.xlu0 %3435
        %3437 = vrot.lane.b32.xlu0 %v3361, 125
        %v3438 = vpop.permute.xlu0 %3437
        %3439 = vrot.lane.b32.xlu0 %v3362, 125
        %v3440 = vpop.permute.xlu0 %3439
        %3441 = vrot.lane.b32.xlu0 %v3363, 125
        %v3442 = vpop.permute.xlu0 %3441
        %3443 = vrot.lane.b32.xlu0 %v3364, 125
        %v3444 = vpop.permute.xlu0 %3443
        %3445 = vrot.lane.b32.xlu0 %v3365, 125
        %v3446 = vpop.permute.xlu0 %3445
        %3447 = vrot.lane.b32.xlu0 %v3366, 125
        %v3448 = vpop.permute.xlu0 %3447
        %3449 = vrot.lane.b32.xlu0 %v3367, 125
        %v3450 = vpop.permute.xlu0 %3449
        %3451 = vrot.lane.b32.xlu0 %v3368, 125
        %v3452 = vpop.permute.xlu0 %3451
        %3453 = vrot.lane.b32.xlu0 %v3369, 125
        %v3454 = vpop.permute.xlu0 %3453
        %3455 = vrot.lane.b32.xlu0 %v3370, 125
        %v3456 = vpop.permute.xlu0 %3455
        %3457 = vrot.lane.b32.xlu0 %v3371, 125
        %v3458 = vpop.permute.xlu0 %3457
        %3459 = vrot.lane.b32.xlu0 %v3372, 125
        %v3460 = vpop.permute.xlu0 %3459
        %3461 = vrot.lane.b32.xlu0 %v3373, 125
        %v3462 = vpop.permute.xlu0 %3461
        %3463 = vrot.lane.b32.xlu0 %v3374, 125
        %v3464 = vpop.permute.xlu0 %3463
        %3465 = vrot.lane.b32.xlu0 %v3375, 125
        %v3466 = vpop.permute.xlu0 %3465
        %3467 = vrot.lane.b32.xlu0 %v3376, 125
        %v3468 = vpop.permute.xlu0 %3467
        %3469 = vrot.lane.b32.xlu0 %v3377, 125
        %v3470 = vpop.permute.xlu0 %3469
        %3471 = vrot.lane.b32.xlu0 %v3378, 125
        %v3472 = vpop.permute.xlu0 %3471
        %3473 = vrot.lane.b32.xlu0 %v3379, 125
        %v3474 = vpop.permute.xlu0 %3473
        %3475 = vrot.lane.b32.xlu0 %v3380, 125
        %v3476 = vpop.permute.xlu0 %3475
        %3477 = vrot.lane.b32.xlu0 %v3381, 125
        %v3478 = vpop.permute.xlu0 %3477
        %3479 = vrot.lane.b32.xlu0 %v3382, 125
        %v3480 = vpop.permute.xlu0 %3479
        %3481 = vrot.lane.b32.xlu0 %v3383, 125
        %v3482 = vpop.permute.xlu0 %3481
        %v3516 = vadd.f32 %v3219, %v3418
        %v3517 = vadd.f32 %v3220, %v3420
        %v3518 = vadd.f32 %v3221, %v3422
        %v3519 = vadd.f32 %v3222, %v3424
        %v3520 = vadd.f32 %v3223, %v3426
        %v3521 = vadd.f32 %v3224, %v3428
        %v3522 = vadd.f32 %v3225, %v3430
        %v3523 = vadd.f32 %v3226, %v3432
        %v3524 = vadd.f32 %v3227, %v3434
        %v3525 = vadd.f32 %v3228, %v3436
        %v3526 = vadd.f32 %v3229, %v3438
        %v3527 = vadd.f32 %v3230, %v3440
        %v3528 = vadd.f32 %v3231, %v3442
        %v3529 = vadd.f32 %v3232, %v3444
        %v3530 = vadd.f32 %v3233, %v3446
        %v3531 = vadd.f32 %v3234, %v3448
        %v3532 = vadd.f32 %v3235, %v3450
        %v3533 = vadd.f32 %v3236, %v3452
        %v3534 = vadd.f32 %v3237, %v3454
        %v3535 = vadd.f32 %v3238, %v3456
        %v3536 = vadd.f32 %v3239, %v3458
        %v3537 = vadd.f32 %v3240, %v3460
        %v3538 = vadd.f32 %v3241, %v3462
        %v3539 = vadd.f32 %v3242, %v3464
        %v3540 = vadd.f32 %v3243, %v3466
        %v3541 = vadd.f32 %v3244, %v3468
        %v3542 = vadd.f32 %v3245, %v3470
        %v3543 = vadd.f32 %v3246, %v3472
        %v3544 = vadd.f32 %v3247, %v3474
        %v3545 = vadd.f32 %v3248, %v3476
        %v3546 = vadd.f32 %v3249, %v3478
        %v3547 = vadd.f32 %v3250, %v3480
        %v3548 = vadd.f32 %v3251, %v3482
        %v3551 = vrot.slane %v2400, 1
        %v3552 = vsel %vm2470, %v2691, %v3551
        %v3553 = vrot.slane %v2403, 1
        %v3554 = vsel %vm2470, %v3551, %v3553
        %3555 = vrot.lane.b32.xlu0 %v2633, 124
        %v3556 = vpop.permute.xlu0 %3555
        %3557 = vrot.lane.b32.xlu0 %v2636, 124
        %v3558 = vpop.permute.xlu0 %3557
        %3559 = vrot.lane.b32.xlu0 %v2638, 124
        %v3560 = vpop.permute.xlu0 %3559
        %3561 = vrot.lane.b32.xlu0 %v2640, 124
        %v3562 = vpop.permute.xlu0 %3561
        %3563 = vrot.lane.b32.xlu0 %v2642, 124
        %v3564 = vpop.permute.xlu0 %3563
        %3565 = vrot.lane.b32.xlu0 %v2644, 124
        %v3566 = vpop.permute.xlu0 %3565
        %3567 = vrot.lane.b32.xlu0 %v2646, 124
        %v3568 = vpop.permute.xlu0 %3567
        %3569 = vrot.lane.b32.xlu0 %v2648, 124
        %v3570 = vpop.permute.xlu0 %3569
        %3571 = vrot.lane.b32.xlu0 %v2650, 124
        %v3572 = vpop.permute.xlu0 %3571
        %3573 = vrot.lane.b32.xlu0 %v2652, 124
        %v3574 = vpop.permute.xlu0 %3573
        %3575 = vrot.lane.b32.xlu0 %v2654, 124
        %v3576 = vpop.permute.xlu0 %3575
        %3577 = vrot.lane.b32.xlu0 %v2656, 124
        %v3578 = vpop.permute.xlu0 %3577
        %3579 = vrot.lane.b32.xlu0 %v2658, 124
        %v3580 = vpop.permute.xlu0 %3579
        %3581 = vrot.lane.b32.xlu0 %v2660, 124
        %v3582 = vpop.permute.xlu0 %3581
        %3583 = vrot.lane.b32.xlu0 %v2662, 124
        %v3584 = vpop.permute.xlu0 %3583
        %3585 = vrot.lane.b32.xlu0 %v2664, 124
        %v3586 = vpop.permute.xlu0 %3585
        %3587 = vrot.lane.b32.xlu0 %v2666, 124
        %v3588 = vpop.permute.xlu0 %3587
        %3589 = vrot.lane.b32.xlu0 %v2668, 124
        %v3590 = vpop.permute.xlu0 %3589
        %3591 = vrot.lane.b32.xlu0 %v2670, 124
        %v3592 = vpop.permute.xlu0 %3591
        %3593 = vrot.lane.b32.xlu0 %v2672, 124
        %v3594 = vpop.permute.xlu0 %3593
        %3595 = vrot.lane.b32.xlu0 %v2674, 124
        %v3596 = vpop.permute.xlu0 %3595
        %3597 = vrot.lane.b32.xlu0 %v2676, 124
        %v3598 = vpop.permute.xlu0 %3597
        %3599 = vrot.lane.b32.xlu0 %v2678, 124
        %v3600 = vpop.permute.xlu0 %3599
        %3601 = vrot.lane.b32.xlu0 %v2680, 124
        %v3602 = vpop.permute.xlu0 %3601
        %3603 = vrot.lane.b32.xlu0 %v2682, 124
        %v3604 = vpop.permute.xlu0 %3603
        %3605 = vrot.lane.b32.xlu0 %v2684, 124
        %v3606 = vpop.permute.xlu0 %3605
        %3607 = vrot.lane.b32.xlu0 %v2686, 124
        %v3608 = vpop.permute.xlu0 %3607
        %3609 = vrot.lane.b32.xlu0 %v2688, 124
        %v3610 = vpop.permute.xlu0 %3609
        %3611 = vrot.lane.b32.xlu0 %v2690, 124
        %v3612 = vpop.permute.xlu0 %3611
        %3613 = vrot.lane.b32.xlu0 %v2692, 124
        %v3614 = vpop.permute.xlu0 %3613
        %3615 = vrot.lane.b32.xlu0 %v3552, 124
        %v3616 = vpop.permute.xlu0 %3615
        %3617 = vrot.lane.b32.xlu0 %v3554, 124
        %v3618 = vpop.permute.xlu0 %3617
        %3619 = vrot.lane.b32.xlu0 %v3553, 124
        %v3620 = vpop.permute.xlu0 %3619
        %v3654 = vadd.f32 %v3516, %v3556
        %v3655 = vadd.f32 %v3517, %v3558
        %v3656 = vadd.f32 %v3518, %v3560
        %v3657 = vadd.f32 %v3519, %v3562
        %v3658 = vadd.f32 %v3520, %v3564
        %v3659 = vadd.f32 %v3521, %v3566
        %v3660 = vadd.f32 %v3522, %v3568
        %v3661 = vadd.f32 %v3523, %v3570
        %v3662 = vadd.f32 %v3524, %v3572
        %v3663 = vadd.f32 %v3525, %v3574
        %v3664 = vadd.f32 %v3526, %v3576
        %v3665 = vadd.f32 %v3527, %v3578
        %v3666 = vadd.f32 %v3528, %v3580
        %v3667 = vadd.f32 %v3529, %v3582
        %v3668 = vadd.f32 %v3530, %v3584
        %v3669 = vadd.f32 %v3531, %v3586
        %v3670 = vadd.f32 %v3532, %v3588
        %v3671 = vadd.f32 %v3533, %v3590
        %v3672 = vadd.f32 %v3534, %v3592
        %v3673 = vadd.f32 %v3535, %v3594
        %v3674 = vadd.f32 %v3536, %v3596
        %v3675 = vadd.f32 %v3537, %v3598
        %v3676 = vadd.f32 %v3538, %v3600
        %v3677 = vadd.f32 %v3539, %v3602
        %v3678 = vadd.f32 %v3540, %v3604
        %v3679 = vadd.f32 %v3541, %v3606
        %v3680 = vadd.f32 %v3542, %v3608
        %v3681 = vadd.f32 %v3543, %v3610
        %v3682 = vadd.f32 %v3544, %v3612
        %v3683 = vadd.f32 %v3545, %v3614
        %v3684 = vadd.f32 %v3546, %v3616
        %v3685 = vadd.f32 %v3547, %v3618
        %v3686 = vadd.f32 %v3548, %v3620
        %3687 = vrot.lane.b32.xlu0 %v2826, 4
        %v3688 = vpop.permute.xlu0 %3687
        %3689 = vrot.lane.b32.xlu0 %v2828, 4
        %v3690 = vpop.permute.xlu0 %3689
        %3691 = vrot.lane.b32.xlu0 %v2830, 4
        %v3692 = vpop.permute.xlu0 %3691
        %3693 = vrot.lane.b32.xlu0 %v2832, 4
        %v3694 = vpop.permute.xlu0 %3693
        %3695 = vrot.lane.b32.xlu0 %v2834, 4
        %v3696 = vpop.permute.xlu0 %3695
        %3697 = vrot.lane.b32.xlu0 %v2836, 4
        %v3698 = vpop.permute.xlu0 %3697
        %3699 = vrot.lane.b32.xlu0 %v2838, 4
        %v3700 = vpop.permute.xlu0 %3699
        %3701 = vrot.lane.b32.xlu0 %v2840, 4
        %v3702 = vpop.permute.xlu0 %3701
        %3703 = vrot.lane.b32.xlu0 %v2842, 4
        %v3704 = vpop.permute.xlu0 %3703
        %3705 = vrot.lane.b32.xlu0 %v2844, 4
        %v3706 = vpop.permute.xlu0 %3705
        %3707 = vrot.lane.b32.xlu0 %v2846, 4
        %v3708 = vpop.permute.xlu0 %3707
        %3709 = vrot.lane.b32.xlu0 %v2848, 4
        %v3710 = vpop.permute.xlu0 %3709
        %3711 = vrot.lane.b32.xlu0 %v2850, 4
        %v3712 = vpop.permute.xlu0 %3711
        %3713 = vrot.lane.b32.xlu0 %v2852, 4
        %v3714 = vpop.permute.xlu0 %3713
        %3715 = vrot.lane.b32.xlu0 %v2854, 4
        %v3716 = vpop.permute.xlu0 %3715
        %3717 = vrot.lane.b32.xlu0 %v2856, 4
        %v3718 = vpop.permute.xlu0 %3717
        %3719 = vrot.lane.b32.xlu0 %v2858, 4
        %v3720 = vpop.permute.xlu0 %3719
        %3721 = vrot.lane.b32.xlu0 %v2860, 4
        %v3722 = vpop.permute.xlu0 %3721
        %3723 = vrot.lane.b32.xlu0 %v2862, 4
        %v3724 = vpop.permute.xlu0 %3723
        %3725 = vrot.lane.b32.xlu0 %v2864, 4
        %v3726 = vpop.permute.xlu0 %3725
        %3727 = vrot.lane.b32.xlu0 %v2866, 4
        %v3728 = vpop.permute.xlu0 %3727
        %3729 = vrot.lane.b32.xlu0 %v2868, 4
        %v3730 = vpop.permute.xlu0 %3729
        %3731 = vrot.lane.b32.xlu0 %v2870, 4
        %v3732 = vpop.permute.xlu0 %3731
        %3733 = vrot.lane.b32.xlu0 %v2872, 4
        %v3734 = vpop.permute.xlu0 %3733
        %3735 = vrot.lane.b32.xlu0 %v2874, 4
        %v3736 = vpop.permute.xlu0 %3735
        %3737 = vrot.lane.b32.xlu0 %v2876, 4
        %v3738 = vpop.permute.xlu0 %3737
        %3739 = vrot.lane.b32.xlu0 %v2878, 4
        %v3740 = vpop.permute.xlu0 %3739
        %3741 = vrot.lane.b32.xlu0 %v2880, 4
        %v3742 = vpop.permute.xlu0 %3741
        %3743 = vrot.lane.b32.xlu0 %v2882, 4
        %v3744 = vpop.permute.xlu0 %3743
        %3745 = vrot.lane.b32.xlu0 %v2884, 4
        %v3746 = vpop.permute.xlu0 %3745
        %3747 = vrot.lane.b32.xlu0 %v2886, 4
        %v3748 = vpop.permute.xlu0 %3747
        %3749 = vrot.lane.b32.xlu0 %v2888, 4
        %v3750 = vpop.permute.xlu0 %3749
        %3751 = vrot.lane.b32.xlu0 %v2887, 4
        %v3752 = vpop.permute.xlu0 %3751
        %v3786 = vmul.f32 %v2280, %v3688
        %v3787 = vmul.f32 %v2283, %v3690
        %v3788 = vmul.f32 %v2288, %v3692
        %v3789 = vmul.f32 %v2291, %v3694
        %v3790 = vmul.f32 %v2296, %v3696
        %v3791 = vmul.f32 %v2299, %v3698
        %v3792 = vmul.f32 %v2304, %v3700
        %v3793 = vmul.f32 %v2307, %v3702
        %v3794 = vmul.f32 %v2312, %v3704
        %v3795 = vmul.f32 %v2315, %v3706
        %v3796 = vmul.f32 %v2320, %v3708
        %v3797 = vmul.f32 %v2323, %v3710
        %v3798 = vmul.f32 %v2328, %v3712
        %v3799 = vmul.f32 %v2331, %v3714
        %v3800 = vmul.f32 %v2336, %v3716
        %v3801 = vmul.f32 %v2339, %v3718
        %v3802 = vmul.f32 %v2344, %v3720
        %v3803 = vmul.f32 %v2347, %v3722
        %v3804 = vmul.f32 %v2352, %v3724
        %v3805 = vmul.f32 %v2355, %v3726
        %v3806 = vmul.f32 %v2360, %v3728
        %v3807 = vmul.f32 %v2363, %v3730
        %v3808 = vmul.f32 %v2368, %v3732
        %v3809 = vmul.f32 %v2371, %v3734
        %v3810 = vmul.f32 %v2376, %v3736
        %v3811 = vmul.f32 %v2379, %v3738
        %v3812 = vmul.f32 %v2384, %v3740
        %v3813 = vmul.f32 %v2387, %v3742
        %v3814 = vmul.f32 %v2392, %v3744
        %v3815 = vmul.f32 %v2395, %v3746
        %v3816 = vmul.f32 %v2400, %v3748
        %v3817 = vmul.f32 %v2403, %v3750
        %v3818 = vmul.f32 %v3752, 0.0
        %v3852 = vrot.slane %v3786, 2
        %v3853 = vrot.slane %v3787, 2
        %v3854 = vsel %vm3054, %v3852, %v3853
        %v3855 = vrot.slane %v3788, 2
        %v3856 = vsel %vm3054, %v3853, %v3855
        %v3857 = vrot.slane %v3789, 2
        %v3858 = vsel %vm3054, %v3855, %v3857
        %v3859 = vrot.slane %v3790, 2
        %v3860 = vsel %vm3054, %v3857, %v3859
        %v3861 = vrot.slane %v3791, 2
        %v3862 = vsel %vm3054, %v3859, %v3861
        %v3863 = vrot.slane %v3792, 2
        %v3864 = vsel %vm3054, %v3861, %v3863
        %v3865 = vrot.slane %v3793, 2
        %v3866 = vsel %vm3054, %v3863, %v3865
        %v3867 = vrot.slane %v3794, 2
        %v3868 = vsel %vm3054, %v3865, %v3867
        %v3869 = vrot.slane %v3795, 2
        %v3870 = vsel %vm3054, %v3867, %v3869
        %v3871 = vrot.slane %v3796, 2
        %v3872 = vsel %vm3054, %v3869, %v3871
        %v3873 = vrot.slane %v3797, 2
        %v3874 = vsel %vm3054, %v3871, %v3873
        %v3875 = vrot.slane %v3798, 2
        %v3876 = vsel %vm3054, %v3873, %v3875
        %v3877 = vrot.slane %v3799, 2
        %v3878 = vsel %vm3054, %v3875, %v3877
        %v3879 = vrot.slane %v3800, 2
        %v3880 = vsel %vm3054, %v3877, %v3879
        %v3881 = vrot.slane %v3801, 2
        %v3882 = vsel %vm3054, %v3879, %v3881
        %v3883 = vrot.slane %v3802, 2
        %v3884 = vsel %vm3054, %v3881, %v3883
        %v3885 = vrot.slane %v3803, 2
        %v3886 = vsel %vm3054, %v3883, %v3885
        %v3887 = vrot.slane %v3804, 2
        %v3888 = vsel %vm3054, %v3885, %v3887
        %v3889 = vrot.slane %v3805, 2
        %v3890 = vsel %vm3054, %v3887, %v3889
        %v3891 = vrot.slane %v3806, 2
        %v3892 = vsel %vm3054, %v3889, %v3891
        %v3893 = vrot.slane %v3807, 2
        %v3894 = vsel %vm3054, %v3891, %v3893
        %v3895 = vrot.slane %v3808, 2
        %v3896 = vsel %vm3054, %v3893, %v3895
        %v3897 = vrot.slane %v3809, 2
        %v3898 = vsel %vm3054, %v3895, %v3897
        %v3899 = vrot.slane %v3810, 2
        %v3900 = vsel %vm3054, %v3897, %v3899
        %v3901 = vrot.slane %v3811, 2
        %v3902 = vsel %vm3054, %v3899, %v3901
        %v3903 = vrot.slane %v3812, 2
        %v3904 = vsel %vm3054, %v3901, %v3903
        %v3905 = vrot.slane %v3813, 2
        %v3906 = vsel %vm3054, %v3903, %v3905
        %v3907 = vrot.slane %v3814, 2
        %v3908 = vsel %vm3054, %v3905, %v3907
        %v3909 = vrot.slane %v3815, 2
        %v3910 = vsel %vm3054, %v3907, %v3909
        %v3911 = vrot.slane %v3816, 2
        %v3912 = vsel %vm3054, %v3909, %v3911
        %v3913 = vrot.slane %v3817, 2
        %v3914 = vsel %vm3054, %v3911, %v3913
        %v3915 = vrot.slane %v3818, 2
        %v3916 = vsel %vm3054, %v3913, %v3915
        %3917 = vrot.lane.b32.xlu0 %v3852, 123
        %v3918 = vpop.permute.xlu0 %3917
        %3919 = vrot.lane.b32.xlu0 %v3854, 123
        %v3920 = vpop.permute.xlu0 %3919
        %3921 = vrot.lane.b32.xlu0 %v3856, 123
        %v3922 = vpop.permute.xlu0 %3921
        %3923 = vrot.lane.b32.xlu0 %v3858, 123
        %v3924 = vpop.permute.xlu0 %3923
        %3925 = vrot.lane.b32.xlu0 %v3860, 123
        %v3926 = vpop.permute.xlu0 %3925
        %3927 = vrot.lane.b32.xlu0 %v3862, 123
        %v3928 = vpop.permute.xlu0 %3927
        %3929 = vrot.lane.b32.xlu0 %v3864, 123
        %v3930 = vpop.permute.xlu0 %3929
        %3931 = vrot.lane.b32.xlu0 %v3866, 123
        %v3932 = vpop.permute.xlu0 %3931
        %3933 = vrot.lane.b32.xlu0 %v3868, 123
        %v3934 = vpop.permute.xlu0 %3933
        %3935 = vrot.lane.b32.xlu0 %v3870, 123
        %v3936 = vpop.permute.xlu0 %3935
        %3937 = vrot.lane.b32.xlu0 %v3872, 123
        %v3938 = vpop.permute.xlu0 %3937
        %3939 = vrot.lane.b32.xlu0 %v3874, 123
        %v3940 = vpop.permute.xlu0 %3939
        %3941 = vrot.lane.b32.xlu0 %v3876, 123
        %v3942 = vpop.permute.xlu0 %3941
        %3943 = vrot.lane.b32.xlu0 %v3878, 123
        %v3944 = vpop.permute.xlu0 %3943
        %3945 = vrot.lane.b32.xlu0 %v3880, 123
        %v3946 = vpop.permute.xlu0 %3945
        %3947 = vrot.lane.b32.xlu0 %v3882, 123
        %v3948 = vpop.permute.xlu0 %3947
        %3949 = vrot.lane.b32.xlu0 %v3884, 123
        %v3950 = vpop.permute.xlu0 %3949
        %3951 = vrot.lane.b32.xlu0 %v3886, 123
        %v3952 = vpop.permute.xlu0 %3951
        %3953 = vrot.lane.b32.xlu0 %v3888, 123
        %v3954 = vpop.permute.xlu0 %3953
        %3955 = vrot.lane.b32.xlu0 %v3890, 123
        %v3956 = vpop.permute.xlu0 %3955
        %3957 = vrot.lane.b32.xlu0 %v3892, 123
        %v3958 = vpop.permute.xlu0 %3957
        %3959 = vrot.lane.b32.xlu0 %v3894, 123
        %v3960 = vpop.permute.xlu0 %3959
        %3961 = vrot.lane.b32.xlu0 %v3896, 123
        %v3962 = vpop.permute.xlu0 %3961
        %3963 = vrot.lane.b32.xlu0 %v3898, 123
        %v3964 = vpop.permute.xlu0 %3963
        %3965 = vrot.lane.b32.xlu0 %v3900, 123
        %v3966 = vpop.permute.xlu0 %3965
        %3967 = vrot.lane.b32.xlu0 %v3902, 123
        %v3968 = vpop.permute.xlu0 %3967
        %3969 = vrot.lane.b32.xlu0 %v3904, 123
        %v3970 = vpop.permute.xlu0 %3969
        %3971 = vrot.lane.b32.xlu0 %v3906, 123
        %v3972 = vpop.permute.xlu0 %3971
        %3973 = vrot.lane.b32.xlu0 %v3908, 123
        %v3974 = vpop.permute.xlu0 %3973
        %3975 = vrot.lane.b32.xlu0 %v3910, 123
        %v3976 = vpop.permute.xlu0 %3975
        %3977 = vrot.lane.b32.xlu0 %v3912, 123
        %v3978 = vpop.permute.xlu0 %3977
        %3979 = vrot.lane.b32.xlu0 %v3914, 123
        %v3980 = vpop.permute.xlu0 %3979
        %3981 = vrot.lane.b32.xlu0 %v3916, 123
        %v3982 = vpop.permute.xlu0 %3981
        %v4016 = vadd.f32 %v3654, %v3918
        %v4017 = vadd.f32 %v3655, %v3920
        %v4018 = vadd.f32 %v3656, %v3922
        %v4019 = vadd.f32 %v3657, %v3924
        %v4020 = vadd.f32 %v3658, %v3926
        %v4021 = vadd.f32 %v3659, %v3928
        %v4022 = vadd.f32 %v3660, %v3930
        %v4023 = vadd.f32 %v3661, %v3932
        %v4024 = vadd.f32 %v3662, %v3934
        %v4025 = vadd.f32 %v3663, %v3936
        %v4026 = vadd.f32 %v3664, %v3938
        %v4027 = vadd.f32 %v3665, %v3940
        %v4028 = vadd.f32 %v3666, %v3942
        %v4029 = vadd.f32 %v3667, %v3944
        %v4030 = vadd.f32 %v3668, %v3946
        %v4031 = vadd.f32 %v3669, %v3948
        %v4032 = vadd.f32 %v3670, %v3950
        %v4033 = vadd.f32 %v3671, %v3952
        %v4034 = vadd.f32 %v3672, %v3954
        %v4035 = vadd.f32 %v3673, %v3956
        %v4036 = vadd.f32 %v3674, %v3958
        %v4037 = vadd.f32 %v3675, %v3960
        %v4038 = vadd.f32 %v3676, %v3962
        %v4039 = vadd.f32 %v3677, %v3964
        %v4040 = vadd.f32 %v3678, %v3966
        %v4041 = vadd.f32 %v3679, %v3968
        %v4042 = vadd.f32 %v3680, %v3970
        %v4043 = vadd.f32 %v3681, %v3972
        %v4044 = vadd.f32 %v3682, %v3974
        %v4045 = vadd.f32 %v3683, %v3976
        %v4046 = vadd.f32 %v3684, %v3978
        %v4047 = vadd.f32 %v3685, %v3980
        %v4048 = vadd.f32 %v3686, %v3982
        %4049 = vrot.lane.b32.xlu0 %v2471, 6
        %v4050 = vpop.permute.xlu0 %4049
        %4051 = vrot.lane.b32.xlu0 %v2473, 6
        %v4052 = vpop.permute.xlu0 %4051
        %4053 = vrot.lane.b32.xlu0 %v2475, 6
        %v4054 = vpop.permute.xlu0 %4053
        %4055 = vrot.lane.b32.xlu0 %v2477, 6
        %v4056 = vpop.permute.xlu0 %4055
        %4057 = vrot.lane.b32.xlu0 %v2479, 6
        %v4058 = vpop.permute.xlu0 %4057
        %4059 = vrot.lane.b32.xlu0 %v2481, 6
        %v4060 = vpop.permute.xlu0 %4059
        %4061 = vrot.lane.b32.xlu0 %v2483, 6
        %v4062 = vpop.permute.xlu0 %4061
        %4063 = vrot.lane.b32.xlu0 %v2485, 6
        %v4064 = vpop.permute.xlu0 %4063
        %4065 = vrot.lane.b32.xlu0 %v2487, 6
        %v4066 = vpop.permute.xlu0 %4065
        %4067 = vrot.lane.b32.xlu0 %v2489, 6
        %v4068 = vpop.permute.xlu0 %4067
        %4069 = vrot.lane.b32.xlu0 %v2491, 6
        %v4070 = vpop.permute.xlu0 %4069
        %4071 = vrot.lane.b32.xlu0 %v2493, 6
        %v4072 = vpop.permute.xlu0 %4071
        %4073 = vrot.lane.b32.xlu0 %v2495, 6
        %v4074 = vpop.permute.xlu0 %4073
        %4075 = vrot.lane.b32.xlu0 %v2497, 6
        %v4076 = vpop.permute.xlu0 %4075
        %4077 = vrot.lane.b32.xlu0 %v2499, 6
        %v4078 = vpop.permute.xlu0 %4077
        %4079 = vrot.lane.b32.xlu0 %v2501, 6
        %v4080 = vpop.permute.xlu0 %4079
        %4081 = vrot.lane.b32.xlu0 %v2503, 6
        %v4082 = vpop.permute.xlu0 %4081
        %4083 = vrot.lane.b32.xlu0 %v2505, 6
        %v4084 = vpop.permute.xlu0 %4083
        %4085 = vrot.lane.b32.xlu0 %v2507, 6
        %v4086 = vpop.permute.xlu0 %4085
        %4087 = vrot.lane.b32.xlu0 %v2509, 6
        %v4088 = vpop.permute.xlu0 %4087
        %4089 = vrot.lane.b32.xlu0 %v2511, 6
        %v4090 = vpop.permute.xlu0 %4089
        %4091 = vrot.lane.b32.xlu0 %v2513, 6
        %v4092 = vpop.permute.xlu0 %4091
        %4093 = vrot.lane.b32.xlu0 %v2515, 6
        %v4094 = vpop.permute.xlu0 %4093
        %4095 = vrot.lane.b32.xlu0 %v2517, 6
        %v4096 = vpop.permute.xlu0 %4095
        %4097 = vrot.lane.b32.xlu0 %v2519, 6
        %v4098 = vpop.permute.xlu0 %4097
        %4099 = vrot.lane.b32.xlu0 %v2521, 6
        %v4100 = vpop.permute.xlu0 %4099
        %4101 = vrot.lane.b32.xlu0 %v2523, 6
        %v4102 = vpop.permute.xlu0 %4101
        %4103 = vrot.lane.b32.xlu0 %v2525, 6
        %v4104 = vpop.permute.xlu0 %4103
        %4105 = vrot.lane.b32.xlu0 %v2527, 6
        %v4106 = vpop.permute.xlu0 %4105
        %4107 = vrot.lane.b32.xlu0 %v2529, 6
        %v4108 = vpop.permute.xlu0 %4107
        %4109 = vrot.lane.b32.xlu0 %v2531, 6
        %v4110 = vpop.permute.xlu0 %4109
        %4111 = vrot.lane.b32.xlu0 %v2533, 6
        %v4112 = vpop.permute.xlu0 %4111
        %4113 = vrot.lane.b32.xlu0 %v2532, 6
        %v4114 = vpop.permute.xlu0 %4113
        %v4148 = vmul.f32 %v2283, %v4050
        %v4149 = vmul.f32 %v2288, %v4052
        %v4150 = vmul.f32 %v2291, %v4054
        %v4151 = vmul.f32 %v2296, %v4056
        %v4152 = vmul.f32 %v2299, %v4058
        %v4153 = vmul.f32 %v2304, %v4060
        %v4154 = vmul.f32 %v2307, %v4062
        %v4155 = vmul.f32 %v2312, %v4064
        %v4156 = vmul.f32 %v2315, %v4066
        %v4157 = vmul.f32 %v2320, %v4068
        %v4158 = vmul.f32 %v2323, %v4070
        %v4159 = vmul.f32 %v2328, %v4072
        %v4160 = vmul.f32 %v2331, %v4074
        %v4161 = vmul.f32 %v2336, %v4076
        %v4162 = vmul.f32 %v2339, %v4078
        %v4163 = vmul.f32 %v2344, %v4080
        %v4164 = vmul.f32 %v2347, %v4082
        %v4165 = vmul.f32 %v2352, %v4084
        %v4166 = vmul.f32 %v2355, %v4086
        %v4167 = vmul.f32 %v2360, %v4088
        %v4168 = vmul.f32 %v2363, %v4090
        %v4169 = vmul.f32 %v2368, %v4092
        %v4170 = vmul.f32 %v2371, %v4094
        %v4171 = vmul.f32 %v2376, %v4096
        %v4172 = vmul.f32 %v2379, %v4098
        %v4173 = vmul.f32 %v2384, %v4100
        %v4174 = vmul.f32 %v2387, %v4102
        %v4175 = vmul.f32 %v2392, %v4104
        %v4176 = vmul.f32 %v2395, %v4106
        %v4177 = vmul.f32 %v2400, %v4108
        %v4178 = vmul.f32 %v2403, %v4110
        %v4179 = vmul.f32 %v4112, 0.0
        %v4180 = vmul.f32 %v4114, 0.0
        %4214 = vrot.lane.b32.xlu0 %v4148, 122
        %v4215 = vpop.permute.xlu0 %4214
        %4216 = vrot.lane.b32.xlu0 %v4149, 122
        %v4217 = vpop.permute.xlu0 %4216
        %4218 = vrot.lane.b32.xlu0 %v4150, 122
        %v4219 = vpop.permute.xlu0 %4218
        %4220 = vrot.lane.b32.xlu0 %v4151, 122
        %v4221 = vpop.permute.xlu0 %4220
        %4222 = vrot.lane.b32.xlu0 %v4152, 122
        %v4223 = vpop.permute.xlu0 %4222
        %4224 = vrot.lane.b32.xlu0 %v4153, 122
        %v4225 = vpop.permute.xlu0 %4224
        %4226 = vrot.lane.b32.xlu0 %v4154, 122
        %v4227 = vpop.permute.xlu0 %4226
        %4228 = vrot.lane.b32.xlu0 %v4155, 122
        %v4229 = vpop.permute.xlu0 %4228
        %4230 = vrot.lane.b32.xlu0 %v4156, 122
        %v4231 = vpop.permute.xlu0 %4230
        %4232 = vrot.lane.b32.xlu0 %v4157, 122
        %v4233 = vpop.permute.xlu0 %4232
        %4234 = vrot.lane.b32.xlu0 %v4158, 122
        %v4235 = vpop.permute.xlu0 %4234
        %4236 = vrot.lane.b32.xlu0 %v4159, 122
        %v4237 = vpop.permute.xlu0 %4236
        %4238 = vrot.lane.b32.xlu0 %v4160, 122
        %v4239 = vpop.permute.xlu0 %4238
        %4240 = vrot.lane.b32.xlu0 %v4161, 122
        %v4241 = vpop.permute.xlu0 %4240
        %4242 = vrot.lane.b32.xlu0 %v4162, 122
        %v4243 = vpop.permute.xlu0 %4242
        %4244 = vrot.lane.b32.xlu0 %v4163, 122
        %v4245 = vpop.permute.xlu0 %4244
        %4246 = vrot.lane.b32.xlu0 %v4164, 122
        %v4247 = vpop.permute.xlu0 %4246
        %4248 = vrot.lane.b32.xlu0 %v4165, 122
        %v4249 = vpop.permute.xlu0 %4248
        %4250 = vrot.lane.b32.xlu0 %v4166, 122
        %v4251 = vpop.permute.xlu0 %4250
        %4252 = vrot.lane.b32.xlu0 %v4167, 122
        %v4253 = vpop.permute.xlu0 %4252
        %4254 = vrot.lane.b32.xlu0 %v4168, 122
        %v4255 = vpop.permute.xlu0 %4254
        %4256 = vrot.lane.b32.xlu0 %v4169, 122
        %v4257 = vpop.permute.xlu0 %4256
        %4258 = vrot.lane.b32.xlu0 %v4170, 122
        %v4259 = vpop.permute.xlu0 %4258
        %4260 = vrot.lane.b32.xlu0 %v4171, 122
        %v4261 = vpop.permute.xlu0 %4260
        %4262 = vrot.lane.b32.xlu0 %v4172, 122
        %v4263 = vpop.permute.xlu0 %4262
        %4264 = vrot.lane.b32.xlu0 %v4173, 122
        %v4265 = vpop.permute.xlu0 %4264
        %4266 = vrot.lane.b32.xlu0 %v4174, 122
        %v4267 = vpop.permute.xlu0 %4266
        %4268 = vrot.lane.b32.xlu0 %v4175, 122
        %v4269 = vpop.permute.xlu0 %4268
        %4270 = vrot.lane.b32.xlu0 %v4176, 122
        %v4271 = vpop.permute.xlu0 %4270
        %4272 = vrot.lane.b32.xlu0 %v4177, 122
        %v4273 = vpop.permute.xlu0 %4272
        %4274 = vrot.lane.b32.xlu0 %v4178, 122
        %v4275 = vpop.permute.xlu0 %4274
        %4276 = vrot.lane.b32.xlu0 %v4179, 122
        %v4277 = vpop.permute.xlu0 %4276
        %4278 = vrot.lane.b32.xlu0 %v4180, 122
        %v4279 = vpop.permute.xlu0 %4278
        %v4313 = vadd.f32 %v4016, %v4215
        %v4314 = vadd.f32 %v4017, %v4217
        %v4315 = vadd.f32 %v4018, %v4219
        %v4316 = vadd.f32 %v4019, %v4221
        %v4317 = vadd.f32 %v4020, %v4223
        %v4318 = vadd.f32 %v4021, %v4225
        %v4319 = vadd.f32 %v4022, %v4227
        %v4320 = vadd.f32 %v4023, %v4229
        %v4321 = vadd.f32 %v4024, %v4231
        %v4322 = vadd.f32 %v4025, %v4233
        %v4323 = vadd.f32 %v4026, %v4235
        %v4324 = vadd.f32 %v4027, %v4237
        %v4325 = vadd.f32 %v4028, %v4239
        %v4326 = vadd.f32 %v4029, %v4241
        %v4327 = vadd.f32 %v4030, %v4243
        %v4328 = vadd.f32 %v4031, %v4245
        %v4329 = vadd.f32 %v4032, %v4247
        %v4330 = vadd.f32 %v4033, %v4249
        %v4331 = vadd.f32 %v4034, %v4251
        %v4332 = vadd.f32 %v4035, %v4253
        %v4333 = vadd.f32 %v4036, %v4255
        %v4334 = vadd.f32 %v4037, %v4257
        %v4335 = vadd.f32 %v4038, %v4259
        %v4336 = vadd.f32 %v4039, %v4261
        %v4337 = vadd.f32 %v4040, %v4263
        %v4338 = vadd.f32 %v4041, %v4265
        %v4339 = vadd.f32 %v4042, %v4267
        %v4340 = vadd.f32 %v4043, %v4269
        %v4341 = vadd.f32 %v4044, %v4271
        %v4342 = vadd.f32 %v4045, %v4273
        %v4343 = vadd.f32 %v4046, %v4275
        %v4344 = vadd.f32 %v4047, %v4277
        %v4345 = vadd.f32 %v4048, %v4279
        %v4346 = vsel %vm2470, %v3553, %v2631
        %4347 = vrot.lane.b32.xlu0 %v2637, 121
        %v4348 = vpop.permute.xlu0 %4347
        %4349 = vrot.lane.b32.xlu0 %v2640, 121
        %v4350 = vpop.permute.xlu0 %4349
        %4351 = vrot.lane.b32.xlu0 %v2642, 121
        %v4352 = vpop.permute.xlu0 %4351
        %4353 = vrot.lane.b32.xlu0 %v2644, 121
        %v4354 = vpop.permute.xlu0 %4353
        %4355 = vrot.lane.b32.xlu0 %v2646, 121
        %v4356 = vpop.permute.xlu0 %4355
        %4357 = vrot.lane.b32.xlu0 %v2648, 121
        %v4358 = vpop.permute.xlu0 %4357
        %4359 = vrot.lane.b32.xlu0 %v2650, 121
        %v4360 = vpop.permute.xlu0 %4359
        %4361 = vrot.lane.b32.xlu0 %v2652, 121
        %v4362 = vpop.permute.xlu0 %4361
        %4363 = vrot.lane.b32.xlu0 %v2654, 121
        %v4364 = vpop.permute.xlu0 %4363
        %4365 = vrot.lane.b32.xlu0 %v2656, 121
        %v4366 = vpop.permute.xlu0 %4365
        %4367 = vrot.lane.b32.xlu0 %v2658, 121
        %v4368 = vpop.permute.xlu0 %4367
        %4369 = vrot.lane.b32.xlu0 %v2660, 121
        %v4370 = vpop.permute.xlu0 %4369
        %4371 = vrot.lane.b32.xlu0 %v2662, 121
        %v4372 = vpop.permute.xlu0 %4371
        %4373 = vrot.lane.b32.xlu0 %v2664, 121
        %v4374 = vpop.permute.xlu0 %4373
        %4375 = vrot.lane.b32.xlu0 %v2666, 121
        %v4376 = vpop.permute.xlu0 %4375
        %4377 = vrot.lane.b32.xlu0 %v2668, 121
        %v4378 = vpop.permute.xlu0 %4377
        %4379 = vrot.lane.b32.xlu0 %v2670, 121
        %v4380 = vpop.permute.xlu0 %4379
        %4381 = vrot.lane.b32.xlu0 %v2672, 121
        %v4382 = vpop.permute.xlu0 %4381
        %4383 = vrot.lane.b32.xlu0 %v2674, 121
        %v4384 = vpop.permute.xlu0 %4383
        %4385 = vrot.lane.b32.xlu0 %v2676, 121
        %v4386 = vpop.permute.xlu0 %4385
        %4387 = vrot.lane.b32.xlu0 %v2678, 121
        %v4388 = vpop.permute.xlu0 %4387
        %4389 = vrot.lane.b32.xlu0 %v2680, 121
        %v4390 = vpop.permute.xlu0 %4389
        %4391 = vrot.lane.b32.xlu0 %v2682, 121
        %v4392 = vpop.permute.xlu0 %4391
        %4393 = vrot.lane.b32.xlu0 %v2684, 121
        %v4394 = vpop.permute.xlu0 %4393
        %4395 = vrot.lane.b32.xlu0 %v2686, 121
        %v4396 = vpop.permute.xlu0 %4395
        %4397 = vrot.lane.b32.xlu0 %v2688, 121
        %v4398 = vpop.permute.xlu0 %4397
        %4399 = vrot.lane.b32.xlu0 %v2690, 121
        %v4400 = vpop.permute.xlu0 %4399
        %4401 = vrot.lane.b32.xlu0 %v2692, 121
        %v4402 = vpop.permute.xlu0 %4401
        %4403 = vrot.lane.b32.xlu0 %v3552, 121
        %v4404 = vpop.permute.xlu0 %4403
        %4405 = vrot.lane.b32.xlu0 %v3554, 121
        %v4406 = vpop.permute.xlu0 %4405
        %4407 = vrot.lane.b32.xlu0 %v4346, 121
        %v4408 = vpop.permute.xlu0 %4407
        %4409 = vrot.lane.b32.xlu0 %v2632, 121
        %v4410 = vpop.permute.xlu0 %4409
        %4411 = vrot.lane.b32.xlu0 %v2631, 121
        %v4412 = vpop.permute.xlu0 %4411
        %v4446 = vadd.f32 %v4313, %v4348
        %v4447 = vadd.f32 %v4314, %v4350
        %v4448 = vadd.f32 %v4315, %v4352
        %v4449 = vadd.f32 %v4316, %v4354
        %v4450 = vadd.f32 %v4317, %v4356
        %v4451 = vadd.f32 %v4318, %v4358
        %v4452 = vadd.f32 %v4319, %v4360
        %v4453 = vadd.f32 %v4320, %v4362
        %v4454 = vadd.f32 %v4321, %v4364
        %v4455 = vadd.f32 %v4322, %v4366
        %v4456 = vadd.f32 %v4323, %v4368
        %v4457 = vadd.f32 %v4324, %v4370
        %v4458 = vadd.f32 %v4325, %v4372
        %v4459 = vadd.f32 %v4326, %v4374
        %v4460 = vadd.f32 %v4327, %v4376
        %v4461 = vadd.f32 %v4328, %v4378
        %v4462 = vadd.f32 %v4329, %v4380
        %v4463 = vadd.f32 %v4330, %v4382
        %v4464 = vadd.f32 %v4331, %v4384
        %v4465 = vadd.f32 %v4332, %v4386
        %v4466 = vadd.f32 %v4333, %v4388
        %v4467 = vadd.f32 %v4334, %v4390
        %v4468 = vadd.f32 %v4335, %v4392
        %v4469 = vadd.f32 %v4336, %v4394
        %v4470 = vadd.f32 %v4337, %v4396
        %v4471 = vadd.f32 %v4338, %v4398
        %v4472 = vadd.f32 %v4339, %v4400
        %v4473 = vadd.f32 %v4340, %v4402
        %v4474 = vadd.f32 %v4341, %v4404
        %v4475 = vadd.f32 %v4342, %v4406
        %v4476 = vadd.f32 %v4343, %v4408
        %v4477 = vadd.f32 %v4344, %v4410
        %v4478 = vadd.f32 %v4345, %v4412
        %4479 = vrot.lane.b32.xlu0 %v2826, 7
        %v4480 = vpop.permute.xlu0 %4479
        %4481 = vrot.lane.b32.xlu0 %v2828, 7
        %v4482 = vpop.permute.xlu0 %4481
        %4483 = vrot.lane.b32.xlu0 %v2830, 7
        %v4484 = vpop.permute.xlu0 %4483
        %4485 = vrot.lane.b32.xlu0 %v2832, 7
        %v4486 = vpop.permute.xlu0 %4485
        %4487 = vrot.lane.b32.xlu0 %v2834, 7
        %v4488 = vpop.permute.xlu0 %4487
        %4489 = vrot.lane.b32.xlu0 %v2836, 7
        %v4490 = vpop.permute.xlu0 %4489
        %4491 = vrot.lane.b32.xlu0 %v2838, 7
        %v4492 = vpop.permute.xlu0 %4491
        %4493 = vrot.lane.b32.xlu0 %v2840, 7
        %v4494 = vpop.permute.xlu0 %4493
        %4495 = vrot.lane.b32.xlu0 %v2842, 7
        %v4496 = vpop.permute.xlu0 %4495
        %4497 = vrot.lane.b32.xlu0 %v2844, 7
        %v4498 = vpop.permute.xlu0 %4497
        %4499 = vrot.lane.b32.xlu0 %v2846, 7
        %v4500 = vpop.permute.xlu0 %4499
        %4501 = vrot.lane.b32.xlu0 %v2848, 7
        %v4502 = vpop.permute.xlu0 %4501
        %4503 = vrot.lane.b32.xlu0 %v2850, 7
        %v4504 = vpop.permute.xlu0 %4503
        %4505 = vrot.lane.b32.xlu0 %v2852, 7
        %v4506 = vpop.permute.xlu0 %4505
        %4507 = vrot.lane.b32.xlu0 %v2854, 7
        %v4508 = vpop.permute.xlu0 %4507
        %4509 = vrot.lane.b32.xlu0 %v2856, 7
        %v4510 = vpop.permute.xlu0 %4509
        %4511 = vrot.lane.b32.xlu0 %v2858, 7
        %v4512 = vpop.permute.xlu0 %4511
        %4513 = vrot.lane.b32.xlu0 %v2860, 7
        %v4514 = vpop.permute.xlu0 %4513
        %4515 = vrot.lane.b32.xlu0 %v2862, 7
        %v4516 = vpop.permute.xlu0 %4515
        %4517 = vrot.lane.b32.xlu0 %v2864, 7
        %v4518 = vpop.permute.xlu0 %4517
        %4519 = vrot.lane.b32.xlu0 %v2866, 7
        %v4520 = vpop.permute.xlu0 %4519
        %4521 = vrot.lane.b32.xlu0 %v2868, 7
        %v4522 = vpop.permute.xlu0 %4521
        %4523 = vrot.lane.b32.xlu0 %v2870, 7
        %v4524 = vpop.permute.xlu0 %4523
        %4525 = vrot.lane.b32.xlu0 %v2872, 7
        %v4526 = vpop.permute.xlu0 %4525
        %4527 = vrot.lane.b32.xlu0 %v2874, 7
        %v4528 = vpop.permute.xlu0 %4527
        %4529 = vrot.lane.b32.xlu0 %v2876, 7
        %v4530 = vpop.permute.xlu0 %4529
        %4531 = vrot.lane.b32.xlu0 %v2878, 7
        %v4532 = vpop.permute.xlu0 %4531
        %4533 = vrot.lane.b32.xlu0 %v2880, 7
        %v4534 = vpop.permute.xlu0 %4533
        %4535 = vrot.lane.b32.xlu0 %v2882, 7
        %v4536 = vpop.permute.xlu0 %4535
        %4537 = vrot.lane.b32.xlu0 %v2884, 7
        %v4538 = vpop.permute.xlu0 %4537
        %4539 = vrot.lane.b32.xlu0 %v2886, 7
        %v4540 = vpop.permute.xlu0 %4539
        %4541 = vrot.lane.b32.xlu0 %v2888, 7
        %v4542 = vpop.permute.xlu0 %4541
        %4543 = vrot.lane.b32.xlu0 %v2887, 7
        %v4544 = vpop.permute.xlu0 %4543
        %v4578 = vmul.f32 %v2288, %v4480
        %v4579 = vmul.f32 %v2291, %v4482
        %v4580 = vmul.f32 %v2296, %v4484
        %v4581 = vmul.f32 %v2299, %v4486
        %v4582 = vmul.f32 %v2304, %v4488
        %v4583 = vmul.f32 %v2307, %v4490
        %v4584 = vmul.f32 %v2312, %v4492
        %v4585 = vmul.f32 %v2315, %v4494
        %v4586 = vmul.f32 %v2320, %v4496
        %v4587 = vmul.f32 %v2323, %v4498
        %v4588 = vmul.f32 %v2328, %v4500
        %v4589 = vmul.f32 %v2331, %v4502
        %v4590 = vmul.f32 %v2336, %v4504
        %v4591 = vmul.f32 %v2339, %v4506
        %v4592 = vmul.f32 %v2344, %v4508
        %v4593 = vmul.f32 %v2347, %v4510
        %v4594 = vmul.f32 %v2352, %v4512
        %v4595 = vmul.f32 %v2355, %v4514
        %v4596 = vmul.f32 %v2360, %v4516
        %v4597 = vmul.f32 %v2363, %v4518
        %v4598 = vmul.f32 %v2368, %v4520
        %v4599 = vmul.f32 %v2371, %v4522
        %v4600 = vmul.f32 %v2376, %v4524
        %v4601 = vmul.f32 %v2379, %v4526
        %v4602 = vmul.f32 %v2384, %v4528
        %v4603 = vmul.f32 %v2387, %v4530
        %v4604 = vmul.f32 %v2392, %v4532
        %v4605 = vmul.f32 %v2395, %v4534
        %v4606 = vmul.f32 %v2400, %v4536
        %v4607 = vmul.f32 %v2403, %v4538
        %v4608 = vmul.f32 %v4540, 0.0
        %v4609 = vmul.f32 %v4542, 0.0
        %v4610 = vmul.f32 %v4544, 0.0
        %v4644 = vrot.slane %v4578, 2
        %v4645 = vrot.slane %v4579, 2
        %v4646 = vsel %vm3054, %v4644, %v4645
        %v4647 = vrot.slane %v4580, 2
        %v4648 = vsel %vm3054, %v4645, %v4647
        %v4649 = vrot.slane %v4581, 2
        %v4650 = vsel %vm3054, %v4647, %v4649
        %v4651 = vrot.slane %v4582, 2
        %v4652 = vsel %vm3054, %v4649, %v4651
        %v4653 = vrot.slane %v4583, 2
        %v4654 = vsel %vm3054, %v4651, %v4653
        %v4655 = vrot.slane %v4584, 2
        %v4656 = vsel %vm3054, %v4653, %v4655
        %v4657 = vrot.slane %v4585, 2
        %v4658 = vsel %vm3054, %v4655, %v4657
        %v4659 = vrot.slane %v4586, 2
        %v4660 = vsel %vm3054, %v4657, %v4659
        %v4661 = vrot.slane %v4587, 2
        %v4662 = vsel %vm3054, %v4659, %v4661
        %v4663 = vrot.slane %v4588, 2
        %v4664 = vsel %vm3054, %v4661, %v4663
        %v4665 = vrot.slane %v4589, 2
        %v4666 = vsel %vm3054, %v4663, %v4665
        %v4667 = vrot.slane %v4590, 2
        %v4668 = vsel %vm3054, %v4665, %v4667
        %v4669 = vrot.slane %v4591, 2
        %v4670 = vsel %vm3054, %v4667, %v4669
        %v4671 = vrot.slane %v4592, 2
        %v4672 = vsel %vm3054, %v4669, %v4671
        %v4673 = vrot.slane %v4593, 2
        %v4674 = vsel %vm3054, %v4671, %v4673
        %v4675 = vrot.slane %v4594, 2
        %v4676 = vsel %vm3054, %v4673, %v4675
        %v4677 = vrot.slane %v4595, 2
        %v4678 = vsel %vm3054, %v4675, %v4677
        %v4679 = vrot.slane %v4596, 2
        %v4680 = vsel %vm3054, %v4677, %v4679
        %v4681 = vrot.slane %v4597, 2
        %v4682 = vsel %vm3054, %v4679, %v4681
        %v4683 = vrot.slane %v4598, 2
        %v4684 = vsel %vm3054, %v4681, %v4683
        %v4685 = vrot.slane %v4599, 2
        %v4686 = vsel %vm3054, %v4683, %v4685
        %v4687 = vrot.slane %v4600, 2
        %v4688 = vsel %vm3054, %v4685, %v4687
        %v4689 = vrot.slane %v4601, 2
        %v4690 = vsel %vm3054, %v4687, %v4689
        %v4691 = vrot.slane %v4602, 2
        %v4692 = vsel %vm3054, %v4689, %v4691
        %v4693 = vrot.slane %v4603, 2
        %v4694 = vsel %vm3054, %v4691, %v4693
        %v4695 = vrot.slane %v4604, 2
        %v4696 = vsel %vm3054, %v4693, %v4695
        %v4697 = vrot.slane %v4605, 2
        %v4698 = vsel %vm3054, %v4695, %v4697
        %v4699 = vrot.slane %v4606, 2
        %v4700 = vsel %vm3054, %v4697, %v4699
        %v4701 = vrot.slane %v4607, 2
        %v4702 = vsel %vm3054, %v4699, %v4701
        %v4703 = vrot.slane %v4608, 2
        %v4704 = vsel %vm3054, %v4701, %v4703
        %v4705 = vrot.slane %v4609, 2
        %v4706 = vsel %vm3054, %v4703, %v4705
        %v4707 = vrot.slane %v4610, 2
        %v4708 = vsel %vm3054, %v4705, %v4707
        %4709 = vrot.lane.b32.xlu0 %v4644, 120
        %v4710 = vpop.permute.xlu0 %4709
        %4711 = vrot.lane.b32.xlu0 %v4646, 120
        %v4712 = vpop.permute.xlu0 %4711
        %4713 = vrot.lane.b32.xlu0 %v4648, 120
        %v4714 = vpop.permute.xlu0 %4713
        %4715 = vrot.lane.b32.xlu0 %v4650, 120
        %v4716 = vpop.permute.xlu0 %4715
        %4717 = vrot.lane.b32.xlu0 %v4652, 120
        %v4718 = vpop.permute.xlu0 %4717
        %4719 = vrot.lane.b32.xlu0 %v4654, 120
        %v4720 = vpop.permute.xlu0 %4719
        %4721 = vrot.lane.b32.xlu0 %v4656, 120
        %v4722 = vpop.permute.xlu0 %4721
        %4723 = vrot.lane.b32.xlu0 %v4658, 120
        %v4724 = vpop.permute.xlu0 %4723
        %4725 = vrot.lane.b32.xlu0 %v4660, 120
        %v4726 = vpop.permute.xlu0 %4725
        %4727 = vrot.lane.b32.xlu0 %v4662, 120
        %v4728 = vpop.permute.xlu0 %4727
        %4729 = vrot.lane.b32.xlu0 %v4664, 120
        %v4730 = vpop.permute.xlu0 %4729
        %4731 = vrot.lane.b32.xlu0 %v4666, 120
        %v4732 = vpop.permute.xlu0 %4731
        %4733 = vrot.lane.b32.xlu0 %v4668, 120
        %v4734 = vpop.permute.xlu0 %4733
        %4735 = vrot.lane.b32.xlu0 %v4670, 120
        %v4736 = vpop.permute.xlu0 %4735
        %4737 = vrot.lane.b32.xlu0 %v4672, 120
        %v4738 = vpop.permute.xlu0 %4737
        %4739 = vrot.lane.b32.xlu0 %v4674, 120
        %v4740 = vpop.permute.xlu0 %4739
        %4741 = vrot.lane.b32.xlu0 %v4676, 120
        %v4742 = vpop.permute.xlu0 %4741
        %4743 = vrot.lane.b32.xlu0 %v4678, 120
        %v4744 = vpop.permute.xlu0 %4743
        %4745 = vrot.lane.b32.xlu0 %v4680, 120
        %v4746 = vpop.permute.xlu0 %4745
        %4747 = vrot.lane.b32.xlu0 %v4682, 120
        %v4748 = vpop.permute.xlu0 %4747
        %4749 = vrot.lane.b32.xlu0 %v4684, 120
        %v4750 = vpop.permute.xlu0 %4749
        %4751 = vrot.lane.b32.xlu0 %v4686, 120
        %v4752 = vpop.permute.xlu0 %4751
        %4753 = vrot.lane.b32.xlu0 %v4688, 120
        %v4754 = vpop.permute.xlu0 %4753
        %4755 = vrot.lane.b32.xlu0 %v4690, 120
        %v4756 = vpop.permute.xlu0 %4755
        %4757 = vrot.lane.b32.xlu0 %v4692, 120
        %v4758 = vpop.permute.xlu0 %4757
        %4759 = vrot.lane.b32.xlu0 %v4694, 120
        %v4760 = vpop.permute.xlu0 %4759
        %4761 = vrot.lane.b32.xlu0 %v4696, 120
        %v4762 = vpop.permute.xlu0 %4761
        %4763 = vrot.lane.b32.xlu0 %v4698, 120
        %v4764 = vpop.permute.xlu0 %4763
        %4765 = vrot.lane.b32.xlu0 %v4700, 120
        %v4766 = vpop.permute.xlu0 %4765
        %4767 = vrot.lane.b32.xlu0 %v4702, 120
        %v4768 = vpop.permute.xlu0 %4767
        %4769 = vrot.lane.b32.xlu0 %v4704, 120
        %v4770 = vpop.permute.xlu0 %4769
        %4771 = vrot.lane.b32.xlu0 %v4706, 120
        %v4772 = vpop.permute.xlu0 %4771
        %4773 = vrot.lane.b32.xlu0 %v4708, 120
        %v4774 = vpop.permute.xlu0 %4773
        %v4808 = vadd.f32 %v4446, %v4710
        %v4809 = vadd.f32 %v4447, %v4712
        %v4810 = vadd.f32 %v4448, %v4714
        %v4811 = vadd.f32 %v4449, %v4716
        %v4812 = vadd.f32 %v4450, %v4718
        %v4813 = vadd.f32 %v4451, %v4720
        %v4814 = vadd.f32 %v4452, %v4722
        %v4815 = vadd.f32 %v4453, %v4724
        %v4816 = vadd.f32 %v4454, %v4726
        %v4817 = vadd.f32 %v4455, %v4728
        %v4818 = vadd.f32 %v4456, %v4730
        %v4819 = vadd.f32 %v4457, %v4732
        %v4820 = vadd.f32 %v4458, %v4734
        %v4821 = vadd.f32 %v4459, %v4736
        %v4822 = vadd.f32 %v4460, %v4738
        %v4823 = vadd.f32 %v4461, %v4740
        %v4824 = vadd.f32 %v4462, %v4742
        %v4825 = vadd.f32 %v4463, %v4744
        %v4826 = vadd.f32 %v4464, %v4746
        %v4827 = vadd.f32 %v4465, %v4748
        %v4828 = vadd.f32 %v4466, %v4750
        %v4829 = vadd.f32 %v4467, %v4752
        %v4830 = vadd.f32 %v4468, %v4754
        %v4831 = vadd.f32 %v4469, %v4756
        %v4832 = vadd.f32 %v4470, %v4758
        %v4833 = vadd.f32 %v4471, %v4760
        %v4834 = vadd.f32 %v4472, %v4762
        %v4835 = vadd.f32 %v4473, %v4764
        %v4836 = vadd.f32 %v4474, %v4766
        %v4837 = vadd.f32 %v4475, %v4768
        %v4838 = vadd.f32 %v4476, %v4770
        %v4839 = vadd.f32 %v4477, %v4772
        %v4840 = vadd.f32 %v4478, %v4774
        %v4841 = vld [vmem:[%s11] sm:$0xf]
        %v4842 = vld [vmem:[%s11 + $0x4] sm:$0xf]
        %v4843 = vld [vmem:[%s11 + $0x8] sm:$0xf]
        %v4844 = vld [vmem:[%s11 + $0xc] sm:$0xf]
        %v4845 = vld [vmem:[%s11 + $0x10] sm:$0xf]
        %v4846 = vld [vmem:[%s11 + $0x14] sm:$0xf]
        %v4847 = vld [vmem:[%s11 + $0x18] sm:$0xf]
        %v4848 = vld [vmem:[%s11 + $0x1c] sm:$0xf]
        %v4849 = vld [vmem:[%s11 + $0x20] sm:$0xf]
        %v4850 = vld [vmem:[%s11 + $0x24] sm:$0xf]
        %v4851 = vld [vmem:[%s11 + $0x28] sm:$0xf]
        %v4852 = vld [vmem:[%s11 + $0x2c] sm:$0xf]
        %v4853 = vld [vmem:[%s11 + $0x30] sm:$0xf]
        %v4854 = vld [vmem:[%s11 + $0x34] sm:$0xf]
        %v4855 = vld [vmem:[%s11 + $0x38] sm:$0xf]
        %v4856 = vld [vmem:[%s11 + $0x3c] sm:$0xf]
        %v4857 = vld [vmem:[%s11 + $0x40] sm:$0xf]
        %v4858 = vld [vmem:[%s11 + $0x44] sm:$0xf]
        %v4859 = vld [vmem:[%s11 + $0x48] sm:$0xf]
        %v4860 = vld [vmem:[%s11 + $0x4c] sm:$0xf]
        %v4861 = vld [vmem:[%s11 + $0x50] sm:$0xf]
        %v4862 = vld [vmem:[%s11 + $0x54] sm:$0xf]
        %v4863 = vld [vmem:[%s11 + $0x58] sm:$0xf]
        %v4864 = vld [vmem:[%s11 + $0x5c] sm:$0xf]
        %v4865 = vld [vmem:[%s11 + $0x60] sm:$0xf]
        %v4866 = vld [vmem:[%s11 + $0x64] sm:$0xf]
        %v4867 = vld [vmem:[%s11 + $0x68] sm:$0xf]
        %v4868 = vld [vmem:[%s11 + $0x6c] sm:$0xf]
        %v4869 = vld [vmem:[%s11 + $0x70] sm:$0xf]
        %v4870 = vld [vmem:[%s11 + $0x74] sm:$0xf]
        %v4871 = vld [vmem:[%s11 + $0x78] sm:$0xf]
        %v4872 = vld [vmem:[%s11 + $0x7c] sm:$0xf]
        %v4873 = vunpack.c.l.bf16 %v4841
        %v4874 = vunpack.c.l.bf16 %v4842
        %v4875 = vunpack.c.l.bf16 %v4843
        %v4876 = vunpack.c.l.bf16 %v4844
        %v4877 = vunpack.c.l.bf16 %v4845
        %v4878 = vunpack.c.l.bf16 %v4846
        %v4879 = vunpack.c.l.bf16 %v4847
        %v4880 = vunpack.c.l.bf16 %v4848
        %v4881 = vunpack.c.l.bf16 %v4849
        %v4882 = vunpack.c.l.bf16 %v4850
        %v4883 = vunpack.c.l.bf16 %v4851
        %v4884 = vunpack.c.l.bf16 %v4852
        %v4885 = vunpack.c.l.bf16 %v4853
        %v4886 = vunpack.c.l.bf16 %v4854
        %v4887 = vunpack.c.l.bf16 %v4855
        %v4888 = vunpack.c.l.bf16 %v4856
        %v4889 = vunpack.c.l.bf16 %v4857
        %v4890 = vunpack.c.l.bf16 %v4858
        %v4891 = vunpack.c.l.bf16 %v4859
        %v4892 = vunpack.c.l.bf16 %v4860
        %v4893 = vunpack.c.l.bf16 %v4861
        %v4894 = vunpack.c.l.bf16 %v4862
        %v4895 = vunpack.c.l.bf16 %v4863
        %v4896 = vunpack.c.l.bf16 %v4864
        %v4897 = vunpack.c.l.bf16 %v4865
        %v4898 = vunpack.c.l.bf16 %v4866
        %v4899 = vunpack.c.l.bf16 %v4867
        %v4900 = vunpack.c.l.bf16 %v4868
        %v4901 = vunpack.c.l.bf16 %v4869
        %v4902 = vunpack.c.l.bf16 %v4870
        %v4903 = vunpack.c.l.bf16 %v4871
        %v4904 = vunpack.c.l.bf16 %v4872
        %4906 = vset.pattern.permute.xlu0 0
        %4907 = vperm.xlu0 %4906, %v4808
        %v4908 = vpop.permute.xlu0 %4907
        %4911 = vset.pattern.permute.xlu0 0
        %4912 = vperm.xlu0 %4911, %v4809
        %v4913 = vpop.permute.xlu0 %4912
        %4916 = vset.pattern.permute.xlu0 0
        %4917 = vperm.xlu0 %4916, %v4810
        %v4918 = vpop.permute.xlu0 %4917
        %4921 = vset.pattern.permute.xlu0 0
        %4922 = vperm.xlu0 %4921, %v4811
        %v4923 = vpop.permute.xlu0 %4922
        %4926 = vset.pattern.permute.xlu0 0
        %4927 = vperm.xlu0 %4926, %v4812
        %v4928 = vpop.permute.xlu0 %4927
        %4931 = vset.pattern.permute.xlu0 0
        %4932 = vperm.xlu0 %4931, %v4813
        %v4933 = vpop.permute.xlu0 %4932
        %4936 = vset.pattern.permute.xlu0 0
        %4937 = vperm.xlu0 %4936, %v4814
        %v4938 = vpop.permute.xlu0 %4937
        %4941 = vset.pattern.permute.xlu0 0
        %4942 = vperm.xlu0 %4941, %v4815
        %v4943 = vpop.permute.xlu0 %4942
        %4946 = vset.pattern.permute.xlu0 0
        %4947 = vperm.xlu0 %4946, %v4816
        %v4948 = vpop.permute.xlu0 %4947
        %4951 = vset.pattern.permute.xlu0 0
        %4952 = vperm.xlu0 %4951, %v4817
        %v4953 = vpop.permute.xlu0 %4952
        %4956 = vset.pattern.permute.xlu0 0
        %4957 = vperm.xlu0 %4956, %v4818
        %v4958 = vpop.permute.xlu0 %4957
        %4961 = vset.pattern.permute.xlu0 0
        %4962 = vperm.xlu0 %4961, %v4819
        %v4963 = vpop.permute.xlu0 %4962
        %4966 = vset.pattern.permute.xlu0 0
        %4967 = vperm.xlu0 %4966, %v4820
        %v4968 = vpop.permute.xlu0 %4967
        %4971 = vset.pattern.permute.xlu0 0
        %4972 = vperm.xlu0 %4971, %v4821
        %v4973 = vpop.permute.xlu0 %4972
        %4976 = vset.pattern.permute.xlu0 0
        %4977 = vperm.xlu0 %4976, %v4822
        %v4978 = vpop.permute.xlu0 %4977
        %4981 = vset.pattern.permute.xlu0 0
        %4982 = vperm.xlu0 %4981, %v4823
        %v4983 = vpop.permute.xlu0 %4982
        %4986 = vset.pattern.permute.xlu0 0
        %4987 = vperm.xlu0 %4986, %v4824
        %v4988 = vpop.permute.xlu0 %4987
        %4991 = vset.pattern.permute.xlu0 0
        %4992 = vperm.xlu0 %4991, %v4825
        %v4993 = vpop.permute.xlu0 %4992
        %4996 = vset.pattern.permute.xlu0 0
        %4997 = vperm.xlu0 %4996, %v4826
        %v4998 = vpop.permute.xlu0 %4997
        %5001 = vset.pattern.permute.xlu0 0
        %5002 = vperm.xlu0 %5001, %v4827
        %v5003 = vpop.permute.xlu0 %5002
        %5006 = vset.pattern.permute.xlu0 0
        %5007 = vperm.xlu0 %5006, %v4828
        %v5008 = vpop.permute.xlu0 %5007
        %5011 = vset.pattern.permute.xlu0 0
        %5012 = vperm.xlu0 %5011, %v4829
        %v5013 = vpop.permute.xlu0 %5012
        %5016 = vset.pattern.permute.xlu0 0
        %5017 = vperm.xlu0 %5016, %v4830
        %v5018 = vpop.permute.xlu0 %5017
        %5021 = vset.pattern.permute.xlu0 0
        %5022 = vperm.xlu0 %5021, %v4831
        %v5023 = vpop.permute.xlu0 %5022
        %5026 = vset.pattern.permute.xlu0 0
        %5027 = vperm.xlu0 %5026, %v4832
        %v5028 = vpop.permute.xlu0 %5027
        %5031 = vset.pattern.permute.xlu0 0
        %5032 = vperm.xlu0 %5031, %v4833
        %v5033 = vpop.permute.xlu0 %5032
        %5036 = vset.pattern.permute.xlu0 0
        %5037 = vperm.xlu0 %5036, %v4834
        %v5038 = vpop.permute.xlu0 %5037
        %5041 = vset.pattern.permute.xlu0 0
        %5042 = vperm.xlu0 %5041, %v4835
        %v5043 = vpop.permute.xlu0 %5042
        %5046 = vset.pattern.permute.xlu0 0
        %5047 = vperm.xlu0 %5046, %v4836
        %v5048 = vpop.permute.xlu0 %5047
        %5051 = vset.pattern.permute.xlu0 0
        %5052 = vperm.xlu0 %5051, %v4837
        %v5053 = vpop.permute.xlu0 %5052
        %5056 = vset.pattern.permute.xlu0 0
        %5057 = vperm.xlu0 %5056, %v4838
        %v5058 = vpop.permute.xlu0 %5057
        %5061 = vset.pattern.permute.xlu0 0
        %5062 = vperm.xlu0 %5061, %v4839
        %v5063 = vpop.permute.xlu0 %5062
        %5066 = vset.pattern.permute.xlu0 0
        %5067 = vperm.xlu0 %5066, %v4840
        %v5068 = vpop.permute.xlu0 %5067
        %v5102 = vrot.slane %v4873, 1
        %v5103 = vrot.slane %v4874, 1
        %v5104 = vsel %vm2470, %v5102, %v5103
        %v5105 = vrot.slane %v4875, 1
        %v5106 = vsel %vm2470, %v5103, %v5105
        %v5107 = vrot.slane %v4876, 1
        %v5108 = vsel %vm2470, %v5105, %v5107
        %v5109 = vrot.slane %v4877, 1
        %v5110 = vsel %vm2470, %v5107, %v5109
        %v5111 = vrot.slane %v4878, 1
        %v5112 = vsel %vm2470, %v5109, %v5111
        %v5113 = vrot.slane %v4879, 1
        %v5114 = vsel %vm2470, %v5111, %v5113
        %v5115 = vrot.slane %v4880, 1
        %v5116 = vsel %vm2470, %v5113, %v5115
        %v5117 = vrot.slane %v4881, 1
        %v5118 = vsel %vm2470, %v5115, %v5117
        %v5119 = vrot.slane %v4882, 1
        %v5120 = vsel %vm2470, %v5117, %v5119
        %v5121 = vrot.slane %v4883, 1
        %v5122 = vsel %vm2470, %v5119, %v5121
        %v5123 = vrot.slane %v4884, 1
        %v5124 = vsel %vm2470, %v5121, %v5123
        %v5125 = vrot.slane %v4885, 1
        %v5126 = vsel %vm2470, %v5123, %v5125
        %v5127 = vrot.slane %v4886, 1
        %v5128 = vsel %vm2470, %v5125, %v5127
        %v5129 = vrot.slane %v4887, 1
        %v5130 = vsel %vm2470, %v5127, %v5129
        %v5131 = vrot.slane %v4888, 1
        %v5132 = vsel %vm2470, %v5129, %v5131
        %v5133 = vrot.slane %v4889, 1
        %v5134 = vsel %vm2470, %v5131, %v5133
        %v5135 = vrot.slane %v4890, 1
        %v5136 = vsel %vm2470, %v5133, %v5135
        %v5137 = vrot.slane %v4891, 1
        %v5138 = vsel %vm2470, %v5135, %v5137
        %v5139 = vrot.slane %v4892, 1
        %v5140 = vsel %vm2470, %v5137, %v5139
        %v5141 = vrot.slane %v4893, 1
        %v5142 = vsel %vm2470, %v5139, %v5141
        %v5143 = vrot.slane %v4894, 1
        %v5144 = vsel %vm2470, %v5141, %v5143
        %v5145 = vrot.slane %v4895, 1
        %v5146 = vsel %vm2470, %v5143, %v5145
        %v5147 = vrot.slane %v4896, 1
        %v5148 = vsel %vm2470, %v5145, %v5147
        %v5149 = vrot.slane %v4897, 1
        %v5150 = vsel %vm2470, %v5147, %v5149
        %v5151 = vrot.slane %v4898, 1
        %v5152 = vsel %vm2470, %v5149, %v5151
        %v5153 = vrot.slane %v4899, 1
        %v5154 = vsel %vm2470, %v5151, %v5153
        %v5155 = vrot.slane %v4900, 1
        %v5156 = vsel %vm2470, %v5153, %v5155
        %v5157 = vrot.slane %v4901, 1
        %v5158 = vsel %vm2470, %v5155, %v5157
        %v5159 = vrot.slane %v4902, 1
        %v5160 = vsel %vm2470, %v5157, %v5159
        %v5161 = vrot.slane %v4903, 1
        %v5162 = vsel %vm2470, %v5159, %v5161
        %v5163 = vrot.slane %v4904, 1
        %v5164 = vsel %vm2470, %v5161, %v5163
        %v5198 = vmul.f32 %v4908, %v5102
        %v5199 = vmul.f32 %v4913, %v5104
        %v5200 = vmul.f32 %v4918, %v5106
        %v5201 = vmul.f32 %v4923, %v5108
        %v5202 = vmul.f32 %v4928, %v5110
        %v5203 = vmul.f32 %v4933, %v5112
        %v5204 = vmul.f32 %v4938, %v5114
        %v5205 = vmul.f32 %v4943, %v5116
        %v5206 = vmul.f32 %v4948, %v5118
        %v5207 = vmul.f32 %v4953, %v5120
        %v5208 = vmul.f32 %v4958, %v5122
        %v5209 = vmul.f32 %v4963, %v5124
        %v5210 = vmul.f32 %v4968, %v5126
        %v5211 = vmul.f32 %v4973, %v5128
        %v5212 = vmul.f32 %v4978, %v5130
        %v5213 = vmul.f32 %v4983, %v5132
        %v5214 = vmul.f32 %v4988, %v5134
        %v5215 = vmul.f32 %v4993, %v5136
        %v5216 = vmul.f32 %v4998, %v5138
        %v5217 = vmul.f32 %v5003, %v5140
        %v5218 = vmul.f32 %v5008, %v5142
        %v5219 = vmul.f32 %v5013, %v5144
        %v5220 = vmul.f32 %v5018, %v5146
        %v5221 = vmul.f32 %v5023, %v5148
        %v5222 = vmul.f32 %v5028, %v5150
        %v5223 = vmul.f32 %v5033, %v5152
        %v5224 = vmul.f32 %v5038, %v5154
        %v5225 = vmul.f32 %v5043, %v5156
        %v5226 = vmul.f32 %v5048, %v5158
        %v5227 = vmul.f32 %v5053, %v5160
        %v5228 = vmul.f32 %v5058, %v5162
        %v5229 = vmul.f32 %v5063, %v5164
        %v5230 = vmul.f32 %v5068, %v5163
        %v5231 = vpack.c.bf16 %v5199, %v5198
        %v5232 = vpack.c.bf16 %v5201, %v5200
        %v5233 = vpack.c.bf16 %v5203, %v5202
        %v5234 = vpack.c.bf16 %v5205, %v5204
        %v5235 = vpack.c.bf16 %v5207, %v5206
        %v5236 = vpack.c.bf16 %v5209, %v5208
        %v5237 = vpack.c.bf16 %v5211, %v5210
        %v5238 = vpack.c.bf16 %v5213, %v5212
        %v5239 = vpack.c.bf16 %v5215, %v5214
        %v5240 = vpack.c.bf16 %v5217, %v5216
        %v5241 = vpack.c.bf16 %v5219, %v5218
        %v5242 = vpack.c.bf16 %v5221, %v5220
        %v5243 = vpack.c.bf16 %v5223, %v5222
        %v5244 = vpack.c.bf16 %v5225, %v5224
        %v5245 = vpack.c.bf16 %v5227, %v5226
        %v5246 = vpack.c.bf16 %v5229, %v5228
        %v5247 = vpack.c.bf16 %v5230, %v5230
        %v5248 = vld [vmem:[%s10] sm:$0xff]
        %v5249 = vld [vmem:[%s10 + $0x8] sm:$0xff]
        %v5250 = vld [vmem:[%s10 + $0x10] sm:$0xff]
        %v5251 = vld [vmem:[%s10 + $0x18] sm:$0xff]
        %v5252 = vld [vmem:[%s10 + $0x20] sm:$0xff]
        %v5253 = vld [vmem:[%s10 + $0x28] sm:$0xff]
        %v5254 = vld [vmem:[%s10 + $0x30] sm:$0xff]
        %v5255 = vld [vmem:[%s10 + $0x38] sm:$0xff]
        %v5256 = vld [vmem:[#allocation2] sm:$0x1]
        %v5258 = vlaneseq
        %v5259 = vshrl.u32 %v5258, 7
        %v5260 = vsub.s32 0, %v5259
        %v5261 = vrot.slane %v5256, %v5260
        %5262 = vset.pattern.permute.xlu0 0
        %5263 = vperm.xlu0 %5262, %v5261
        %v5264 = vpop.permute.xlu0 %5263
        %v5274 = vunpack.c.l.b16 %v5248
        %v5275 = vunpack.c.h.b16 %v5248
        %v5276 = vunpack.c.l.b16 %v5249
        %v5277 = vunpack.c.h.b16 %v5249
        %v5278 = vunpack.c.l.b16 %v5250
        %v5279 = vunpack.c.h.b16 %v5250
        %v5280 = vunpack.c.l.b16 %v5251
        %v5281 = vunpack.c.h.b16 %v5251
        %v5282 = vunpack.c.l.b16 %v5252
        %v5283 = vunpack.c.h.b16 %v5252
        %v5284 = vunpack.c.l.b16 %v5253
        %v5285 = vunpack.c.h.b16 %v5253
        %v5286 = vunpack.c.l.b16 %v5254
        %v5287 = vunpack.c.h.b16 %v5254
        %v5288 = vunpack.c.l.b16 %v5255
        %v5289 = vunpack.c.h.b16 %v5255
        %v5290 = vpack.c.b16 %v5276, %v5274
        %v5291 = vpack.c.b16 %v5277, %v5275
        %v5292 = vpack.c.b16 %v5280, %v5278
        %v5293 = vpack.c.b16 %v5281, %v5279
        %v5294 = vpack.c.b16 %v5284, %v5282
        %v5295 = vpack.c.b16 %v5285, %v5283
        %v5296 = vpack.c.b16 %v5288, %v5286
        %v5297 = vpack.c.b16 %v5289, %v5287
        %vm5306 = vsmask.f32 4352
        %v5308 = vshrl.u32 %v5231, 16
        %v5310 = vrot.slane %v5308, 3
        %v5311 = vshll.u32 %v5231, 16
        %v5313 = vrot.slane %v5311, 4
        %v5314 = vor.u32 %v5310, %v5313
        %v5316 = vshrl.u32 %v5232, 16
        %v5318 = vrot.slane %v5316, 3
        %v5319 = vshll.u32 %v5232, 16
        %v5321 = vrot.slane %v5319, 4
        %v5322 = vor.u32 %v5318, %v5321
        %v5323 = vsel %vm5306, %v5314, %v5322
        %v5325 = vshrl.u32 %v5233, 16
        %v5327 = vrot.slane %v5325, 3
        %v5328 = vshll.u32 %v5233, 16
        %v5330 = vrot.slane %v5328, 4
        %v5331 = vor.u32 %v5327, %v5330
        %v5332 = vsel %vm5306, %v5322, %v5331
        %v5334 = vshrl.u32 %v5234, 16
        %v5336 = vrot.slane %v5334, 3
        %v5337 = vshll.u32 %v5234, 16
        %v5339 = vrot.slane %v5337, 4
        %v5340 = vor.u32 %v5336, %v5339
        %v5341 = vsel %vm5306, %v5331, %v5340
        %v5343 = vshrl.u32 %v5235, 16
        %v5345 = vrot.slane %v5343, 3
        %v5346 = vshll.u32 %v5235, 16
        %v5348 = vrot.slane %v5346, 4
        %v5349 = vor.u32 %v5345, %v5348
        %v5350 = vsel %vm5306, %v5340, %v5349
        %v5352 = vshrl.u32 %v5236, 16
        %v5354 = vrot.slane %v5352, 3
        %v5355 = vshll.u32 %v5236, 16
        %v5357 = vrot.slane %v5355, 4
        %v5358 = vor.u32 %v5354, %v5357
        %v5359 = vsel %vm5306, %v5349, %v5358
        %v5361 = vshrl.u32 %v5237, 16
        %v5363 = vrot.slane %v5361, 3
        %v5364 = vshll.u32 %v5237, 16
        %v5366 = vrot.slane %v5364, 4
        %v5367 = vor.u32 %v5363, %v5366
        %v5368 = vsel %vm5306, %v5358, %v5367
        %v5370 = vshrl.u32 %v5238, 16
        %v5372 = vrot.slane %v5370, 3
        %v5373 = vshll.u32 %v5238, 16
        %v5375 = vrot.slane %v5373, 4
        %v5376 = vor.u32 %v5372, %v5375
        %v5377 = vsel %vm5306, %v5367, %v5376
        %v5379 = vshrl.u32 %v5239, 16
        %v5381 = vrot.slane %v5379, 3
        %v5382 = vshll.u32 %v5239, 16
        %v5384 = vrot.slane %v5382, 4
        %v5385 = vor.u32 %v5381, %v5384
        %v5386 = vsel %vm5306, %v5376, %v5385
        %v5388 = vshrl.u32 %v5240, 16
        %v5390 = vrot.slane %v5388, 3
        %v5391 = vshll.u32 %v5240, 16
        %v5393 = vrot.slane %v5391, 4
        %v5394 = vor.u32 %v5390, %v5393
        %v5395 = vsel %vm5306, %v5385, %v5394
        %v5397 = vshrl.u32 %v5241, 16
        %v5399 = vrot.slane %v5397, 3
        %v5400 = vshll.u32 %v5241, 16
        %v5402 = vrot.slane %v5400, 4
        %v5403 = vor.u32 %v5399, %v5402
        %v5404 = vsel %vm5306, %v5394, %v5403
        %v5406 = vshrl.u32 %v5242, 16
        %v5408 = vrot.slane %v5406, 3
        %v5409 = vshll.u32 %v5242, 16
        %v5411 = vrot.slane %v5409, 4
        %v5412 = vor.u32 %v5408, %v5411
        %v5413 = vsel %vm5306, %v5403, %v5412
        %v5415 = vshrl.u32 %v5243, 16
        %v5417 = vrot.slane %v5415, 3
        %v5418 = vshll.u32 %v5243, 16
        %v5420 = vrot.slane %v5418, 4
        %v5421 = vor.u32 %v5417, %v5420
        %v5422 = vsel %vm5306, %v5412, %v5421
        %v5424 = vshrl.u32 %v5244, 16
        %v5426 = vrot.slane %v5424, 3
        %v5427 = vshll.u32 %v5244, 16
        %v5429 = vrot.slane %v5427, 4
        %v5430 = vor.u32 %v5426, %v5429
        %v5431 = vsel %vm5306, %v5421, %v5430
        %v5433 = vshrl.u32 %v5245, 16
        %v5435 = vrot.slane %v5433, 3
        %v5436 = vshll.u32 %v5245, 16
        %v5438 = vrot.slane %v5436, 4
        %v5439 = vor.u32 %v5435, %v5438
        %v5440 = vsel %vm5306, %v5430, %v5439
        %v5442 = vshrl.u32 %v5246, 16
        %v5444 = vrot.slane %v5442, 3
        %v5445 = vshll.u32 %v5246, 16
        %v5447 = vrot.slane %v5445, 4
        %v5448 = vor.u32 %v5444, %v5447
        %v5449 = vsel %vm5306, %v5439, %v5448
        %v5451 = vshrl.u32 %v5247, 16
        %v5453 = vrot.slane %v5451, 3
        %v5454 = vshll.u32 %v5247, 16
        %v5456 = vrot.slane %v5454, 4
        %v5457 = vor.u32 %v5453, %v5456
        %v5458 = vsel %vm5306, %v5448, %v5457
        %5475 = vmatprep.subr.bf16.mxu0 0
        %5476 = vmatpush1.bf16.msra.mxu0 %v5323
        %5477 = vmatprep.subr.bf16.mxu0 0
        %5478 = vmatpush1.bf16.msra.mxu0 %v5332
        %5479 = vmatprep.subr.bf16.mxu0 0
        %5480 = vmatpush1.bf16.msra.mxu0 %v5341
        %5481 = vmatprep.subr.bf16.mxu0 0
        %5482 = vmatpush1.bf16.msra.mxu0 %v5350
        %5483 = vmatprep.subr.bf16.mxu0 0
        %5484 = vmatpush1.bf16.msra.mxu0 %v5359
        %5485 = vmatprep.subr.bf16.mxu0 0
        %5486 = vmatpush1.bf16.msra.mxu0 %v5368
        %5487 = vmatprep.subr.bf16.mxu0 0
        %5488 = vmatpush1.bf16.msra.mxu0 %v5377
        %5489 = vmatprep.subr.bf16.mxu0 0
        %5490 = vmatpush1.bf16.msra.mxu0 %v5386
        %5491 = vmatprep.subr.bf16.mxu0 0
        %5492 = vmatpush1.bf16.msra.mxu0 %v5395
        %5493 = vmatprep.subr.bf16.mxu0 0
        %5494 = vmatpush1.bf16.msra.mxu0 %v5404
        %5495 = vmatprep.subr.bf16.mxu0 0
        %5496 = vmatpush1.bf16.msra.mxu0 %v5413
        %5497 = vmatprep.subr.bf16.mxu0 0
        %5498 = vmatpush1.bf16.msra.mxu0 %v5422
        %5499 = vmatprep.subr.bf16.mxu0 0
        %5500 = vmatpush1.bf16.msra.mxu0 %v5431
        %5501 = vmatprep.subr.bf16.mxu0 0
        %5502 = vmatpush1.bf16.msra.mxu0 %v5440
        %5503 = vmatprep.subr.bf16.mxu0 0
        %5504 = vmatpush1.bf16.msra.mxu0 %v5449
        %5505 = vmatprep.subr.bf16.mxu0 0
        %5506 = vmatpush1.bf16.msra.mxu0 %v5458
        %5507 = vmatprep.mubr.bf16.mxu0 %v5291
        %5508 = vmatmul.mubr.bf16.gmra.mrb[0].mxu0 %v5290
        %v5509 = vpop.f32.mrb[0].mxu0
        %v5510 = vadd.f32 %v5264, %v5509
        %v5511 = vpop.f32.mrb[0].mxu0
        %v5512 = vpop.f32.mrb[0].mxu0
        %v5513 = vadd.f32 %v5264, %v5512
        %v5514 = vpop.f32.mrb[0].mxu0
        %5515 = vmatprep.mubr.bf16.mxu0 %v5293
        %5516 = vmatmul.mubr.bf16.gmra.mrb[0].mxu0 %v5292
        %v5517 = vpop.f32.mrb[0].mxu0
        %v5518 = vadd.f32 %v5264, %v5517
        %v5519 = vpop.f32.mrb[0].mxu0
        %v5520 = vpop.f32.mrb[0].mxu0
        %v5521 = vadd.f32 %v5264, %v5520
        %v5522 = vpop.f32.mrb[0].mxu0
        %5523 = vmatprep.mubr.bf16.mxu0 %v5295
        %5524 = vmatmul.mubr.bf16.gmra.mrb[0].mxu0 %v5294
        %v5525 = vpop.f32.mrb[0].mxu0
        %v5526 = vadd.f32 %v5264, %v5525
        %v5527 = vpop.f32.mrb[0].mxu0
        %v5528 = vpop.f32.mrb[0].mxu0
        %v5529 = vadd.f32 %v5264, %v5528
        %v5530 = vpop.f32.mrb[0].mxu0
        %5531 = vmatprep.mubr.bf16.mxu0 %v5297
        %5532 = vmatmul.mubr.bf16.gmra.mrb[0].mxu0 %v5296
        %v5533 = vpop.f32.mrb[0].mxu0
        %v5534 = vadd.f32 %v5264, %v5533
        %v5535 = vpop.f32.mrb[0].mxu0
        %v5536 = vpop.f32.mrb[0].mxu0
        %v5537 = vadd.f32 %v5264, %v5536
        %v5538 = vpop.f32.mrb[0].mxu0
        %5539 = vdwg.mxu0
        %5540 = vst.msk [vmem:[%s450] sm:$0xff] %vm907, %v5510
        %5541 = vst.msk [vmem:[%s450 + $0x8] sm:$0xff] %vm907, %v5513
        %5542 = vst.msk [vmem:[%s450 + $0x10] sm:$0xff] %vm907, %v5518
        %5543 = vst.msk [vmem:[%s450 + $0x18] sm:$0xff] %vm907, %v5521
        %5544 = vst.msk [vmem:[%s450 + $0x20] sm:$0xff] %vm907, %v5526
        %5545 = vst.msk [vmem:[%s450 + $0x28] sm:$0xff] %vm907, %v5529
        %5546 = vst.msk [vmem:[%s450 + $0x30] sm:$0xff] %vm907, %v5534
        %5547 = vst.msk [vmem:[%s450 + $0x38] sm:$0xff] %vm907, %v5537
        %s5548 = sand.u32 %s320, 1
        %s5549 = scalar_lea.sflag [#allocation4], %s5548
        %s5550 = sand.u32 %s320, 1
        %s5551 = smul.addr %s5550, 64
        %s5552 = scalar_lea.vmem [#allocation3], %s5551
        // Predicated region
        $region73: #{edge_aware_forward.1} parent=71 // pred_check
          %p5553 = pneg %p330
        $region74: #{edge_aware_forward.1} parent=71 // pred_check_branch
          %5555 = sbr.rel (%p5553) target = $region76
        $region75: #{edge_aware_forward.1} parent=71 // pred_region
          %s5557 = ssub.s32 1024, 1024
          %5558 = vsyncadd %s5549, %s5557
          %s5559 = smul.addr %s29, 8
          %s5560 = smul.addr %s5559, 128
          %s5561 = scalar_lea.hbm %s13, %s5560
          %s5562 = sshll.u32 %s5552, 4
          %s5563 = int_to_ptr.vmem [resolvable:$true] %s5562
          %5568 = dma.vmem_to_hbm [thread:$0]  %s5563, 1024, %s5561, %s5549, 128, 128, 8
        $region76: #{edge_aware_forward.1} parent=71 // pred_fallthru
          _
      $region72: #{edge_aware_forward.1} parent=5 // pred_fallthru
        _
      %p5569 = scmp.le.s32.totalorder 2, %s24
      // Predicated region
      $region77: #{edge_aware_forward.1} parent=5 // pred_check
        %p5570 = pneg %p5569
      $region78: #{edge_aware_forward.1} parent=5 // pred_check_branch
        %5572 = sbr.rel (%p5570) target = $region80
      $region79: #{edge_aware_forward.1} parent=5 // pred_region
        %s5573 = ssub.s32 %s24, 2
        // Predicated region
        $region81: #{edge_aware_forward.1} parent=79 // pred_check
          %p5574 = pneg %p336
        $region82: #{edge_aware_forward.1} parent=79 // pred_check_branch
          %5576 = sbr.rel (%p5574) target = $region84
        $region83: #{edge_aware_forward.1} parent=79 // pred_region
          %s5577 = sand.u32 %s321, 1
          %s5578 = scalar_lea.sflag [#allocation4], %s5577
          %s5579 = sand.u32 %s321, 1
          %s5580 = smul.addr %s5579, 64
          %s5581 = scalar_lea.vmem [#allocation3], %s5580
          %5582 = dma.done %s5578, 1024
        $region84: #{edge_aware_forward.1} parent=79 // pred_fallthru
          _
      $region80: #{edge_aware_forward.1} parent=5 // pred_fallthru
        _
    $region6: #{edge_aware_forward.1} parent=1 // loop_footer
      %s28 = sadd.s32 1, %s24
    $region7: #{edge_aware_forward.1} parent=1 // loop_footer_branch
      %23 = sbr.rel target = $region3
    $region8: #{edge_aware_forward.1} parent=1 // loop_exit
      _
    %5583 = vsyncpa [#allocation4], 1
    %s5584 = scalar_lea.sflag [#allocation4], 1
    %5585 = vsyncpa %s5584, 1

</llo_original>
